<compile_context>
chip_gen: v5e
topology: v5e:2x2
jax: 0.10.0
libtpu: 0.0.40
codegen_flags: <defaults>
</compile_context>

<pallas_src>
import functools

import jax
import jax.numpy as jnp
from jax.experimental import pallas as pl
from jax.experimental.pallas import tpu as pltpu

BN_EPS = 1e-5


def _add_conv1x1_bn_kernel(x_ref, r_ref, w_ref, gamma_ref, beta_ref, o_ref,
                           *, inv_m):
    # x_ref, r_ref : (Cin, Mp)       f32  (Mp lane-padded, padded cols == 0)
    # w_ref        : (co_tile, Cin)  f32
    # gamma_ref, beta_ref : (co_tile, 1)
    # o_ref        : (co_tile, Mp)
    s = x_ref[...] + r_ref[...]                                     # VPU add
    y = jnp.dot(w_ref[...], s, preferred_element_type=jnp.float32)  # MXU

    # One-pass batch statistics per channel (rows), biased variance.
    # Padded columns of s are exact zeros => padded columns of y are exact
    # zeros => the sums below are unaffected; inv_m is 1/(N*H*W).
    sum_y = jnp.sum(y, axis=1, keepdims=True)                       # (co_tile, 1)
    sum_y2 = jnp.sum(y * y, axis=1, keepdims=True)                  # (co_tile, 1)
    mean = sum_y * inv_m
    var = sum_y2 * inv_m - mean * mean
    inv_std = jax.lax.rsqrt(var + BN_EPS)

    # Fold normalization + affine into a single scale/shift per channel.
    scale = gamma_ref[...] * inv_std                                # (co_tile, 1)
    shift = beta_ref[...] - mean * scale                            # (co_tile, 1)
    o_ref[...] = y * scale + shift


def add_conv1x1_bn(x210, x195, weight, gamma, beta, *, num_cores=1):
    """x210, x195: (N, Cin, H, W) NCHW. weight: (Cout, Cin, 1, 1). Returns NCHW.

    num_cores=2 enables a Cout split tagged CORE_PARALLEL (v7x, 2 TC/chip).
    Default is a single block (best on single-TensorCore v5e/v6e).
    """
    N, Cin, H, W_sp = x210.shape
    Cout = weight.shape[0]
    M = N * H * W_sp
    Mp = ((M + 127) // 128) * 128          # lane-dense (multiple of 128)

    # Channel-major flatten. For N == 1 this is a pure reshape (no transpose).
    if N == 1:
        x_cm = x210.reshape(Cin, M).astype(jnp.float32)
        r_cm = x195.reshape(Cin, M).astype(jnp.float32)
    else:
        x_cm = jnp.transpose(x210, (1, 0, 2, 3)).reshape(Cin, M).astype(jnp.float32)
        r_cm = jnp.transpose(x195, (1, 0, 2, 3)).reshape(Cin, M).astype(jnp.float32)

    if Mp != M:
        pad = Mp - M
        x_cm = jnp.pad(x_cm, ((0, 0), (0, pad)))   # padded cols must be 0
        r_cm = jnp.pad(r_cm, ((0, 0), (0, pad)))

    w_mat = weight.reshape(Cout, Cin).astype(jnp.float32)           # (Cout, Cin)
    gamma2d = gamma.reshape(Cout, 1).astype(jnp.float32)
    beta2d = beta.reshape(Cout, 1).astype(jnp.float32)

    # Grid choice: single block by default; optional per-core Cout split.
    if num_cores > 1 and Cout % (8 * num_cores) == 0:
        co_tile = Cout // num_cores
        dim_sem = (pltpu.CORE_PARALLEL,)
    else:
        co_tile = Cout
        dim_sem = ("arbitrary",)
    n_co = Cout // co_tile

    kernel = functools.partial(_add_conv1x1_bn_kernel, inv_m=1.0 / float(M))

    out_cm = pl.pallas_call(
        kernel,
        out_shape=jax.ShapeDtypeStruct((Cout, Mp), jnp.float32),
        grid=(n_co,),
        in_specs=[
            pl.BlockSpec((Cin, Mp), lambda i: (0, 0)),        # x (resident)
            pl.BlockSpec((Cin, Mp), lambda i: (0, 0)),        # r (resident)
            pl.BlockSpec((co_tile, Cin), lambda i: (i, 0)),   # weight slab
            pl.BlockSpec((co_tile, 1), lambda i: (i, 0)),     # gamma
            pl.BlockSpec((co_tile, 1), lambda i: (i, 0)),     # beta
        ],
        out_specs=pl.BlockSpec((co_tile, Mp), lambda i: (i, 0)),
        compiler_params=pltpu.CompilerParams(dimension_semantics=dim_sem),
    )(x_cm, r_cm, w_mat, gamma2d, beta2d)

    if Mp != M:
        out_cm = out_cm[:, :M]

    # (Cout, M) -> NCHW (pure reshape when N == 1).
    if N == 1:
        return out_cm.reshape(1, Cout, H, W_sp)
    return jnp.transpose(out_cm.reshape(Cout, N, H, W_sp), (1, 0, 2, 3))


def _reference(x210, x195, weight, gamma, beta):
    """Plain-JAX reference (training-mode BatchNorm with biased variance)."""
    s = x210 + x195
    Cout, Cin = weight.shape[0], weight.shape[1]
    y = jnp.einsum("nchw,oc->nohw", s, weight.reshape(Cout, Cin))
    mean = jnp.mean(y, axis=(0, 2, 3), keepdims=True)
    var = jnp.mean((y - mean) ** 2, axis=(0, 2, 3), keepdims=True)
    return (y - mean) / jnp.sqrt(var + BN_EPS) * gamma.reshape(1, Cout, 1, 1) + \
        beta.reshape(1, Cout, 1, 1)


if __name__ == "__main__":
    key = jax.random.PRNGKey(0)
    k1, k2, k3 = jax.random.split(key, 3)

    N, Cin, H, W = 1, 112, 14, 14
    Cout = 672

    # Deterministic example inputs matching the module's forward shapes.
    x210 = jax.random.normal(k1, (N, Cin, H, W), dtype=jnp.float32)
    x195 = jax.random.normal(k2, (N, Cin, H, W), dtype=jnp.float32)

    # Conv weight ~ small normal; BN gamma=1, beta=0 (PyTorch default init).
    weight = 0.05 * jax.random.normal(k3, (Cout, Cin, 1, 1), dtype=jnp.float32)
    gamma = jnp.ones((Cout,), dtype=jnp.float32)
    beta = jnp.zeros((Cout,), dtype=jnp.float32)

    out = add_conv1x1_bn(x210, x195, weight, gamma, beta)
    out = jax.block_until_ready(out)

    ref = _reference(x210, x195, weight, gamma, beta)
    assert out.shape == (N, Cout, H, W), out.shape
    assert jnp.allclose(out, ref, atol=1e-3, rtol=1e-3), \
        float(jnp.max(jnp.abs(out - ref)))

    print("KERNEL_OK")
</pallas_src>

<mosaic_0001>
module attributes {stable_mosaic.version = 11 : i64} {
  func.func @_add_conv1x1_bn_kernel(%arg0: i32, %arg1: memref<112x256xf32, #tpu.memory_space<vmem>>, %arg2: memref<112x256xf32, #tpu.memory_space<vmem>>, %arg3: memref<672x112xf32, #tpu.memory_space<vmem>>, %arg4: memref<672x1xf32, #tpu.memory_space<vmem>>, %arg5: memref<672x1xf32, #tpu.memory_space<vmem>>, %arg6: memref<672x256xf32, #tpu.memory_space<vmem>>) attributes {dimension_semantics = [#tpu.dimension_semantics<arbitrary>], iteration_bounds = array<i64: 1>, scalar_prefetch = 0 : i64, scratch_operands = 0 : i64, tpu.core_type = #tpu.core_type<tc>, window_params = [{pipeline_mode = #tpu.pipeline_mode<synchronous>, transform_indices = @transform_0, window_bounds = array<i64: 112, 256>}, {pipeline_mode = #tpu.pipeline_mode<synchronous>, transform_indices = @transform_1, window_bounds = array<i64: 112, 256>}, {transform_indices = @transform_2, window_bounds = array<i64: 672, 112>}, {transform_indices = @transform_3, window_bounds = array<i64: 672, 1>}, {transform_indices = @transform_4, window_bounds = array<i64: 672, 1>}, {transform_indices = @transform_5, window_bounds = array<i64: 672, 256>}]} {
    %c0 = arith.constant 0 : index
    %c0_0 = arith.constant 0 : index
    %0 = vector.load %arg1[%c0, %c0_0] : memref<112x256xf32, #tpu.memory_space<vmem>>, vector<112x256xf32>
    %c0_1 = arith.constant 0 : index
    %c0_2 = arith.constant 0 : index
    %1 = vector.load %arg2[%c0_1, %c0_2] : memref<112x256xf32, #tpu.memory_space<vmem>>, vector<112x256xf32>
    %2 = arith.addf %0, %1 : vector<112x256xf32>
    %c0_3 = arith.constant 0 : index
    %c0_4 = arith.constant 0 : index
    %3 = vector.load %arg3[%c0_3, %c0_4] : memref<672x112xf32, #tpu.memory_space<vmem>>, vector<672x112xf32>
    %cst = arith.constant dense<0.000000e+00> : vector<672x256xf32>
    %4 = tpu.matmul %3, %2, %cst {dimension_numbers = #tpu.dot_dimension_numbers<[1], [0], [0], [1], [0, 0, 1, 1], [], []>} : vector<672x112xf32>, vector<112x256xf32>, vector<672x256xf32> -> vector<672x256xf32>
    %cst_5 = arith.constant dense<0.000000e+00> : vector<672xf32>
    %5 = vector.multi_reduction <add>, %4, %cst_5 [1] : vector<672x256xf32> to vector<672xf32>
    %6 = vector.shape_cast %5 : vector<672xf32> to vector<672x1xf32>
    %7 = arith.mulf %4, %4 : vector<672x256xf32>
    %cst_6 = arith.constant dense<0.000000e+00> : vector<672xf32>
    %8 = vector.multi_reduction <add>, %7, %cst_6 [1] : vector<672x256xf32> to vector<672xf32>
    %9 = vector.shape_cast %8 : vector<672xf32> to vector<672x1xf32>
    %cst_7 = arith.constant 0.00510204071 : f32
    %10 = vector.broadcast %cst_7 : f32 to vector<672x1xf32>
    %11 = arith.mulf %6, %10 : vector<672x1xf32>
    %cst_8 = arith.constant 0.00510204071 : f32
    %12 = vector.broadcast %cst_8 : f32 to vector<672x1xf32>
    %13 = arith.mulf %9, %12 : vector<672x1xf32>
    %14 = arith.mulf %11, %11 : vector<672x1xf32>
    %15 = arith.subf %13, %14 : vector<672x1xf32>
    %cst_9 = arith.constant 9.99999974E-6 : f32
    %16 = vector.broadcast %cst_9 : f32 to vector<672x1xf32>
    %17 = arith.addf %15, %16 : vector<672x1xf32>
    %18 = math.rsqrt %17 : vector<672x1xf32>
    %c0_10 = arith.constant 0 : index
    %c0_11 = arith.constant 0 : index
    %19 = vector.load %arg4[%c0_10, %c0_11] : memref<672x1xf32, #tpu.memory_space<vmem>>, vector<672x1xf32>
    %20 = arith.mulf %19, %18 : vector<672x1xf32>
    %c0_12 = arith.constant 0 : index
    %c0_13 = arith.constant 0 : index
    %21 = vector.load %arg5[%c0_12, %c0_13] : memref<672x1xf32, #tpu.memory_space<vmem>>, vector<672x1xf32>
    %22 = arith.mulf %11, %20 : vector<672x1xf32>
    %23 = arith.subf %21, %22 : vector<672x1xf32>
    %24 = vector.broadcast %20 : vector<672x1xf32> to vector<672x256xf32>
    %25 = arith.mulf %4, %24 : vector<672x256xf32>
    %26 = vector.broadcast %23 : vector<672x1xf32> to vector<672x256xf32>
    %27 = arith.addf %25, %26 : vector<672x256xf32>
    %c0_14 = arith.constant 0 : index
    %c0_15 = arith.constant 0 : index
    %28 = vector.load %arg6[%c0_14, %c0_15] : memref<672x256xf32, #tpu.memory_space<vmem>>, vector<672x256xf32>
    tpu.vector_store %arg6[%c0_14, %c0_15], %27 {strides = array<i32>} : memref<672x256xf32, #tpu.memory_space<vmem>>, vector<672x256xf32>,
    return
  }
  func.func @transform_0(%arg0: i32) -> (i32, i32) {
    %c0_i32 = arith.constant 0 : i32
    %c0_i32_0 = arith.constant 0 : i32
    %c0_i32_1 = arith.constant 0 : i32
    return %c0_i32, %c0_i32_0 : i32, i32
  }
  func.func @transform_1(%arg0: i32) -> (i32, i32) {
    %c0_i32 = arith.constant 0 : i32
    %c0_i32_0 = arith.constant 0 : i32
    %c0_i32_1 = arith.constant 0 : i32
    return %c0_i32, %c0_i32_0 : i32, i32
  }
  func.func @transform_2(%arg0: i32) -> (i32, i32) {
    %c0_i32 = arith.constant 0 : i32
    %c0_i32_0 = arith.constant 0 : i32
    return %arg0, %c0_i32 : i32, i32
  }
  func.func @transform_3(%arg0: i32) -> (i32, i32) {
    %c0_i32 = arith.constant 0 : i32
    %c0_i32_0 = arith.constant 0 : i32
    return %arg0, %c0_i32 : i32, i32
  }
  func.func @transform_4(%arg0: i32) -> (i32, i32) {
    %c0_i32 = arith.constant 0 : i32
    %c0_i32_0 = arith.constant 0 : i32
    return %arg0, %c0_i32 : i32, i32
  }
  func.func @transform_5(%arg0: i32) -> (i32, i32) {
    %c0_i32 = arith.constant 0 : i32
    %c0_i32_0 = arith.constant 0 : i32
    return %arg0, %c0_i32 : i32, i32
  }
}

</mosaic_0001>

<llo_original>
// kernel: tpu_custom_call.1
$region0: #{tpu_custom_call.1}
  #allocation0 [shape = 'u32[]', space=smem, size = 0x4, offset = 0x4, fixed_abs, tag = 'smem constant byte address 0x4 - core index']
  #allocation1 [shape = 'u32[72,128]{1,0:T(1,128)}', space=vmem, size = 0x9000, scoped, tag = 'internal scratch']
  %s0 = inlined_call_operand.vmem [shape: f32[112,256], index: 0, kind: input, shape index: {}]
  %s1 = inlined_call_operand.vmem [shape: f32[112,256], index: 1, kind: input, shape index: {}]
  %s2 = inlined_call_operand.vmem [shape: f32[672,112], index: 2, kind: input, shape index: {}]
  %s3 = inlined_call_operand.vmem [shape: f32[672,1], index: 3, kind: input, shape index: {}]
  %s4 = inlined_call_operand.vmem [shape: f32[672,1], index: 4, kind: input, shape index: {}]
  %s5 = inlined_call_operand.hbm [shape: f32[672,256], index: 5, kind: output, shape index: {}]
  %s6 = sld [smem:[#allocation0]]
  $region30: #{tpu_custom_call.1} parent=0
    _
  %s8 = ssub.s32 1, %s6
  %s9 = scalar_select 0, %s8, %s6
  $region1: #{tpu_custom_call.1} parent=0
    #allocation2 [shape = 'u8[688128]{0}', space=vmem, size = 0xa8000, scoped, tag = 'output window, operand 0, single buffered']
    #allocation3 [shape = 's32[1]{0}', space=sflag, size = 0x4, scoped, tag = 'scoped memory for tpu_custom_call.1']
    %10 = vsyncpa [#allocation3], 0
    // Predicated region
    $region2: #{tpu_custom_call.1} parent=1 // pred_check
      _
    $region3: #{tpu_custom_call.1} parent=1 // pred_check_branch
      %12 = sbr.rel (0) target = $region5
    $region4: #{tpu_custom_call.1} parent=1 // pred_region
      _
    $region5: #{tpu_custom_call.1} parent=1 // pred_fallthru
      _
    // Predicated region
    $region6: #{tpu_custom_call.1} parent=1 // pred_check
      _
    $region7: #{tpu_custom_call.1} parent=1 // pred_check_branch
      %14 = sbr.rel (0) target = $region9
    $region8: #{tpu_custom_call.1} parent=1 // pred_region
      _
    $region9: #{tpu_custom_call.1} parent=1 // pred_fallthru
      _
    // Predicated region
    $region10: #{tpu_custom_call.1} parent=1 // pred_check
      _
    $region11: #{tpu_custom_call.1} parent=1 // pred_check_branch
      %16 = sbr.rel (0) target = $region13
    $region12: #{tpu_custom_call.1} parent=1 // pred_region
      _
    $region13: #{tpu_custom_call.1} parent=1 // pred_fallthru
      _
    // Predicated region
    $region14: #{tpu_custom_call.1} parent=1 // pred_check
      _
    $region15: #{tpu_custom_call.1} parent=1 // pred_check_branch
      %18 = sbr.rel (0) target = $region17
    $region16: #{tpu_custom_call.1} parent=1 // pred_region
      _
    $region17: #{tpu_custom_call.1} parent=1 // pred_fallthru
      _
    // Predicated region
    $region18: #{tpu_custom_call.1} parent=1 // pred_check
      _
    $region19: #{tpu_custom_call.1} parent=1 // pred_check_branch
      %20 = sbr.rel (0) target = $region21
    $region20: #{tpu_custom_call.1} parent=1 // pred_region
      _
    $region21: #{tpu_custom_call.1} parent=1 // pred_fallthru
      _
    %v21 = vld [vmem:[%s0] sm:$0xff]
    %v22 = vld [vmem:[%s0 + $0x8] sm:$0xff]
    %v23 = vld [vmem:[%s0 + $0x10] sm:$0xff]
    %v24 = vld [vmem:[%s0 + $0x18] sm:$0xff]
    %v25 = vld [vmem:[%s0 + $0x20] sm:$0xff]
    %v26 = vld [vmem:[%s0 + $0x28] sm:$0xff]
    %v27 = vld [vmem:[%s0 + $0x30] sm:$0xff]
    %v28 = vld [vmem:[%s0 + $0x38] sm:$0xff]
    %v29 = vld [vmem:[%s0 + $0x40] sm:$0xff]
    %v30 = vld [vmem:[%s0 + $0x48] sm:$0xff]
    %v31 = vld [vmem:[%s0 + $0x50] sm:$0xff]
    %v32 = vld [vmem:[%s0 + $0x58] sm:$0xff]
    %v33 = vld [vmem:[%s0 + $0x60] sm:$0xff]
    %v34 = vld [vmem:[%s0 + $0x68] sm:$0xff]
    %v35 = vld [vmem:[%s0 + $0x70] sm:$0xff]
    %v36 = vld [vmem:[%s0 + $0x78] sm:$0xff]
    %v37 = vld [vmem:[%s0 + $0x80] sm:$0xff]
    %v38 = vld [vmem:[%s0 + $0x88] sm:$0xff]
    %v39 = vld [vmem:[%s0 + $0x90] sm:$0xff]
    %v40 = vld [vmem:[%s0 + $0x98] sm:$0xff]
    %v41 = vld [vmem:[%s0 + $0xa0] sm:$0xff]
    %v42 = vld [vmem:[%s0 + $0xa8] sm:$0xff]
    %v43 = vld [vmem:[%s0 + $0xb0] sm:$0xff]
    %v44 = vld [vmem:[%s0 + $0xb8] sm:$0xff]
    %v45 = vld [vmem:[%s0 + $0xc0] sm:$0xff]
    %v46 = vld [vmem:[%s0 + $0xc8] sm:$0xff]
    %v47 = vld [vmem:[%s0 + $0xd0] sm:$0xff]
    %v48 = vld [vmem:[%s0 + $0xd8] sm:$0xff]
    %v49 = vld [vmem:[%s1] sm:$0xff]
    %v50 = vld [vmem:[%s1 + $0x8] sm:$0xff]
    %v51 = vld [vmem:[%s1 + $0x10] sm:$0xff]
    %v52 = vld [vmem:[%s1 + $0x18] sm:$0xff]
    %v53 = vld [vmem:[%s1 + $0x20] sm:$0xff]
    %v54 = vld [vmem:[%s1 + $0x28] sm:$0xff]
    %v55 = vld [vmem:[%s1 + $0x30] sm:$0xff]
    %v56 = vld [vmem:[%s1 + $0x38] sm:$0xff]
    %v57 = vld [vmem:[%s1 + $0x40] sm:$0xff]
    %v58 = vld [vmem:[%s1 + $0x48] sm:$0xff]
    %v59 = vld [vmem:[%s1 + $0x50] sm:$0xff]
    %v60 = vld [vmem:[%s1 + $0x58] sm:$0xff]
    %v61 = vld [vmem:[%s1 + $0x60] sm:$0xff]
    %v62 = vld [vmem:[%s1 + $0x68] sm:$0xff]
    %v63 = vld [vmem:[%s1 + $0x70] sm:$0xff]
    %v64 = vld [vmem:[%s1 + $0x78] sm:$0xff]
    %v65 = vld [vmem:[%s1 + $0x80] sm:$0xff]
    %v66 = vld [vmem:[%s1 + $0x88] sm:$0xff]
    %v67 = vld [vmem:[%s1 + $0x90] sm:$0xff]
    %v68 = vld [vmem:[%s1 + $0x98] sm:$0xff]
    %v69 = vld [vmem:[%s1 + $0xa0] sm:$0xff]
    %v70 = vld [vmem:[%s1 + $0xa8] sm:$0xff]
    %v71 = vld [vmem:[%s1 + $0xb0] sm:$0xff]
    %v72 = vld [vmem:[%s1 + $0xb8] sm:$0xff]
    %v73 = vld [vmem:[%s1 + $0xc0] sm:$0xff]
    %v74 = vld [vmem:[%s1 + $0xc8] sm:$0xff]
    %v75 = vld [vmem:[%s1 + $0xd0] sm:$0xff]
    %v76 = vld [vmem:[%s1 + $0xd8] sm:$0xff]
    %v77 = vadd.f32 %v21, %v49
    %v78 = vadd.f32 %v22, %v50
    %v79 = vadd.f32 %v23, %v51
    %v80 = vadd.f32 %v24, %v52
    %v81 = vadd.f32 %v25, %v53
    %v82 = vadd.f32 %v26, %v54
    %v83 = vadd.f32 %v27, %v55
    %v84 = vadd.f32 %v28, %v56
    %v85 = vadd.f32 %v29, %v57
    %v86 = vadd.f32 %v30, %v58
    %v87 = vadd.f32 %v31, %v59
    %v88 = vadd.f32 %v32, %v60
    %v89 = vadd.f32 %v33, %v61
    %v90 = vadd.f32 %v34, %v62
    %v91 = vadd.f32 %v35, %v63
    %v92 = vadd.f32 %v36, %v64
    %v93 = vadd.f32 %v37, %v65
    %v94 = vadd.f32 %v38, %v66
    %v95 = vadd.f32 %v39, %v67
    %v96 = vadd.f32 %v40, %v68
    %v97 = vadd.f32 %v41, %v69
    %v98 = vadd.f32 %v42, %v70
    %v99 = vadd.f32 %v43, %v71
    %v100 = vadd.f32 %v44, %v72
    %v101 = vadd.f32 %v45, %v73
    %v102 = vadd.f32 %v46, %v74
    %v103 = vadd.f32 %v47, %v75
    %v104 = vadd.f32 %v48, %v76
    %v105 = vld [vmem:[%s2] sm:$0xff]
    %v106 = vld [vmem:[%s2 + $0x8] sm:$0xff]
    %v107 = vld [vmem:[%s2 + $0x10] sm:$0xff]
    %v108 = vld [vmem:[%s2 + $0x18] sm:$0xff]
    %v109 = vld [vmem:[%s2 + $0x20] sm:$0xff]
    %v110 = vld [vmem:[%s2 + $0x28] sm:$0xff]
    %v111 = vld [vmem:[%s2 + $0x30] sm:$0xff]
    %v112 = vld [vmem:[%s2 + $0x38] sm:$0xff]
    %v113 = vld [vmem:[%s2 + $0x40] sm:$0xff]
    %v114 = vld [vmem:[%s2 + $0x48] sm:$0xff]
    %v115 = vld [vmem:[%s2 + $0x50] sm:$0xff]
    %v116 = vld [vmem:[%s2 + $0x58] sm:$0xff]
    %v117 = vld [vmem:[%s2 + $0x60] sm:$0xff]
    %v118 = vld [vmem:[%s2 + $0x68] sm:$0xff]
    %v119 = vld [vmem:[%s2 + $0x70] sm:$0xff]
    %v120 = vld [vmem:[%s2 + $0x78] sm:$0xff]
    %v121 = vld [vmem:[%s2 + $0x80] sm:$0xff]
    %v122 = vld [vmem:[%s2 + $0x88] sm:$0xff]
    %v123 = vld [vmem:[%s2 + $0x90] sm:$0xff]
    %v124 = vld [vmem:[%s2 + $0x98] sm:$0xff]
    %v125 = vld [vmem:[%s2 + $0xa0] sm:$0xff]
    %v126 = vld [vmem:[%s2 + $0xa8] sm:$0xff]
    %v127 = vld [vmem:[%s2 + $0xb0] sm:$0xff]
    %v128 = vld [vmem:[%s2 + $0xb8] sm:$0xff]
    %v129 = vld [vmem:[%s2 + $0xc0] sm:$0xff]
    %v130 = vld [vmem:[%s2 + $0xc8] sm:$0xff]
    %v131 = vld [vmem:[%s2 + $0xd0] sm:$0xff]
    %v132 = vld [vmem:[%s2 + $0xd8] sm:$0xff]
    %v133 = vld [vmem:[%s2 + $0xe0] sm:$0xff]
    %v134 = vld [vmem:[%s2 + $0xe8] sm:$0xff]
    %v135 = vld [vmem:[%s2 + $0xf0] sm:$0xff]
    %v136 = vld [vmem:[%s2 + $0xf8] sm:$0xff]
    %v137 = vld [vmem:[%s2 + $0x100] sm:$0xff]
    %v138 = vld [vmem:[%s2 + $0x108] sm:$0xff]
    %v139 = vld [vmem:[%s2 + $0x110] sm:$0xff]
    %v140 = vld [vmem:[%s2 + $0x118] sm:$0xff]
    %v141 = vld [vmem:[%s2 + $0x120] sm:$0xff]
    %v142 = vld [vmem:[%s2 + $0x128] sm:$0xff]
    %v143 = vld [vmem:[%s2 + $0x130] sm:$0xff]
    %v144 = vld [vmem:[%s2 + $0x138] sm:$0xff]
    %v145 = vld [vmem:[%s2 + $0x140] sm:$0xff]
    %v146 = vld [vmem:[%s2 + $0x148] sm:$0xff]
    %v147 = vld [vmem:[%s2 + $0x150] sm:$0xff]
    %v148 = vld [vmem:[%s2 + $0x158] sm:$0xff]
    %v149 = vld [vmem:[%s2 + $0x160] sm:$0xff]
    %v150 = vld [vmem:[%s2 + $0x168] sm:$0xff]
    %v151 = vld [vmem:[%s2 + $0x170] sm:$0xff]
    %v152 = vld [vmem:[%s2 + $0x178] sm:$0xff]
    %v153 = vld [vmem:[%s2 + $0x180] sm:$0xff]
    %v154 = vld [vmem:[%s2 + $0x188] sm:$0xff]
    %v155 = vld [vmem:[%s2 + $0x190] sm:$0xff]
    %v156 = vld [vmem:[%s2 + $0x198] sm:$0xff]
    %v157 = vld [vmem:[%s2 + $0x1a0] sm:$0xff]
    %v158 = vld [vmem:[%s2 + $0x1a8] sm:$0xff]
    %v159 = vld [vmem:[%s2 + $0x1b0] sm:$0xff]
    %v160 = vld [vmem:[%s2 + $0x1b8] sm:$0xff]
    %v161 = vld [vmem:[%s2 + $0x1c0] sm:$0xff]
    %v162 = vld [vmem:[%s2 + $0x1c8] sm:$0xff]
    %v163 = vld [vmem:[%s2 + $0x1d0] sm:$0xff]
    %v164 = vld [vmem:[%s2 + $0x1d8] sm:$0xff]
    %v165 = vld [vmem:[%s2 + $0x1e0] sm:$0xff]
    %v166 = vld [vmem:[%s2 + $0x1e8] sm:$0xff]
    %v167 = vld [vmem:[%s2 + $0x1f0] sm:$0xff]
    %v168 = vld [vmem:[%s2 + $0x1f8] sm:$0xff]
    %v169 = vld [vmem:[%s2 + $0x200] sm:$0xff]
    %v170 = vld [vmem:[%s2 + $0x208] sm:$0xff]
    %v171 = vld [vmem:[%s2 + $0x210] sm:$0xff]
    %v172 = vld [vmem:[%s2 + $0x218] sm:$0xff]
    %v173 = vld [vmem:[%s2 + $0x220] sm:$0xff]
    %v174 = vld [vmem:[%s2 + $0x228] sm:$0xff]
    %v175 = vld [vmem:[%s2 + $0x230] sm:$0xff]
    %v176 = vld [vmem:[%s2 + $0x238] sm:$0xff]
    %v177 = vld [vmem:[%s2 + $0x240] sm:$0xff]
    %v178 = vld [vmem:[%s2 + $0x248] sm:$0xff]
    %v179 = vld [vmem:[%s2 + $0x250] sm:$0xff]
    %v180 = vld [vmem:[%s2 + $0x258] sm:$0xff]
    %v181 = vld [vmem:[%s2 + $0x260] sm:$0xff]
    %v182 = vld [vmem:[%s2 + $0x268] sm:$0xff]
    %v183 = vld [vmem:[%s2 + $0x270] sm:$0xff]
    %v184 = vld [vmem:[%s2 + $0x278] sm:$0xff]
    %v185 = vld [vmem:[%s2 + $0x280] sm:$0xff]
    %v186 = vld [vmem:[%s2 + $0x288] sm:$0xff]
    %v187 = vld [vmem:[%s2 + $0x290] sm:$0xff]
    %v188 = vld [vmem:[%s2 + $0x298] sm:$0xff]
    %vm189 = vcmask 916480
    %v191 = vsel %vm189, %v105, 0
    %v194 = vsel %vm189, %v106, 0
    %v197 = vsel %vm189, %v107, 0
    %v200 = vsel %vm189, %v108, 0
    %v203 = vsel %vm189, %v109, 0
    %v206 = vsel %vm189, %v110, 0
    %v209 = vsel %vm189, %v111, 0
    %v212 = vsel %vm189, %v112, 0
    %v215 = vsel %vm189, %v113, 0
    %v218 = vsel %vm189, %v114, 0
    %v221 = vsel %vm189, %v115, 0
    %v224 = vsel %vm189, %v116, 0
    %v227 = vsel %vm189, %v117, 0
    %v230 = vsel %vm189, %v118, 0
    %v233 = vsel %vm189, %v119, 0
    %v236 = vsel %vm189, %v120, 0
    %v239 = vsel %vm189, %v121, 0
    %v242 = vsel %vm189, %v122, 0
    %v245 = vsel %vm189, %v123, 0
    %v248 = vsel %vm189, %v124, 0
    %v251 = vsel %vm189, %v125, 0
    %v254 = vsel %vm189, %v126, 0
    %v257 = vsel %vm189, %v127, 0
    %v260 = vsel %vm189, %v128, 0
    %v263 = vsel %vm189, %v129, 0
    %v266 = vsel %vm189, %v130, 0
    %v269 = vsel %vm189, %v131, 0
    %v272 = vsel %vm189, %v132, 0
    %v275 = vsel %vm189, %v133, 0
    %v278 = vsel %vm189, %v134, 0
    %v281 = vsel %vm189, %v135, 0
    %v284 = vsel %vm189, %v136, 0
    %v287 = vsel %vm189, %v137, 0
    %v290 = vsel %vm189, %v138, 0
    %v293 = vsel %vm189, %v139, 0
    %v296 = vsel %vm189, %v140, 0
    %v299 = vsel %vm189, %v141, 0
    %v302 = vsel %vm189, %v142, 0
    %v305 = vsel %vm189, %v143, 0
    %v308 = vsel %vm189, %v144, 0
    %v311 = vsel %vm189, %v145, 0
    %v314 = vsel %vm189, %v146, 0
    %v317 = vsel %vm189, %v147, 0
    %v320 = vsel %vm189, %v148, 0
    %v323 = vsel %vm189, %v149, 0
    %v326 = vsel %vm189, %v150, 0
    %v329 = vsel %vm189, %v151, 0
    %v332 = vsel %vm189, %v152, 0
    %v335 = vsel %vm189, %v153, 0
    %v338 = vsel %vm189, %v154, 0
    %v341 = vsel %vm189, %v155, 0
    %v344 = vsel %vm189, %v156, 0
    %v347 = vsel %vm189, %v157, 0
    %v350 = vsel %vm189, %v158, 0
    %v353 = vsel %vm189, %v159, 0
    %v356 = vsel %vm189, %v160, 0
    %v359 = vsel %vm189, %v161, 0
    %v362 = vsel %vm189, %v162, 0
    %v365 = vsel %vm189, %v163, 0
    %v368 = vsel %vm189, %v164, 0
    %v371 = vsel %vm189, %v165, 0
    %v374 = vsel %vm189, %v166, 0
    %v377 = vsel %vm189, %v167, 0
    %v380 = vsel %vm189, %v168, 0
    %v383 = vsel %vm189, %v169, 0
    %v386 = vsel %vm189, %v170, 0
    %v389 = vsel %vm189, %v171, 0
    %v392 = vsel %vm189, %v172, 0
    %v395 = vsel %vm189, %v173, 0
    %v398 = vsel %vm189, %v174, 0
    %v401 = vsel %vm189, %v175, 0
    %v404 = vsel %vm189, %v176, 0
    %v407 = vsel %vm189, %v177, 0
    %v410 = vsel %vm189, %v178, 0
    %v413 = vsel %vm189, %v179, 0
    %v416 = vsel %vm189, %v180, 0
    %v419 = vsel %vm189, %v181, 0
    %v422 = vsel %vm189, %v182, 0
    %v425 = vsel %vm189, %v183, 0
    %v428 = vsel %vm189, %v184, 0
    %v431 = vsel %vm189, %v185, 0
    %v434 = vsel %vm189, %v186, 0
    %v437 = vsel %vm189, %v187, 0
    %v440 = vsel %vm189, %v188, 0
    %442 = vmatpush.msra.mxu0 0.0
    %443 = vmatpush.msra.mxu0 0.0
    %444 = vmatpush.msra.mxu0 %v103
    %445 = vmatpush.msra.mxu0 %v101
    %446 = vmatpush.msra.mxu0 %v99
    %447 = vmatpush.msra.mxu0 %v97
    %448 = vmatpush.msra.mxu0 %v95
    %449 = vmatpush.msra.mxu0 %v93
    %450 = vmatpush.msra.mxu0 %v91
    %451 = vmatpush.msra.mxu0 %v89
    %452 = vmatpush.msra.mxu0 %v87
    %453 = vmatpush.msra.mxu0 %v85
    %454 = vmatpush.msra.mxu0 %v83
    %455 = vmatpush.msra.mxu0 %v81
    %456 = vmatpush.msra.mxu0 %v79
    %457 = vmatpush.msra.mxu0 %v77
    %458 = vmatmul.f32.gmra.mxu0 %v191
    %v459 = vpop.f32.mrf.mxu0
    %v460 = vadd.f32 0.0, %v459
    %461 = vmatmul.f32.gmra.mxu0 %v194
    %v462 = vpop.f32.mrf.mxu0
    %v463 = vadd.f32 0.0, %v462
    %464 = vmatmul.f32.gmra.mxu0 %v197
    %v465 = vpop.f32.mrf.mxu0
    %v466 = vadd.f32 0.0, %v465
    %467 = vmatmul.f32.gmra.mxu0 %v200
    %v468 = vpop.f32.mrf.mxu0
    %v469 = vadd.f32 0.0, %v468
    %470 = vmatmul.f32.gmra.mxu0 %v203
    %v471 = vpop.f32.mrf.mxu0
    %v472 = vadd.f32 0.0, %v471
    %473 = vmatmul.f32.gmra.mxu0 %v206
    %v474 = vpop.f32.mrf.mxu0
    %v475 = vadd.f32 0.0, %v474
    %476 = vmatmul.f32.gmra.mxu0 %v209
    %v477 = vpop.f32.mrf.mxu0
    %v478 = vadd.f32 0.0, %v477
    %479 = vmatmul.f32.gmra.mxu0 %v212
    %v480 = vpop.f32.mrf.mxu0
    %v481 = vadd.f32 0.0, %v480
    %482 = vmatmul.f32.gmra.mxu0 %v215
    %v483 = vpop.f32.mrf.mxu0
    %v484 = vadd.f32 0.0, %v483
    %485 = vmatmul.f32.gmra.mxu0 %v218
    %v486 = vpop.f32.mrf.mxu0
    %v487 = vadd.f32 0.0, %v486
    %488 = vmatmul.f32.gmra.mxu0 %v221
    %v489 = vpop.f32.mrf.mxu0
    %v490 = vadd.f32 0.0, %v489
    %491 = vmatmul.f32.gmra.mxu0 %v224
    %v492 = vpop.f32.mrf.mxu0
    %v493 = vadd.f32 0.0, %v492
    %494 = vmatmul.f32.gmra.mxu0 %v227
    %v495 = vpop.f32.mrf.mxu0
    %v496 = vadd.f32 0.0, %v495
    %497 = vmatmul.f32.gmra.mxu0 %v230
    %v498 = vpop.f32.mrf.mxu0
    %v499 = vadd.f32 0.0, %v498
    %500 = vmatmul.f32.gmra.mxu0 %v233
    %v501 = vpop.f32.mrf.mxu0
    %v502 = vadd.f32 0.0, %v501
    %503 = vmatmul.f32.gmra.mxu0 %v236
    %v504 = vpop.f32.mrf.mxu0
    %v505 = vadd.f32 0.0, %v504
    %506 = vmatmul.f32.gmra.mxu0 %v239
    %v507 = vpop.f32.mrf.mxu0
    %v508 = vadd.f32 0.0, %v507
    %509 = vmatmul.f32.gmra.mxu0 %v242
    %v510 = vpop.f32.mrf.mxu0
    %v511 = vadd.f32 0.0, %v510
    %512 = vmatmul.f32.gmra.mxu0 %v245
    %v513 = vpop.f32.mrf.mxu0
    %v514 = vadd.f32 0.0, %v513
    %515 = vmatmul.f32.gmra.mxu0 %v248
    %v516 = vpop.f32.mrf.mxu0
    %v517 = vadd.f32 0.0, %v516
    %518 = vmatmul.f32.gmra.mxu0 %v251
    %v519 = vpop.f32.mrf.mxu0
    %v520 = vadd.f32 0.0, %v519
    %521 = vmatmul.f32.gmra.mxu0 %v254
    %v522 = vpop.f32.mrf.mxu0
    %v523 = vadd.f32 0.0, %v522
    %524 = vmatmul.f32.gmra.mxu0 %v257
    %v525 = vpop.f32.mrf.mxu0
    %v526 = vadd.f32 0.0, %v525
    %527 = vmatmul.f32.gmra.mxu0 %v260
    %v528 = vpop.f32.mrf.mxu0
    %v529 = vadd.f32 0.0, %v528
    %530 = vmatmul.f32.gmra.mxu0 %v263
    %v531 = vpop.f32.mrf.mxu0
    %v532 = vadd.f32 0.0, %v531
    %533 = vmatmul.f32.gmra.mxu0 %v266
    %v534 = vpop.f32.mrf.mxu0
    %v535 = vadd.f32 0.0, %v534
    %536 = vmatmul.f32.gmra.mxu0 %v269
    %v537 = vpop.f32.mrf.mxu0
    %v538 = vadd.f32 0.0, %v537
    %539 = vmatmul.f32.gmra.mxu0 %v272
    %v540 = vpop.f32.mrf.mxu0
    %v541 = vadd.f32 0.0, %v540
    %542 = vmatmul.f32.gmra.mxu0 %v275
    %v543 = vpop.f32.mrf.mxu0
    %v544 = vadd.f32 0.0, %v543
    %545 = vmatmul.f32.gmra.mxu0 %v278
    %v546 = vpop.f32.mrf.mxu0
    %v547 = vadd.f32 0.0, %v546
    %548 = vmatmul.f32.gmra.mxu0 %v281
    %v549 = vpop.f32.mrf.mxu0
    %v550 = vadd.f32 0.0, %v549
    %551 = vmatmul.f32.gmra.mxu0 %v284
    %v552 = vpop.f32.mrf.mxu0
    %v553 = vadd.f32 0.0, %v552
    %554 = vmatmul.f32.gmra.mxu0 %v287
    %v555 = vpop.f32.mrf.mxu0
    %v556 = vadd.f32 0.0, %v555
    %557 = vmatmul.f32.gmra.mxu0 %v290
    %v558 = vpop.f32.mrf.mxu0
    %v559 = vadd.f32 0.0, %v558
    %560 = vmatmul.f32.gmra.mxu0 %v293
    %v561 = vpop.f32.mrf.mxu0
    %v562 = vadd.f32 0.0, %v561
    %563 = vmatmul.f32.gmra.mxu0 %v296
    %v564 = vpop.f32.mrf.mxu0
    %v565 = vadd.f32 0.0, %v564
    %566 = vmatmul.f32.gmra.mxu0 %v299
    %v567 = vpop.f32.mrf.mxu0
    %v568 = vadd.f32 0.0, %v567
    %569 = vmatmul.f32.gmra.mxu0 %v302
    %v570 = vpop.f32.mrf.mxu0
    %v571 = vadd.f32 0.0, %v570
    %572 = vmatmul.f32.gmra.mxu0 %v305
    %v573 = vpop.f32.mrf.mxu0
    %v574 = vadd.f32 0.0, %v573
    %575 = vmatmul.f32.gmra.mxu0 %v308
    %v576 = vpop.f32.mrf.mxu0
    %v577 = vadd.f32 0.0, %v576
    %578 = vmatmul.f32.gmra.mxu0 %v311
    %v579 = vpop.f32.mrf.mxu0
    %v580 = vadd.f32 0.0, %v579
    %581 = vmatmul.f32.gmra.mxu0 %v314
    %v582 = vpop.f32.mrf.mxu0
    %v583 = vadd.f32 0.0, %v582
    %584 = vmatmul.f32.gmra.mxu0 %v317
    %v585 = vpop.f32.mrf.mxu0
    %v586 = vadd.f32 0.0, %v585
    %587 = vmatmul.f32.gmra.mxu0 %v320
    %v588 = vpop.f32.mrf.mxu0
    %v589 = vadd.f32 0.0, %v588
    %590 = vmatmul.f32.gmra.mxu0 %v323
    %v591 = vpop.f32.mrf.mxu0
    %v592 = vadd.f32 0.0, %v591
    %593 = vmatmul.f32.gmra.mxu0 %v326
    %v594 = vpop.f32.mrf.mxu0
    %v595 = vadd.f32 0.0, %v594
    %596 = vmatmul.f32.gmra.mxu0 %v329
    %v597 = vpop.f32.mrf.mxu0
    %v598 = vadd.f32 0.0, %v597
    %599 = vmatmul.f32.gmra.mxu0 %v332
    %v600 = vpop.f32.mrf.mxu0
    %v601 = vadd.f32 0.0, %v600
    %602 = vmatmul.f32.gmra.mxu0 %v335
    %v603 = vpop.f32.mrf.mxu0
    %v604 = vadd.f32 0.0, %v603
    %605 = vmatmul.f32.gmra.mxu0 %v338
    %v606 = vpop.f32.mrf.mxu0
    %v607 = vadd.f32 0.0, %v606
    %608 = vmatmul.f32.gmra.mxu0 %v341
    %v609 = vpop.f32.mrf.mxu0
    %v610 = vadd.f32 0.0, %v609
    %611 = vmatmul.f32.gmra.mxu0 %v344
    %v612 = vpop.f32.mrf.mxu0
    %v613 = vadd.f32 0.0, %v612
    %614 = vmatmul.f32.gmra.mxu0 %v347
    %v615 = vpop.f32.mrf.mxu0
    %v616 = vadd.f32 0.0, %v615
    %617 = vmatmul.f32.gmra.mxu0 %v350
    %v618 = vpop.f32.mrf.mxu0
    %v619 = vadd.f32 0.0, %v618
    %620 = vmatmul.f32.gmra.mxu0 %v353
    %v621 = vpop.f32.mrf.mxu0
    %v622 = vadd.f32 0.0, %v621
    %623 = vmatmul.f32.gmra.mxu0 %v356
    %v624 = vpop.f32.mrf.mxu0
    %v625 = vadd.f32 0.0, %v624
    %626 = vmatmul.f32.gmra.mxu0 %v359
    %v627 = vpop.f32.mrf.mxu0
    %v628 = vadd.f32 0.0, %v627
    %629 = vmatmul.f32.gmra.mxu0 %v362
    %v630 = vpop.f32.mrf.mxu0
    %v631 = vadd.f32 0.0, %v630
    %632 = vmatmul.f32.gmra.mxu0 %v365
    %v633 = vpop.f32.mrf.mxu0
    %v634 = vadd.f32 0.0, %v633
    %635 = vmatmul.f32.gmra.mxu0 %v368
    %v636 = vpop.f32.mrf.mxu0
    %v637 = vadd.f32 0.0, %v636
    %638 = vmatmul.f32.gmra.mxu0 %v371
    %v639 = vpop.f32.mrf.mxu0
    %v640 = vadd.f32 0.0, %v639
    %641 = vmatmul.f32.gmra.mxu0 %v374
    %v642 = vpop.f32.mrf.mxu0
    %v643 = vadd.f32 0.0, %v642
    %644 = vmatmul.f32.gmra.mxu0 %v377
    %v645 = vpop.f32.mrf.mxu0
    %v646 = vadd.f32 0.0, %v645
    %647 = vmatmul.f32.gmra.mxu0 %v380
    %v648 = vpop.f32.mrf.mxu0
    %v649 = vadd.f32 0.0, %v648
    %650 = vmatmul.f32.gmra.mxu0 %v383
    %v651 = vpop.f32.mrf.mxu0
    %v652 = vadd.f32 0.0, %v651
    %653 = vmatmul.f32.gmra.mxu0 %v386
    %v654 = vpop.f32.mrf.mxu0
    %v655 = vadd.f32 0.0, %v654
    %656 = vmatmul.f32.gmra.mxu0 %v389
    %v657 = vpop.f32.mrf.mxu0
    %v658 = vadd.f32 0.0, %v657
    %659 = vmatmul.f32.gmra.mxu0 %v392
    %v660 = vpop.f32.mrf.mxu0
    %v661 = vadd.f32 0.0, %v660
    %662 = vmatmul.f32.gmra.mxu0 %v395
    %v663 = vpop.f32.mrf.mxu0
    %v664 = vadd.f32 0.0, %v663
    %665 = vmatmul.f32.gmra.mxu0 %v398
    %v666 = vpop.f32.mrf.mxu0
    %v667 = vadd.f32 0.0, %v666
    %668 = vmatmul.f32.gmra.mxu0 %v401
    %v669 = vpop.f32.mrf.mxu0
    %v670 = vadd.f32 0.0, %v669
    %671 = vmatmul.f32.gmra.mxu0 %v404
    %v672 = vpop.f32.mrf.mxu0
    %v673 = vadd.f32 0.0, %v672
    %674 = vmatmul.f32.gmra.mxu0 %v407
    %v675 = vpop.f32.mrf.mxu0
    %v676 = vadd.f32 0.0, %v675
    %677 = vmatmul.f32.gmra.mxu0 %v410
    %v678 = vpop.f32.mrf.mxu0
    %v679 = vadd.f32 0.0, %v678
    %680 = vmatmul.f32.gmra.mxu0 %v413
    %v681 = vpop.f32.mrf.mxu0
    %v682 = vadd.f32 0.0, %v681
    %683 = vmatmul.f32.gmra.mxu0 %v416
    %v684 = vpop.f32.mrf.mxu0
    %v685 = vadd.f32 0.0, %v684
    %686 = vmatmul.f32.gmra.mxu0 %v419
    %v687 = vpop.f32.mrf.mxu0
    %v688 = vadd.f32 0.0, %v687
    %689 = vmatmul.f32.gmra.mxu0 %v422
    %v690 = vpop.f32.mrf.mxu0
    %v691 = vadd.f32 0.0, %v690
    %692 = vmatmul.f32.gmra.mxu0 %v425
    %v693 = vpop.f32.mrf.mxu0
    %v694 = vadd.f32 0.0, %v693
    %695 = vmatmul.f32.gmra.mxu0 %v428
    %v696 = vpop.f32.mrf.mxu0
    %v697 = vadd.f32 0.0, %v696
    %698 = vmatmul.f32.gmra.mxu0 %v431
    %v699 = vpop.f32.mrf.mxu0
    %v700 = vadd.f32 0.0, %v699
    %701 = vmatmul.f32.gmra.mxu0 %v434
    %v702 = vpop.f32.mrf.mxu0
    %v703 = vadd.f32 0.0, %v702
    %704 = vmatmul.f32.gmra.mxu0 %v437
    %v705 = vpop.f32.mrf.mxu0
    %v706 = vadd.f32 0.0, %v705
    %707 = vmatmul.f32.gmra.mxu0 %v440
    %v708 = vpop.f32.mrf.mxu0
    %v709 = vadd.f32 0.0, %v708
    %710 = vdwg.mxu0
    %711 = vmatpush.msra.mxu0 0.0
    %712 = vmatpush.msra.mxu0 0.0
    %713 = vmatpush.msra.mxu0 %v104
    %714 = vmatpush.msra.mxu0 %v102
    %715 = vmatpush.msra.mxu0 %v100
    %716 = vmatpush.msra.mxu0 %v98
    %717 = vmatpush.msra.mxu0 %v96
    %718 = vmatpush.msra.mxu0 %v94
    %719 = vmatpush.msra.mxu0 %v92
    %720 = vmatpush.msra.mxu0 %v90
    %721 = vmatpush.msra.mxu0 %v88
    %722 = vmatpush.msra.mxu0 %v86
    %723 = vmatpush.msra.mxu0 %v84
    %724 = vmatpush.msra.mxu0 %v82
    %725 = vmatpush.msra.mxu0 %v80
    %726 = vmatpush.msra.mxu0 %v78
    %727 = vmatmul.f32.gmra.mxu0 %v191
    %v728 = vpop.f32.mrf.mxu0
    %v729 = vadd.f32 0.0, %v728
    %730 = vmatmul.f32.gmra.mxu0 %v194
    %v731 = vpop.f32.mrf.mxu0
    %v732 = vadd.f32 0.0, %v731
    %733 = vmatmul.f32.gmra.mxu0 %v197
    %v734 = vpop.f32.mrf.mxu0
    %v735 = vadd.f32 0.0, %v734
    %736 = vmatmul.f32.gmra.mxu0 %v200
    %v737 = vpop.f32.mrf.mxu0
    %v738 = vadd.f32 0.0, %v737
    %739 = vmatmul.f32.gmra.mxu0 %v203
    %v740 = vpop.f32.mrf.mxu0
    %v741 = vadd.f32 0.0, %v740
    %742 = vmatmul.f32.gmra.mxu0 %v206
    %v743 = vpop.f32.mrf.mxu0
    %v744 = vadd.f32 0.0, %v743
    %745 = vmatmul.f32.gmra.mxu0 %v209
    %v746 = vpop.f32.mrf.mxu0
    %v747 = vadd.f32 0.0, %v746
    %748 = vmatmul.f32.gmra.mxu0 %v212
    %v749 = vpop.f32.mrf.mxu0
    %v750 = vadd.f32 0.0, %v749
    %751 = vmatmul.f32.gmra.mxu0 %v215
    %v752 = vpop.f32.mrf.mxu0
    %v753 = vadd.f32 0.0, %v752
    %754 = vmatmul.f32.gmra.mxu0 %v218
    %v755 = vpop.f32.mrf.mxu0
    %v756 = vadd.f32 0.0, %v755
    %757 = vmatmul.f32.gmra.mxu0 %v221
    %v758 = vpop.f32.mrf.mxu0
    %v759 = vadd.f32 0.0, %v758
    %760 = vmatmul.f32.gmra.mxu0 %v224
    %v761 = vpop.f32.mrf.mxu0
    %v762 = vadd.f32 0.0, %v761
    %763 = vmatmul.f32.gmra.mxu0 %v227
    %v764 = vpop.f32.mrf.mxu0
    %v765 = vadd.f32 0.0, %v764
    %766 = vmatmul.f32.gmra.mxu0 %v230
    %v767 = vpop.f32.mrf.mxu0
    %v768 = vadd.f32 0.0, %v767
    %769 = vmatmul.f32.gmra.mxu0 %v233
    %v770 = vpop.f32.mrf.mxu0
    %v771 = vadd.f32 0.0, %v770
    %772 = vmatmul.f32.gmra.mxu0 %v236
    %v773 = vpop.f32.mrf.mxu0
    %v774 = vadd.f32 0.0, %v773
    %775 = vmatmul.f32.gmra.mxu0 %v239
    %v776 = vpop.f32.mrf.mxu0
    %v777 = vadd.f32 0.0, %v776
    %778 = vmatmul.f32.gmra.mxu0 %v242
    %v779 = vpop.f32.mrf.mxu0
    %v780 = vadd.f32 0.0, %v779
    %781 = vmatmul.f32.gmra.mxu0 %v245
    %v782 = vpop.f32.mrf.mxu0
    %v783 = vadd.f32 0.0, %v782
    %784 = vmatmul.f32.gmra.mxu0 %v248
    %v785 = vpop.f32.mrf.mxu0
    %v786 = vadd.f32 0.0, %v785
    %787 = vmatmul.f32.gmra.mxu0 %v251
    %v788 = vpop.f32.mrf.mxu0
    %v789 = vadd.f32 0.0, %v788
    %790 = vmatmul.f32.gmra.mxu0 %v254
    %v791 = vpop.f32.mrf.mxu0
    %v792 = vadd.f32 0.0, %v791
    %793 = vmatmul.f32.gmra.mxu0 %v257
    %v794 = vpop.f32.mrf.mxu0
    %v795 = vadd.f32 0.0, %v794
    %796 = vmatmul.f32.gmra.mxu0 %v260
    %v797 = vpop.f32.mrf.mxu0
    %v798 = vadd.f32 0.0, %v797
    %799 = vmatmul.f32.gmra.mxu0 %v263
    %v800 = vpop.f32.mrf.mxu0
    %v801 = vadd.f32 0.0, %v800
    %802 = vmatmul.f32.gmra.mxu0 %v266
    %v803 = vpop.f32.mrf.mxu0
    %v804 = vadd.f32 0.0, %v803
    %805 = vmatmul.f32.gmra.mxu0 %v269
    %v806 = vpop.f32.mrf.mxu0
    %v807 = vadd.f32 0.0, %v806
    %808 = vmatmul.f32.gmra.mxu0 %v272
    %v809 = vpop.f32.mrf.mxu0
    %v810 = vadd.f32 0.0, %v809
    %811 = vmatmul.f32.gmra.mxu0 %v275
    %v812 = vpop.f32.mrf.mxu0
    %v813 = vadd.f32 0.0, %v812
    %814 = vmatmul.f32.gmra.mxu0 %v278
    %v815 = vpop.f32.mrf.mxu0
    %v816 = vadd.f32 0.0, %v815
    %817 = vmatmul.f32.gmra.mxu0 %v281
    %v818 = vpop.f32.mrf.mxu0
    %v819 = vadd.f32 0.0, %v818
    %820 = vmatmul.f32.gmra.mxu0 %v284
    %v821 = vpop.f32.mrf.mxu0
    %v822 = vadd.f32 0.0, %v821
    %823 = vmatmul.f32.gmra.mxu0 %v287
    %v824 = vpop.f32.mrf.mxu0
    %v825 = vadd.f32 0.0, %v824
    %826 = vmatmul.f32.gmra.mxu0 %v290
    %v827 = vpop.f32.mrf.mxu0
    %v828 = vadd.f32 0.0, %v827
    %829 = vmatmul.f32.gmra.mxu0 %v293
    %v830 = vpop.f32.mrf.mxu0
    %v831 = vadd.f32 0.0, %v830
    %832 = vmatmul.f32.gmra.mxu0 %v296
    %v833 = vpop.f32.mrf.mxu0
    %v834 = vadd.f32 0.0, %v833
    %835 = vmatmul.f32.gmra.mxu0 %v299
    %v836 = vpop.f32.mrf.mxu0
    %v837 = vadd.f32 0.0, %v836
    %838 = vmatmul.f32.gmra.mxu0 %v302
    %v839 = vpop.f32.mrf.mxu0
    %v840 = vadd.f32 0.0, %v839
    %841 = vmatmul.f32.gmra.mxu0 %v305
    %v842 = vpop.f32.mrf.mxu0
    %v843 = vadd.f32 0.0, %v842
    %844 = vmatmul.f32.gmra.mxu0 %v308
    %v845 = vpop.f32.mrf.mxu0
    %v846 = vadd.f32 0.0, %v845
    %847 = vmatmul.f32.gmra.mxu0 %v311
    %v848 = vpop.f32.mrf.mxu0
    %v849 = vadd.f32 0.0, %v848
    %850 = vmatmul.f32.gmra.mxu0 %v314
    %v851 = vpop.f32.mrf.mxu0
    %v852 = vadd.f32 0.0, %v851
    %853 = vmatmul.f32.gmra.mxu0 %v317
    %v854 = vpop.f32.mrf.mxu0
    %v855 = vadd.f32 0.0, %v854
    %856 = vmatmul.f32.gmra.mxu0 %v320
    %v857 = vpop.f32.mrf.mxu0
    %v858 = vadd.f32 0.0, %v857
    %859 = vmatmul.f32.gmra.mxu0 %v323
    %v860 = vpop.f32.mrf.mxu0
    %v861 = vadd.f32 0.0, %v860
    %862 = vmatmul.f32.gmra.mxu0 %v326
    %v863 = vpop.f32.mrf.mxu0
    %v864 = vadd.f32 0.0, %v863
    %865 = vmatmul.f32.gmra.mxu0 %v329
    %v866 = vpop.f32.mrf.mxu0
    %v867 = vadd.f32 0.0, %v866
    %868 = vmatmul.f32.gmra.mxu0 %v332
    %v869 = vpop.f32.mrf.mxu0
    %v870 = vadd.f32 0.0, %v869
    %871 = vmatmul.f32.gmra.mxu0 %v335
    %v872 = vpop.f32.mrf.mxu0
    %v873 = vadd.f32 0.0, %v872
    %874 = vmatmul.f32.gmra.mxu0 %v338
    %v875 = vpop.f32.mrf.mxu0
    %v876 = vadd.f32 0.0, %v875
    %877 = vmatmul.f32.gmra.mxu0 %v341
    %v878 = vpop.f32.mrf.mxu0
    %v879 = vadd.f32 0.0, %v878
    %880 = vmatmul.f32.gmra.mxu0 %v344
    %v881 = vpop.f32.mrf.mxu0
    %v882 = vadd.f32 0.0, %v881
    %883 = vmatmul.f32.gmra.mxu0 %v347
    %v884 = vpop.f32.mrf.mxu0
    %v885 = vadd.f32 0.0, %v884
    %886 = vmatmul.f32.gmra.mxu0 %v350
    %v887 = vpop.f32.mrf.mxu0
    %v888 = vadd.f32 0.0, %v887
    %889 = vmatmul.f32.gmra.mxu0 %v353
    %v890 = vpop.f32.mrf.mxu0
    %v891 = vadd.f32 0.0, %v890
    %892 = vmatmul.f32.gmra.mxu0 %v356
    %v893 = vpop.f32.mrf.mxu0
    %v894 = vadd.f32 0.0, %v893
    %895 = vmatmul.f32.gmra.mxu0 %v359
    %v896 = vpop.f32.mrf.mxu0
    %v897 = vadd.f32 0.0, %v896
    %898 = vmatmul.f32.gmra.mxu0 %v362
    %v899 = vpop.f32.mrf.mxu0
    %v900 = vadd.f32 0.0, %v899
    %901 = vmatmul.f32.gmra.mxu0 %v365
    %v902 = vpop.f32.mrf.mxu0
    %v903 = vadd.f32 0.0, %v902
    %904 = vmatmul.f32.gmra.mxu0 %v368
    %v905 = vpop.f32.mrf.mxu0
    %v906 = vadd.f32 0.0, %v905
    %907 = vmatmul.f32.gmra.mxu0 %v371
    %v908 = vpop.f32.mrf.mxu0
    %v909 = vadd.f32 0.0, %v908
    %910 = vmatmul.f32.gmra.mxu0 %v374
    %v911 = vpop.f32.mrf.mxu0
    %v912 = vadd.f32 0.0, %v911
    %913 = vmatmul.f32.gmra.mxu0 %v377
    %v914 = vpop.f32.mrf.mxu0
    %v915 = vadd.f32 0.0, %v914
    %916 = vmatmul.f32.gmra.mxu0 %v380
    %v917 = vpop.f32.mrf.mxu0
    %v918 = vadd.f32 0.0, %v917
    %919 = vmatmul.f32.gmra.mxu0 %v383
    %v920 = vpop.f32.mrf.mxu0
    %v921 = vadd.f32 0.0, %v920
    %922 = vmatmul.f32.gmra.mxu0 %v386
    %v923 = vpop.f32.mrf.mxu0
    %v924 = vadd.f32 0.0, %v923
    %925 = vmatmul.f32.gmra.mxu0 %v389
    %v926 = vpop.f32.mrf.mxu0
    %v927 = vadd.f32 0.0, %v926
    %928 = vmatmul.f32.gmra.mxu0 %v392
    %v929 = vpop.f32.mrf.mxu0
    %v930 = vadd.f32 0.0, %v929
    %931 = vmatmul.f32.gmra.mxu0 %v395
    %v932 = vpop.f32.mrf.mxu0
    %v933 = vadd.f32 0.0, %v932
    %934 = vmatmul.f32.gmra.mxu0 %v398
    %v935 = vpop.f32.mrf.mxu0
    %v936 = vadd.f32 0.0, %v935
    %937 = vmatmul.f32.gmra.mxu0 %v401
    %v938 = vpop.f32.mrf.mxu0
    %v939 = vadd.f32 0.0, %v938
    %940 = vmatmul.f32.gmra.mxu0 %v404
    %v941 = vpop.f32.mrf.mxu0
    %v942 = vadd.f32 0.0, %v941
    %943 = vmatmul.f32.gmra.mxu0 %v407
    %v944 = vpop.f32.mrf.mxu0
    %v945 = vadd.f32 0.0, %v944
    %946 = vmatmul.f32.gmra.mxu0 %v410
    %v947 = vpop.f32.mrf.mxu0
    %v948 = vadd.f32 0.0, %v947
    %949 = vmatmul.f32.gmra.mxu0 %v413
    %v950 = vpop.f32.mrf.mxu0
    %v951 = vadd.f32 0.0, %v950
    %952 = vmatmul.f32.gmra.mxu0 %v416
    %v953 = vpop.f32.mrf.mxu0
    %v954 = vadd.f32 0.0, %v953
    %955 = vmatmul.f32.gmra.mxu0 %v419
    %v956 = vpop.f32.mrf.mxu0
    %v957 = vadd.f32 0.0, %v956
    %958 = vmatmul.f32.gmra.mxu0 %v422
    %v959 = vpop.f32.mrf.mxu0
    %v960 = vadd.f32 0.0, %v959
    %961 = vmatmul.f32.gmra.mxu0 %v425
    %v962 = vpop.f32.mrf.mxu0
    %v963 = vadd.f32 0.0, %v962
    %964 = vmatmul.f32.gmra.mxu0 %v428
    %v965 = vpop.f32.mrf.mxu0
    %v966 = vadd.f32 0.0, %v965
    %967 = vmatmul.f32.gmra.mxu0 %v431
    %v968 = vpop.f32.mrf.mxu0
    %v969 = vadd.f32 0.0, %v968
    %970 = vmatmul.f32.gmra.mxu0 %v434
    %v971 = vpop.f32.mrf.mxu0
    %v972 = vadd.f32 0.0, %v971
    %973 = vmatmul.f32.gmra.mxu0 %v437
    %v974 = vpop.f32.mrf.mxu0
    %v975 = vadd.f32 0.0, %v974
    %976 = vmatmul.f32.gmra.mxu0 %v440
    %v977 = vpop.f32.mrf.mxu0
    %v978 = vadd.f32 0.0, %v977
    %979 = vdwg.mxu0
    %v980 = vadd.f32 %v460, %v729
    %981 = vadd.xlane.f32.xlu0 %v980
    %v982 = vpop.xlane.xlu0 %981
    %v983 = vadd.f32 %v463, %v732
    %984 = vadd.xlane.f32.xlu0 %v983
    %v985 = vpop.xlane.xlu0 %984
    %v986 = vadd.f32 %v466, %v735
    %987 = vadd.xlane.f32.xlu0 %v986
    %v988 = vpop.xlane.xlu0 %987
    %v989 = vadd.f32 %v469, %v738
    %990 = vadd.xlane.f32.xlu0 %v989
    %v991 = vpop.xlane.xlu0 %990
    %v992 = vadd.f32 %v472, %v741
    %993 = vadd.xlane.f32.xlu0 %v992
    %v994 = vpop.xlane.xlu0 %993
    %v995 = vadd.f32 %v475, %v744
    %996 = vadd.xlane.f32.xlu0 %v995
    %v997 = vpop.xlane.xlu0 %996
    %v998 = vadd.f32 %v478, %v747
    %999 = vadd.xlane.f32.xlu0 %v998
    %v1000 = vpop.xlane.xlu0 %999
    %v1001 = vadd.f32 %v481, %v750
    %1002 = vadd.xlane.f32.xlu0 %v1001
    %v1003 = vpop.xlane.xlu0 %1002
    %v1004 = vadd.f32 %v484, %v753
    %1005 = vadd.xlane.f32.xlu0 %v1004
    %v1006 = vpop.xlane.xlu0 %1005
    %v1007 = vadd.f32 %v487, %v756
    %1008 = vadd.xlane.f32.xlu0 %v1007
    %v1009 = vpop.xlane.xlu0 %1008
    %v1010 = vadd.f32 %v490, %v759
    %1011 = vadd.xlane.f32.xlu0 %v1010
    %v1012 = vpop.xlane.xlu0 %1011
    %v1013 = vadd.f32 %v493, %v762
    %1014 = vadd.xlane.f32.xlu0 %v1013
    %v1015 = vpop.xlane.xlu0 %1014
    %v1016 = vadd.f32 %v496, %v765
    %1017 = vadd.xlane.f32.xlu0 %v1016
    %v1018 = vpop.xlane.xlu0 %1017
    %v1019 = vadd.f32 %v499, %v768
    %1020 = vadd.xlane.f32.xlu0 %v1019
    %v1021 = vpop.xlane.xlu0 %1020
    %v1022 = vadd.f32 %v502, %v771
    %1023 = vadd.xlane.f32.xlu0 %v1022
    %v1024 = vpop.xlane.xlu0 %1023
    %v1025 = vadd.f32 %v505, %v774
    %1026 = vadd.xlane.f32.xlu0 %v1025
    %v1027 = vpop.xlane.xlu0 %1026
    %v1028 = vadd.f32 %v508, %v777
    %1029 = vadd.xlane.f32.xlu0 %v1028
    %v1030 = vpop.xlane.xlu0 %1029
    %v1031 = vadd.f32 %v511, %v780
    %1032 = vadd.xlane.f32.xlu0 %v1031
    %v1033 = vpop.xlane.xlu0 %1032
    %v1034 = vadd.f32 %v514, %v783
    %1035 = vadd.xlane.f32.xlu0 %v1034
    %v1036 = vpop.xlane.xlu0 %1035
    %v1037 = vadd.f32 %v517, %v786
    %1038 = vadd.xlane.f32.xlu0 %v1037
    %v1039 = vpop.xlane.xlu0 %1038
    %v1040 = vadd.f32 %v520, %v789
    %1041 = vadd.xlane.f32.xlu0 %v1040
    %v1042 = vpop.xlane.xlu0 %1041
    %v1043 = vadd.f32 %v523, %v792
    %1044 = vadd.xlane.f32.xlu0 %v1043
    %v1045 = vpop.xlane.xlu0 %1044
    %v1046 = vadd.f32 %v526, %v795
    %1047 = vadd.xlane.f32.xlu0 %v1046
    %v1048 = vpop.xlane.xlu0 %1047
    %v1049 = vadd.f32 %v529, %v798
    %1050 = vadd.xlane.f32.xlu0 %v1049
    %v1051 = vpop.xlane.xlu0 %1050
    %v1052 = vadd.f32 %v532, %v801
    %1053 = vadd.xlane.f32.xlu0 %v1052
    %v1054 = vpop.xlane.xlu0 %1053
    %v1055 = vadd.f32 %v535, %v804
    %1056 = vadd.xlane.f32.xlu0 %v1055
    %v1057 = vpop.xlane.xlu0 %1056
    %v1058 = vadd.f32 %v538, %v807
    %1059 = vadd.xlane.f32.xlu0 %v1058
    %v1060 = vpop.xlane.xlu0 %1059
    %v1061 = vadd.f32 %v541, %v810
    %1062 = vadd.xlane.f32.xlu0 %v1061
    %v1063 = vpop.xlane.xlu0 %1062
    %v1064 = vadd.f32 %v544, %v813
    %1065 = vadd.xlane.f32.xlu0 %v1064
    %v1066 = vpop.xlane.xlu0 %1065
    %v1067 = vadd.f32 %v547, %v816
    %1068 = vadd.xlane.f32.xlu0 %v1067
    %v1069 = vpop.xlane.xlu0 %1068
    %v1070 = vadd.f32 %v550, %v819
    %1071 = vadd.xlane.f32.xlu0 %v1070
    %v1072 = vpop.xlane.xlu0 %1071
    %v1073 = vadd.f32 %v553, %v822
    %1074 = vadd.xlane.f32.xlu0 %v1073
    %v1075 = vpop.xlane.xlu0 %1074
    %v1076 = vadd.f32 %v556, %v825
    %1077 = vadd.xlane.f32.xlu0 %v1076
    %v1078 = vpop.xlane.xlu0 %1077
    %v1079 = vadd.f32 %v559, %v828
    %1080 = vadd.xlane.f32.xlu0 %v1079
    %v1081 = vpop.xlane.xlu0 %1080
    %v1082 = vadd.f32 %v562, %v831
    %1083 = vadd.xlane.f32.xlu0 %v1082
    %v1084 = vpop.xlane.xlu0 %1083
    %v1085 = vadd.f32 %v565, %v834
    %1086 = vadd.xlane.f32.xlu0 %v1085
    %v1087 = vpop.xlane.xlu0 %1086
    %v1088 = vadd.f32 %v568, %v837
    %1089 = vadd.xlane.f32.xlu0 %v1088
    %v1090 = vpop.xlane.xlu0 %1089
    %v1091 = vadd.f32 %v571, %v840
    %1092 = vadd.xlane.f32.xlu0 %v1091
    %v1093 = vpop.xlane.xlu0 %1092
    %v1094 = vadd.f32 %v574, %v843
    %1095 = vadd.xlane.f32.xlu0 %v1094
    %v1096 = vpop.xlane.xlu0 %1095
    %v1097 = vadd.f32 %v577, %v846
    %1098 = vadd.xlane.f32.xlu0 %v1097
    %v1099 = vpop.xlane.xlu0 %1098
    %v1100 = vadd.f32 %v580, %v849
    %1101 = vadd.xlane.f32.xlu0 %v1100
    %v1102 = vpop.xlane.xlu0 %1101
    %v1103 = vadd.f32 %v583, %v852
    %1104 = vadd.xlane.f32.xlu0 %v1103
    %v1105 = vpop.xlane.xlu0 %1104
    %v1106 = vadd.f32 %v586, %v855
    %1107 = vadd.xlane.f32.xlu0 %v1106
    %v1108 = vpop.xlane.xlu0 %1107
    %v1109 = vadd.f32 %v589, %v858
    %1110 = vadd.xlane.f32.xlu0 %v1109
    %v1111 = vpop.xlane.xlu0 %1110
    %v1112 = vadd.f32 %v592, %v861
    %1113 = vadd.xlane.f32.xlu0 %v1112
    %v1114 = vpop.xlane.xlu0 %1113
    %v1115 = vadd.f32 %v595, %v864
    %1116 = vadd.xlane.f32.xlu0 %v1115
    %v1117 = vpop.xlane.xlu0 %1116
    %v1118 = vadd.f32 %v598, %v867
    %1119 = vadd.xlane.f32.xlu0 %v1118
    %v1120 = vpop.xlane.xlu0 %1119
    %v1121 = vadd.f32 %v601, %v870
    %1122 = vadd.xlane.f32.xlu0 %v1121
    %v1123 = vpop.xlane.xlu0 %1122
    %v1124 = vadd.f32 %v604, %v873
    %1125 = vadd.xlane.f32.xlu0 %v1124
    %v1126 = vpop.xlane.xlu0 %1125
    %v1127 = vadd.f32 %v607, %v876
    %1128 = vadd.xlane.f32.xlu0 %v1127
    %v1129 = vpop.xlane.xlu0 %1128
    %v1130 = vadd.f32 %v610, %v879
    %1131 = vadd.xlane.f32.xlu0 %v1130
    %v1132 = vpop.xlane.xlu0 %1131
    %v1133 = vadd.f32 %v613, %v882
    %1134 = vadd.xlane.f32.xlu0 %v1133
    %v1135 = vpop.xlane.xlu0 %1134
    %v1136 = vadd.f32 %v616, %v885
    %1137 = vadd.xlane.f32.xlu0 %v1136
    %v1138 = vpop.xlane.xlu0 %1137
    %v1139 = vadd.f32 %v619, %v888
    %1140 = vadd.xlane.f32.xlu0 %v1139
    %v1141 = vpop.xlane.xlu0 %1140
    %v1142 = vadd.f32 %v622, %v891
    %1143 = vadd.xlane.f32.xlu0 %v1142
    %v1144 = vpop.xlane.xlu0 %1143
    %v1145 = vadd.f32 %v625, %v894
    %1146 = vadd.xlane.f32.xlu0 %v1145
    %v1147 = vpop.xlane.xlu0 %1146
    %v1148 = vadd.f32 %v628, %v897
    %1149 = vadd.xlane.f32.xlu0 %v1148
    %v1150 = vpop.xlane.xlu0 %1149
    %v1151 = vadd.f32 %v631, %v900
    %1152 = vadd.xlane.f32.xlu0 %v1151
    %v1153 = vpop.xlane.xlu0 %1152
    %v1154 = vadd.f32 %v634, %v903
    %1155 = vadd.xlane.f32.xlu0 %v1154
    %v1156 = vpop.xlane.xlu0 %1155
    %v1157 = vadd.f32 %v637, %v906
    %1158 = vadd.xlane.f32.xlu0 %v1157
    %v1159 = vpop.xlane.xlu0 %1158
    %v1160 = vadd.f32 %v640, %v909
    %1161 = vadd.xlane.f32.xlu0 %v1160
    %v1162 = vpop.xlane.xlu0 %1161
    %v1163 = vadd.f32 %v643, %v912
    %1164 = vadd.xlane.f32.xlu0 %v1163
    %v1165 = vpop.xlane.xlu0 %1164
    %v1166 = vadd.f32 %v646, %v915
    %1167 = vadd.xlane.f32.xlu0 %v1166
    %v1168 = vpop.xlane.xlu0 %1167
    %v1169 = vadd.f32 %v649, %v918
    %1170 = vadd.xlane.f32.xlu0 %v1169
    %v1171 = vpop.xlane.xlu0 %1170
    %v1172 = vadd.f32 %v652, %v921
    %1173 = vadd.xlane.f32.xlu0 %v1172
    %v1174 = vpop.xlane.xlu0 %1173
    %v1175 = vadd.f32 %v655, %v924
    %1176 = vadd.xlane.f32.xlu0 %v1175
    %v1177 = vpop.xlane.xlu0 %1176
    %v1178 = vadd.f32 %v658, %v927
    %1179 = vadd.xlane.f32.xlu0 %v1178
    %v1180 = vpop.xlane.xlu0 %1179
    %v1181 = vadd.f32 %v661, %v930
    %1182 = vadd.xlane.f32.xlu0 %v1181
    %v1183 = vpop.xlane.xlu0 %1182
    %v1184 = vadd.f32 %v664, %v933
    %1185 = vadd.xlane.f32.xlu0 %v1184
    %v1186 = vpop.xlane.xlu0 %1185
    %v1187 = vadd.f32 %v667, %v936
    %1188 = vadd.xlane.f32.xlu0 %v1187
    %v1189 = vpop.xlane.xlu0 %1188
    %v1190 = vadd.f32 %v670, %v939
    %1191 = vadd.xlane.f32.xlu0 %v1190
    %v1192 = vpop.xlane.xlu0 %1191
    %v1193 = vadd.f32 %v673, %v942
    %1194 = vadd.xlane.f32.xlu0 %v1193
    %v1195 = vpop.xlane.xlu0 %1194
    %v1196 = vadd.f32 %v676, %v945
    %1197 = vadd.xlane.f32.xlu0 %v1196
    %v1198 = vpop.xlane.xlu0 %1197
    %v1199 = vadd.f32 %v679, %v948
    %1200 = vadd.xlane.f32.xlu0 %v1199
    %v1201 = vpop.xlane.xlu0 %1200
    %v1202 = vadd.f32 %v682, %v951
    %1203 = vadd.xlane.f32.xlu0 %v1202
    %v1204 = vpop.xlane.xlu0 %1203
    %v1205 = vadd.f32 %v685, %v954
    %1206 = vadd.xlane.f32.xlu0 %v1205
    %v1207 = vpop.xlane.xlu0 %1206
    %v1208 = vadd.f32 %v688, %v957
    %1209 = vadd.xlane.f32.xlu0 %v1208
    %v1210 = vpop.xlane.xlu0 %1209
    %v1211 = vadd.f32 %v691, %v960
    %1212 = vadd.xlane.f32.xlu0 %v1211
    %v1213 = vpop.xlane.xlu0 %1212
    %v1214 = vadd.f32 %v694, %v963
    %1215 = vadd.xlane.f32.xlu0 %v1214
    %v1216 = vpop.xlane.xlu0 %1215
    %v1217 = vadd.f32 %v697, %v966
    %1218 = vadd.xlane.f32.xlu0 %v1217
    %v1219 = vpop.xlane.xlu0 %1218
    %v1220 = vadd.f32 %v700, %v969
    %1221 = vadd.xlane.f32.xlu0 %v1220
    %v1222 = vpop.xlane.xlu0 %1221
    %v1223 = vadd.f32 %v703, %v972
    %1224 = vadd.xlane.f32.xlu0 %v1223
    %v1225 = vpop.xlane.xlu0 %1224
    %v1226 = vadd.f32 %v706, %v975
    %1227 = vadd.xlane.f32.xlu0 %v1226
    %v1228 = vpop.xlane.xlu0 %1227
    %v1229 = vadd.f32 %v709, %v978
    %1230 = vadd.xlane.f32.xlu0 %v1229
    %v1231 = vpop.xlane.xlu0 %1230
    %v1232 = vmul.f32 %v460, %v460
    %v1233 = vmul.f32 %v729, %v729
    %v1234 = vmul.f32 %v463, %v463
    %v1235 = vmul.f32 %v732, %v732
    %v1236 = vmul.f32 %v466, %v466
    %v1237 = vmul.f32 %v735, %v735
    %v1238 = vmul.f32 %v469, %v469
    %v1239 = vmul.f32 %v738, %v738
    %v1240 = vmul.f32 %v472, %v472
    %v1241 = vmul.f32 %v741, %v741
    %v1242 = vmul.f32 %v475, %v475
    %v1243 = vmul.f32 %v744, %v744
    %v1244 = vmul.f32 %v478, %v478
    %v1245 = vmul.f32 %v747, %v747
    %v1246 = vmul.f32 %v481, %v481
    %v1247 = vmul.f32 %v750, %v750
    %v1248 = vmul.f32 %v484, %v484
    %v1249 = vmul.f32 %v753, %v753
    %v1250 = vmul.f32 %v487, %v487
    %v1251 = vmul.f32 %v756, %v756
    %v1252 = vmul.f32 %v490, %v490
    %v1253 = vmul.f32 %v759, %v759
    %v1254 = vmul.f32 %v493, %v493
    %v1255 = vmul.f32 %v762, %v762
    %v1256 = vmul.f32 %v496, %v496
    %v1257 = vmul.f32 %v765, %v765
    %v1258 = vmul.f32 %v499, %v499
    %v1259 = vmul.f32 %v768, %v768
    %v1260 = vmul.f32 %v502, %v502
    %v1261 = vmul.f32 %v771, %v771
    %v1262 = vmul.f32 %v505, %v505
    %v1263 = vmul.f32 %v774, %v774
    %v1264 = vmul.f32 %v508, %v508
    %v1265 = vmul.f32 %v777, %v777
    %v1266 = vmul.f32 %v511, %v511
    %v1267 = vmul.f32 %v780, %v780
    %v1268 = vmul.f32 %v514, %v514
    %v1269 = vmul.f32 %v783, %v783
    %v1270 = vmul.f32 %v517, %v517
    %v1271 = vmul.f32 %v786, %v786
    %v1272 = vmul.f32 %v520, %v520
    %v1273 = vmul.f32 %v789, %v789
    %v1274 = vmul.f32 %v523, %v523
    %v1275 = vmul.f32 %v792, %v792
    %v1276 = vmul.f32 %v526, %v526
    %v1277 = vmul.f32 %v795, %v795
    %v1278 = vmul.f32 %v529, %v529
    %v1279 = vmul.f32 %v798, %v798
    %v1280 = vmul.f32 %v532, %v532
    %v1281 = vmul.f32 %v801, %v801
    %v1282 = vmul.f32 %v535, %v535
    %v1283 = vmul.f32 %v804, %v804
    %v1284 = vmul.f32 %v538, %v538
    %v1285 = vmul.f32 %v807, %v807
    %v1286 = vmul.f32 %v541, %v541
    %v1287 = vmul.f32 %v810, %v810
    %v1288 = vmul.f32 %v544, %v544
    %v1289 = vmul.f32 %v813, %v813
    %v1290 = vmul.f32 %v547, %v547
    %v1291 = vmul.f32 %v816, %v816
    %v1292 = vmul.f32 %v550, %v550
    %v1293 = vmul.f32 %v819, %v819
    %v1294 = vmul.f32 %v553, %v553
    %v1295 = vmul.f32 %v822, %v822
    %v1296 = vmul.f32 %v556, %v556
    %v1297 = vmul.f32 %v825, %v825
    %v1298 = vmul.f32 %v559, %v559
    %v1299 = vmul.f32 %v828, %v828
    %v1300 = vmul.f32 %v562, %v562
    %v1301 = vmul.f32 %v831, %v831
    %v1302 = vmul.f32 %v565, %v565
    %v1303 = vmul.f32 %v834, %v834
    %v1304 = vmul.f32 %v568, %v568
    %v1305 = vmul.f32 %v837, %v837
    %v1306 = vmul.f32 %v571, %v571
    %v1307 = vmul.f32 %v840, %v840
    %v1308 = vmul.f32 %v574, %v574
    %v1309 = vmul.f32 %v843, %v843
    %v1310 = vmul.f32 %v577, %v577
    %v1311 = vmul.f32 %v846, %v846
    %v1312 = vmul.f32 %v580, %v580
    %v1313 = vmul.f32 %v849, %v849
    %v1314 = vmul.f32 %v583, %v583
    %v1315 = vmul.f32 %v852, %v852
    %v1316 = vmul.f32 %v586, %v586
    %v1317 = vmul.f32 %v855, %v855
    %v1318 = vmul.f32 %v589, %v589
    %v1319 = vmul.f32 %v858, %v858
    %v1320 = vmul.f32 %v592, %v592
    %v1321 = vmul.f32 %v861, %v861
    %v1322 = vmul.f32 %v595, %v595
    %v1323 = vmul.f32 %v864, %v864
    %v1324 = vmul.f32 %v598, %v598
    %v1325 = vmul.f32 %v867, %v867
    %v1326 = vmul.f32 %v601, %v601
    %v1327 = vmul.f32 %v870, %v870
    %v1328 = vmul.f32 %v604, %v604
    %v1329 = vmul.f32 %v873, %v873
    %v1330 = vmul.f32 %v607, %v607
    %v1331 = vmul.f32 %v876, %v876
    %v1332 = vmul.f32 %v610, %v610
    %v1333 = vmul.f32 %v879, %v879
    %v1334 = vmul.f32 %v613, %v613
    %v1335 = vmul.f32 %v882, %v882
    %v1336 = vmul.f32 %v616, %v616
    %v1337 = vmul.f32 %v885, %v885
    %v1338 = vmul.f32 %v619, %v619
    %v1339 = vmul.f32 %v888, %v888
    %v1340 = vmul.f32 %v622, %v622
    %v1341 = vmul.f32 %v891, %v891
    %v1342 = vmul.f32 %v625, %v625
    %v1343 = vmul.f32 %v894, %v894
    %v1344 = vmul.f32 %v628, %v628
    %v1345 = vmul.f32 %v897, %v897
    %v1346 = vmul.f32 %v631, %v631
    %v1347 = vmul.f32 %v900, %v900
    %v1348 = vmul.f32 %v634, %v634
    %v1349 = vmul.f32 %v903, %v903
    %v1350 = vmul.f32 %v637, %v637
    %v1351 = vmul.f32 %v906, %v906
    %v1352 = vmul.f32 %v640, %v640
    %v1353 = vmul.f32 %v909, %v909
    %v1354 = vmul.f32 %v643, %v643
    %v1355 = vmul.f32 %v912, %v912
    %v1356 = vmul.f32 %v646, %v646
    %v1357 = vmul.f32 %v915, %v915
    %v1358 = vmul.f32 %v649, %v649
    %v1359 = vmul.f32 %v918, %v918
    %v1360 = vmul.f32 %v652, %v652
    %v1361 = vmul.f32 %v921, %v921
    %v1362 = vmul.f32 %v655, %v655
    %v1363 = vmul.f32 %v924, %v924
    %v1364 = vmul.f32 %v658, %v658
    %v1365 = vmul.f32 %v927, %v927
    %v1366 = vmul.f32 %v661, %v661
    %v1367 = vmul.f32 %v930, %v930
    %v1368 = vmul.f32 %v664, %v664
    %v1369 = vmul.f32 %v933, %v933
    %v1370 = vmul.f32 %v667, %v667
    %v1371 = vmul.f32 %v936, %v936
    %v1372 = vmul.f32 %v670, %v670
    %v1373 = vmul.f32 %v939, %v939
    %v1374 = vmul.f32 %v673, %v673
    %v1375 = vmul.f32 %v942, %v942
    %v1376 = vmul.f32 %v676, %v676
    %v1377 = vmul.f32 %v945, %v945
    %v1378 = vmul.f32 %v679, %v679
    %v1379 = vmul.f32 %v948, %v948
    %v1380 = vmul.f32 %v682, %v682
    %v1381 = vmul.f32 %v951, %v951
    %v1382 = vmul.f32 %v685, %v685
    %v1383 = vmul.f32 %v954, %v954
    %v1384 = vmul.f32 %v688, %v688
    %v1385 = vmul.f32 %v957, %v957
    %v1386 = vmul.f32 %v691, %v691
    %v1387 = vmul.f32 %v960, %v960
    %v1388 = vmul.f32 %v694, %v694
    %v1389 = vmul.f32 %v963, %v963
    %v1390 = vmul.f32 %v697, %v697
    %v1391 = vmul.f32 %v966, %v966
    %v1392 = vmul.f32 %v700, %v700
    %v1393 = vmul.f32 %v969, %v969
    %v1394 = vmul.f32 %v703, %v703
    %v1395 = vmul.f32 %v972, %v972
    %v1396 = vmul.f32 %v706, %v706
    %v1397 = vmul.f32 %v975, %v975
    %v1398 = vmul.f32 %v709, %v709
    %v1399 = vmul.f32 %v978, %v978
    %v1400 = vadd.f32 %v1232, %v1233
    %1401 = vadd.xlane.f32.xlu0 %v1400
    %v1402 = vpop.xlane.xlu0 %1401
    %v1403 = vadd.f32 %v1234, %v1235
    %1404 = vadd.xlane.f32.xlu0 %v1403
    %v1405 = vpop.xlane.xlu0 %1404
    %v1406 = vadd.f32 %v1236, %v1237
    %1407 = vadd.xlane.f32.xlu0 %v1406
    %v1408 = vpop.xlane.xlu0 %1407
    %v1409 = vadd.f32 %v1238, %v1239
    %1410 = vadd.xlane.f32.xlu0 %v1409
    %v1411 = vpop.xlane.xlu0 %1410
    %v1412 = vadd.f32 %v1240, %v1241
    %1413 = vadd.xlane.f32.xlu0 %v1412
    %v1414 = vpop.xlane.xlu0 %1413
    %v1415 = vadd.f32 %v1242, %v1243
    %1416 = vadd.xlane.f32.xlu0 %v1415
    %v1417 = vpop.xlane.xlu0 %1416
    %v1418 = vadd.f32 %v1244, %v1245
    %1419 = vadd.xlane.f32.xlu0 %v1418
    %v1420 = vpop.xlane.xlu0 %1419
    %v1421 = vadd.f32 %v1246, %v1247
    %1422 = vadd.xlane.f32.xlu0 %v1421
    %v1423 = vpop.xlane.xlu0 %1422
    %v1424 = vadd.f32 %v1248, %v1249
    %1425 = vadd.xlane.f32.xlu0 %v1424
    %v1426 = vpop.xlane.xlu0 %1425
    %v1427 = vadd.f32 %v1250, %v1251
    %1428 = vadd.xlane.f32.xlu0 %v1427
    %v1429 = vpop.xlane.xlu0 %1428
    %v1430 = vadd.f32 %v1252, %v1253
    %1431 = vadd.xlane.f32.xlu0 %v1430
    %v1432 = vpop.xlane.xlu0 %1431
    %v1433 = vadd.f32 %v1254, %v1255
    %1434 = vadd.xlane.f32.xlu0 %v1433
    %v1435 = vpop.xlane.xlu0 %1434
    %v1436 = vadd.f32 %v1256, %v1257
    %1437 = vadd.xlane.f32.xlu0 %v1436
    %v1438 = vpop.xlane.xlu0 %1437
    %v1439 = vadd.f32 %v1258, %v1259
    %1440 = vadd.xlane.f32.xlu0 %v1439
    %v1441 = vpop.xlane.xlu0 %1440
    %v1442 = vadd.f32 %v1260, %v1261
    %1443 = vadd.xlane.f32.xlu0 %v1442
    %v1444 = vpop.xlane.xlu0 %1443
    %v1445 = vadd.f32 %v1262, %v1263
    %1446 = vadd.xlane.f32.xlu0 %v1445
    %v1447 = vpop.xlane.xlu0 %1446
    %v1448 = vadd.f32 %v1264, %v1265
    %1449 = vadd.xlane.f32.xlu0 %v1448
    %v1450 = vpop.xlane.xlu0 %1449
    %v1451 = vadd.f32 %v1266, %v1267
    %1452 = vadd.xlane.f32.xlu0 %v1451
    %v1453 = vpop.xlane.xlu0 %1452
    %v1454 = vadd.f32 %v1268, %v1269
    %1455 = vadd.xlane.f32.xlu0 %v1454
    %v1456 = vpop.xlane.xlu0 %1455
    %v1457 = vadd.f32 %v1270, %v1271
    %1458 = vadd.xlane.f32.xlu0 %v1457
    %v1459 = vpop.xlane.xlu0 %1458
    %v1460 = vadd.f32 %v1272, %v1273
    %1461 = vadd.xlane.f32.xlu0 %v1460
    %v1462 = vpop.xlane.xlu0 %1461
    %v1463 = vadd.f32 %v1274, %v1275
    %1464 = vadd.xlane.f32.xlu0 %v1463
    %v1465 = vpop.xlane.xlu0 %1464
    %v1466 = vadd.f32 %v1276, %v1277
    %1467 = vadd.xlane.f32.xlu0 %v1466
    %v1468 = vpop.xlane.xlu0 %1467
    %v1469 = vadd.f32 %v1278, %v1279
    %1470 = vadd.xlane.f32.xlu0 %v1469
    %v1471 = vpop.xlane.xlu0 %1470
    %v1472 = vadd.f32 %v1280, %v1281
    %1473 = vadd.xlane.f32.xlu0 %v1472
    %v1474 = vpop.xlane.xlu0 %1473
    %v1475 = vadd.f32 %v1282, %v1283
    %1476 = vadd.xlane.f32.xlu0 %v1475
    %v1477 = vpop.xlane.xlu0 %1476
    %v1478 = vadd.f32 %v1284, %v1285
    %1479 = vadd.xlane.f32.xlu0 %v1478
    %v1480 = vpop.xlane.xlu0 %1479
    %v1481 = vadd.f32 %v1286, %v1287
    %1482 = vadd.xlane.f32.xlu0 %v1481
    %v1483 = vpop.xlane.xlu0 %1482
    %v1484 = vadd.f32 %v1288, %v1289
    %1485 = vadd.xlane.f32.xlu0 %v1484
    %v1486 = vpop.xlane.xlu0 %1485
    %v1487 = vadd.f32 %v1290, %v1291
    %1488 = vadd.xlane.f32.xlu0 %v1487
    %v1489 = vpop.xlane.xlu0 %1488
    %v1490 = vadd.f32 %v1292, %v1293
    %1491 = vadd.xlane.f32.xlu0 %v1490
    %v1492 = vpop.xlane.xlu0 %1491
    %v1493 = vadd.f32 %v1294, %v1295
    %1494 = vadd.xlane.f32.xlu0 %v1493
    %v1495 = vpop.xlane.xlu0 %1494
    %v1496 = vadd.f32 %v1296, %v1297
    %1497 = vadd.xlane.f32.xlu0 %v1496
    %v1498 = vpop.xlane.xlu0 %1497
    %v1499 = vadd.f32 %v1298, %v1299
    %1500 = vadd.xlane.f32.xlu0 %v1499
    %v1501 = vpop.xlane.xlu0 %1500
    %v1502 = vadd.f32 %v1300, %v1301
    %1503 = vadd.xlane.f32.xlu0 %v1502
    %v1504 = vpop.xlane.xlu0 %1503
    %v1505 = vadd.f32 %v1302, %v1303
    %1506 = vadd.xlane.f32.xlu0 %v1505
    %v1507 = vpop.xlane.xlu0 %1506
    %v1508 = vadd.f32 %v1304, %v1305
    %1509 = vadd.xlane.f32.xlu0 %v1508
    %v1510 = vpop.xlane.xlu0 %1509
    %v1511 = vadd.f32 %v1306, %v1307
    %1512 = vadd.xlane.f32.xlu0 %v1511
    %v1513 = vpop.xlane.xlu0 %1512
    %v1514 = vadd.f32 %v1308, %v1309
    %1515 = vadd.xlane.f32.xlu0 %v1514
    %v1516 = vpop.xlane.xlu0 %1515
    %v1517 = vadd.f32 %v1310, %v1311
    %1518 = vadd.xlane.f32.xlu0 %v1517
    %v1519 = vpop.xlane.xlu0 %1518
    %v1520 = vadd.f32 %v1312, %v1313
    %1521 = vadd.xlane.f32.xlu0 %v1520
    %v1522 = vpop.xlane.xlu0 %1521
    %v1523 = vadd.f32 %v1314, %v1315
    %1524 = vadd.xlane.f32.xlu0 %v1523
    %v1525 = vpop.xlane.xlu0 %1524
    %v1526 = vadd.f32 %v1316, %v1317
    %1527 = vadd.xlane.f32.xlu0 %v1526
    %v1528 = vpop.xlane.xlu0 %1527
    %v1529 = vadd.f32 %v1318, %v1319
    %1530 = vadd.xlane.f32.xlu0 %v1529
    %v1531 = vpop.xlane.xlu0 %1530
    %v1532 = vadd.f32 %v1320, %v1321
    %1533 = vadd.xlane.f32.xlu0 %v1532
    %v1534 = vpop.xlane.xlu0 %1533
    %v1535 = vadd.f32 %v1322, %v1323
    %1536 = vadd.xlane.f32.xlu0 %v1535
    %v1537 = vpop.xlane.xlu0 %1536
    %v1538 = vadd.f32 %v1324, %v1325
    %1539 = vadd.xlane.f32.xlu0 %v1538
    %v1540 = vpop.xlane.xlu0 %1539
    %v1541 = vadd.f32 %v1326, %v1327
    %1542 = vadd.xlane.f32.xlu0 %v1541
    %v1543 = vpop.xlane.xlu0 %1542
    %v1544 = vadd.f32 %v1328, %v1329
    %1545 = vadd.xlane.f32.xlu0 %v1544
    %v1546 = vpop.xlane.xlu0 %1545
    %v1547 = vadd.f32 %v1330, %v1331
    %1548 = vadd.xlane.f32.xlu0 %v1547
    %v1549 = vpop.xlane.xlu0 %1548
    %v1550 = vadd.f32 %v1332, %v1333
    %1551 = vadd.xlane.f32.xlu0 %v1550
    %v1552 = vpop.xlane.xlu0 %1551
    %v1553 = vadd.f32 %v1334, %v1335
    %1554 = vadd.xlane.f32.xlu0 %v1553
    %v1555 = vpop.xlane.xlu0 %1554
    %v1556 = vadd.f32 %v1336, %v1337
    %1557 = vadd.xlane.f32.xlu0 %v1556
    %v1558 = vpop.xlane.xlu0 %1557
    %v1559 = vadd.f32 %v1338, %v1339
    %1560 = vadd.xlane.f32.xlu0 %v1559
    %v1561 = vpop.xlane.xlu0 %1560
    %v1562 = vadd.f32 %v1340, %v1341
    %1563 = vadd.xlane.f32.xlu0 %v1562
    %v1564 = vpop.xlane.xlu0 %1563
    %v1565 = vadd.f32 %v1342, %v1343
    %1566 = vadd.xlane.f32.xlu0 %v1565
    %v1567 = vpop.xlane.xlu0 %1566
    %v1568 = vadd.f32 %v1344, %v1345
    %1569 = vadd.xlane.f32.xlu0 %v1568
    %v1570 = vpop.xlane.xlu0 %1569
    %v1571 = vadd.f32 %v1346, %v1347
    %1572 = vadd.xlane.f32.xlu0 %v1571
    %v1573 = vpop.xlane.xlu0 %1572
    %v1574 = vadd.f32 %v1348, %v1349
    %1575 = vadd.xlane.f32.xlu0 %v1574
    %v1576 = vpop.xlane.xlu0 %1575
    %v1577 = vadd.f32 %v1350, %v1351
    %1578 = vadd.xlane.f32.xlu0 %v1577
    %v1579 = vpop.xlane.xlu0 %1578
    %v1580 = vadd.f32 %v1352, %v1353
    %1581 = vadd.xlane.f32.xlu0 %v1580
    %v1582 = vpop.xlane.xlu0 %1581
    %v1583 = vadd.f32 %v1354, %v1355
    %1584 = vadd.xlane.f32.xlu0 %v1583
    %v1585 = vpop.xlane.xlu0 %1584
    %v1586 = vadd.f32 %v1356, %v1357
    %1587 = vadd.xlane.f32.xlu0 %v1586
    %v1588 = vpop.xlane.xlu0 %1587
    %v1589 = vadd.f32 %v1358, %v1359
    %1590 = vadd.xlane.f32.xlu0 %v1589
    %v1591 = vpop.xlane.xlu0 %1590
    %v1592 = vadd.f32 %v1360, %v1361
    %1593 = vadd.xlane.f32.xlu0 %v1592
    %v1594 = vpop.xlane.xlu0 %1593
    %v1595 = vadd.f32 %v1362, %v1363
    %1596 = vadd.xlane.f32.xlu0 %v1595
    %v1597 = vpop.xlane.xlu0 %1596
    %v1598 = vadd.f32 %v1364, %v1365
    %1599 = vadd.xlane.f32.xlu0 %v1598
    %v1600 = vpop.xlane.xlu0 %1599
    %v1601 = vadd.f32 %v1366, %v1367
    %1602 = vadd.xlane.f32.xlu0 %v1601
    %v1603 = vpop.xlane.xlu0 %1602
    %v1604 = vadd.f32 %v1368, %v1369
    %1605 = vadd.xlane.f32.xlu0 %v1604
    %v1606 = vpop.xlane.xlu0 %1605
    %v1607 = vadd.f32 %v1370, %v1371
    %1608 = vadd.xlane.f32.xlu0 %v1607
    %v1609 = vpop.xlane.xlu0 %1608
    %v1610 = vadd.f32 %v1372, %v1373
    %1611 = vadd.xlane.f32.xlu0 %v1610
    %v1612 = vpop.xlane.xlu0 %1611
    %v1613 = vadd.f32 %v1374, %v1375
    %1614 = vadd.xlane.f32.xlu0 %v1613
    %v1615 = vpop.xlane.xlu0 %1614
    %v1616 = vadd.f32 %v1376, %v1377
    %1617 = vadd.xlane.f32.xlu0 %v1616
    %v1618 = vpop.xlane.xlu0 %1617
    %v1619 = vadd.f32 %v1378, %v1379
    %1620 = vadd.xlane.f32.xlu0 %v1619
    %v1621 = vpop.xlane.xlu0 %1620
    %v1622 = vadd.f32 %v1380, %v1381
    %1623 = vadd.xlane.f32.xlu0 %v1622
    %v1624 = vpop.xlane.xlu0 %1623
    %v1625 = vadd.f32 %v1382, %v1383
    %1626 = vadd.xlane.f32.xlu0 %v1625
    %v1627 = vpop.xlane.xlu0 %1626
    %v1628 = vadd.f32 %v1384, %v1385
    %1629 = vadd.xlane.f32.xlu0 %v1628
    %v1630 = vpop.xlane.xlu0 %1629
    %v1631 = vadd.f32 %v1386, %v1387
    %1632 = vadd.xlane.f32.xlu0 %v1631
    %v1633 = vpop.xlane.xlu0 %1632
    %v1634 = vadd.f32 %v1388, %v1389
    %1635 = vadd.xlane.f32.xlu0 %v1634
    %v1636 = vpop.xlane.xlu0 %1635
    %v1637 = vadd.f32 %v1390, %v1391
    %1638 = vadd.xlane.f32.xlu0 %v1637
    %v1639 = vpop.xlane.xlu0 %1638
    %v1640 = vadd.f32 %v1392, %v1393
    %1641 = vadd.xlane.f32.xlu0 %v1640
    %v1642 = vpop.xlane.xlu0 %1641
    %v1643 = vadd.f32 %v1394, %v1395
    %1644 = vadd.xlane.f32.xlu0 %v1643
    %v1645 = vpop.xlane.xlu0 %1644
    %v1646 = vadd.f32 %v1396, %v1397
    %1647 = vadd.xlane.f32.xlu0 %v1646
    %v1648 = vpop.xlane.xlu0 %1647
    %v1649 = vadd.f32 %v1398, %v1399
    %1650 = vadd.xlane.f32.xlu0 %v1649
    %v1651 = vpop.xlane.xlu0 %1650
    %v1652 = vmul.f32 %v982, 0.0051020407
    %v1653 = vmul.f32 %v985, 0.0051020407
    %v1654 = vmul.f32 %v988, 0.0051020407
    %v1655 = vmul.f32 %v991, 0.0051020407
    %v1656 = vmul.f32 %v994, 0.0051020407
    %v1657 = vmul.f32 %v997, 0.0051020407
    %v1658 = vmul.f32 %v1000, 0.0051020407
    %v1659 = vmul.f32 %v1003, 0.0051020407
    %v1660 = vmul.f32 %v1006, 0.0051020407
    %v1661 = vmul.f32 %v1009, 0.0051020407
    %v1662 = vmul.f32 %v1012, 0.0051020407
    %v1663 = vmul.f32 %v1015, 0.0051020407
    %v1664 = vmul.f32 %v1018, 0.0051020407
    %v1665 = vmul.f32 %v1021, 0.0051020407
    %v1666 = vmul.f32 %v1024, 0.0051020407
    %v1667 = vmul.f32 %v1027, 0.0051020407
    %v1668 = vmul.f32 %v1030, 0.0051020407
    %v1669 = vmul.f32 %v1033, 0.0051020407
    %v1670 = vmul.f32 %v1036, 0.0051020407
    %v1671 = vmul.f32 %v1039, 0.0051020407
    %v1672 = vmul.f32 %v1042, 0.0051020407
    %v1673 = vmul.f32 %v1045, 0.0051020407
    %v1674 = vmul.f32 %v1048, 0.0051020407
    %v1675 = vmul.f32 %v1051, 0.0051020407
    %v1676 = vmul.f32 %v1054, 0.0051020407
    %v1677 = vmul.f32 %v1057, 0.0051020407
    %v1678 = vmul.f32 %v1060, 0.0051020407
    %v1679 = vmul.f32 %v1063, 0.0051020407
    %v1680 = vmul.f32 %v1066, 0.0051020407
    %v1681 = vmul.f32 %v1069, 0.0051020407
    %v1682 = vmul.f32 %v1072, 0.0051020407
    %v1683 = vmul.f32 %v1075, 0.0051020407
    %v1684 = vmul.f32 %v1078, 0.0051020407
    %v1685 = vmul.f32 %v1081, 0.0051020407
    %v1686 = vmul.f32 %v1084, 0.0051020407
    %v1687 = vmul.f32 %v1087, 0.0051020407
    %v1688 = vmul.f32 %v1090, 0.0051020407
    %v1689 = vmul.f32 %v1093, 0.0051020407
    %v1690 = vmul.f32 %v1096, 0.0051020407
    %v1691 = vmul.f32 %v1099, 0.0051020407
    %v1692 = vmul.f32 %v1102, 0.0051020407
    %v1693 = vmul.f32 %v1105, 0.0051020407
    %v1694 = vmul.f32 %v1108, 0.0051020407
    %v1695 = vmul.f32 %v1111, 0.0051020407
    %v1696 = vmul.f32 %v1114, 0.0051020407
    %v1697 = vmul.f32 %v1117, 0.0051020407
    %v1698 = vmul.f32 %v1120, 0.0051020407
    %v1699 = vmul.f32 %v1123, 0.0051020407
    %v1700 = vmul.f32 %v1126, 0.0051020407
    %v1701 = vmul.f32 %v1129, 0.0051020407
    %v1702 = vmul.f32 %v1132, 0.0051020407
    %v1703 = vmul.f32 %v1135, 0.0051020407
    %v1704 = vmul.f32 %v1138, 0.0051020407
    %v1705 = vmul.f32 %v1141, 0.0051020407
    %v1706 = vmul.f32 %v1144, 0.0051020407
    %v1707 = vmul.f32 %v1147, 0.0051020407
    %v1708 = vmul.f32 %v1150, 0.0051020407
    %v1709 = vmul.f32 %v1153, 0.0051020407
    %v1710 = vmul.f32 %v1156, 0.0051020407
    %v1711 = vmul.f32 %v1159, 0.0051020407
    %v1712 = vmul.f32 %v1162, 0.0051020407
    %v1713 = vmul.f32 %v1165, 0.0051020407
    %v1714 = vmul.f32 %v1168, 0.0051020407
    %v1715 = vmul.f32 %v1171, 0.0051020407
    %v1716 = vmul.f32 %v1174, 0.0051020407
    %v1717 = vmul.f32 %v1177, 0.0051020407
    %v1718 = vmul.f32 %v1180, 0.0051020407
    %v1719 = vmul.f32 %v1183, 0.0051020407
    %v1720 = vmul.f32 %v1186, 0.0051020407
    %v1721 = vmul.f32 %v1189, 0.0051020407
    %v1722 = vmul.f32 %v1192, 0.0051020407
    %v1723 = vmul.f32 %v1195, 0.0051020407
    %v1724 = vmul.f32 %v1198, 0.0051020407
    %v1725 = vmul.f32 %v1201, 0.0051020407
    %v1726 = vmul.f32 %v1204, 0.0051020407
    %v1727 = vmul.f32 %v1207, 0.0051020407
    %v1728 = vmul.f32 %v1210, 0.0051020407
    %v1729 = vmul.f32 %v1213, 0.0051020407
    %v1730 = vmul.f32 %v1216, 0.0051020407
    %v1731 = vmul.f32 %v1219, 0.0051020407
    %v1732 = vmul.f32 %v1222, 0.0051020407
    %v1733 = vmul.f32 %v1225, 0.0051020407
    %v1734 = vmul.f32 %v1228, 0.0051020407
    %v1735 = vmul.f32 %v1231, 0.0051020407
    %v1736 = vmul.f32 %v1402, 0.0051020407
    %v1737 = vmul.f32 %v1405, 0.0051020407
    %v1738 = vmul.f32 %v1408, 0.0051020407
    %v1739 = vmul.f32 %v1411, 0.0051020407
    %v1740 = vmul.f32 %v1414, 0.0051020407
    %v1741 = vmul.f32 %v1417, 0.0051020407
    %v1742 = vmul.f32 %v1420, 0.0051020407
    %v1743 = vmul.f32 %v1423, 0.0051020407
    %v1744 = vmul.f32 %v1426, 0.0051020407
    %v1745 = vmul.f32 %v1429, 0.0051020407
    %v1746 = vmul.f32 %v1432, 0.0051020407
    %v1747 = vmul.f32 %v1435, 0.0051020407
    %v1748 = vmul.f32 %v1438, 0.0051020407
    %v1749 = vmul.f32 %v1441, 0.0051020407
    %v1750 = vmul.f32 %v1444, 0.0051020407
    %v1751 = vmul.f32 %v1447, 0.0051020407
    %v1752 = vmul.f32 %v1450, 0.0051020407
    %v1753 = vmul.f32 %v1453, 0.0051020407
    %v1754 = vmul.f32 %v1456, 0.0051020407
    %v1755 = vmul.f32 %v1459, 0.0051020407
    %v1756 = vmul.f32 %v1462, 0.0051020407
    %v1757 = vmul.f32 %v1465, 0.0051020407
    %v1758 = vmul.f32 %v1468, 0.0051020407
    %v1759 = vmul.f32 %v1471, 0.0051020407
    %v1760 = vmul.f32 %v1474, 0.0051020407
    %v1761 = vmul.f32 %v1477, 0.0051020407
    %v1762 = vmul.f32 %v1480, 0.0051020407
    %v1763 = vmul.f32 %v1483, 0.0051020407
    %v1764 = vmul.f32 %v1486, 0.0051020407
    %v1765 = vmul.f32 %v1489, 0.0051020407
    %v1766 = vmul.f32 %v1492, 0.0051020407
    %v1767 = vmul.f32 %v1495, 0.0051020407
    %v1768 = vmul.f32 %v1498, 0.0051020407
    %v1769 = vmul.f32 %v1501, 0.0051020407
    %v1770 = vmul.f32 %v1504, 0.0051020407
    %v1771 = vmul.f32 %v1507, 0.0051020407
    %v1772 = vmul.f32 %v1510, 0.0051020407
    %v1773 = vmul.f32 %v1513, 0.0051020407
    %v1774 = vmul.f32 %v1516, 0.0051020407
    %v1775 = vmul.f32 %v1519, 0.0051020407
    %v1776 = vmul.f32 %v1522, 0.0051020407
    %v1777 = vmul.f32 %v1525, 0.0051020407
    %v1778 = vmul.f32 %v1528, 0.0051020407
    %v1779 = vmul.f32 %v1531, 0.0051020407
    %v1780 = vmul.f32 %v1534, 0.0051020407
    %v1781 = vmul.f32 %v1537, 0.0051020407
    %v1782 = vmul.f32 %v1540, 0.0051020407
    %v1783 = vmul.f32 %v1543, 0.0051020407
    %v1784 = vmul.f32 %v1546, 0.0051020407
    %v1785 = vmul.f32 %v1549, 0.0051020407
    %v1786 = vmul.f32 %v1552, 0.0051020407
    %v1787 = vmul.f32 %v1555, 0.0051020407
    %v1788 = vmul.f32 %v1558, 0.0051020407
    %v1789 = vmul.f32 %v1561, 0.0051020407
    %v1790 = vmul.f32 %v1564, 0.0051020407
    %v1791 = vmul.f32 %v1567, 0.0051020407
    %v1792 = vmul.f32 %v1570, 0.0051020407
    %v1793 = vmul.f32 %v1573, 0.0051020407
    %v1794 = vmul.f32 %v1576, 0.0051020407
    %v1795 = vmul.f32 %v1579, 0.0051020407
    %v1796 = vmul.f32 %v1582, 0.0051020407
    %v1797 = vmul.f32 %v1585, 0.0051020407
    %v1798 = vmul.f32 %v1588, 0.0051020407
    %v1799 = vmul.f32 %v1591, 0.0051020407
    %v1800 = vmul.f32 %v1594, 0.0051020407
    %v1801 = vmul.f32 %v1597, 0.0051020407
    %v1802 = vmul.f32 %v1600, 0.0051020407
    %v1803 = vmul.f32 %v1603, 0.0051020407
    %v1804 = vmul.f32 %v1606, 0.0051020407
    %v1805 = vmul.f32 %v1609, 0.0051020407
    %v1806 = vmul.f32 %v1612, 0.0051020407
    %v1807 = vmul.f32 %v1615, 0.0051020407
    %v1808 = vmul.f32 %v1618, 0.0051020407
    %v1809 = vmul.f32 %v1621, 0.0051020407
    %v1810 = vmul.f32 %v1624, 0.0051020407
    %v1811 = vmul.f32 %v1627, 0.0051020407
    %v1812 = vmul.f32 %v1630, 0.0051020407
    %v1813 = vmul.f32 %v1633, 0.0051020407
    %v1814 = vmul.f32 %v1636, 0.0051020407
    %v1815 = vmul.f32 %v1639, 0.0051020407
    %v1816 = vmul.f32 %v1642, 0.0051020407
    %v1817 = vmul.f32 %v1645, 0.0051020407
    %v1818 = vmul.f32 %v1648, 0.0051020407
    %v1819 = vmul.f32 %v1651, 0.0051020407
    %v1820 = vmul.f32 %v1652, %v1652
    %v1821 = vmul.f32 %v1653, %v1653
    %v1822 = vmul.f32 %v1654, %v1654
    %v1823 = vmul.f32 %v1655, %v1655
    %v1824 = vmul.f32 %v1656, %v1656
    %v1825 = vmul.f32 %v1657, %v1657
    %v1826 = vmul.f32 %v1658, %v1658
    %v1827 = vmul.f32 %v1659, %v1659
    %v1828 = vmul.f32 %v1660, %v1660
    %v1829 = vmul.f32 %v1661, %v1661
    %v1830 = vmul.f32 %v1662, %v1662
    %v1831 = vmul.f32 %v1663, %v1663
    %v1832 = vmul.f32 %v1664, %v1664
    %v1833 = vmul.f32 %v1665, %v1665
    %v1834 = vmul.f32 %v1666, %v1666
    %v1835 = vmul.f32 %v1667, %v1667
    %v1836 = vmul.f32 %v1668, %v1668
    %v1837 = vmul.f32 %v1669, %v1669
    %v1838 = vmul.f32 %v1670, %v1670
    %v1839 = vmul.f32 %v1671, %v1671
    %v1840 = vmul.f32 %v1672, %v1672
    %v1841 = vmul.f32 %v1673, %v1673
    %v1842 = vmul.f32 %v1674, %v1674
    %v1843 = vmul.f32 %v1675, %v1675
    %v1844 = vmul.f32 %v1676, %v1676
    %v1845 = vmul.f32 %v1677, %v1677
    %v1846 = vmul.f32 %v1678, %v1678
    %v1847 = vmul.f32 %v1679, %v1679
    %v1848 = vmul.f32 %v1680, %v1680
    %v1849 = vmul.f32 %v1681, %v1681
    %v1850 = vmul.f32 %v1682, %v1682
    %v1851 = vmul.f32 %v1683, %v1683
    %v1852 = vmul.f32 %v1684, %v1684
    %v1853 = vmul.f32 %v1685, %v1685
    %v1854 = vmul.f32 %v1686, %v1686
    %v1855 = vmul.f32 %v1687, %v1687
    %v1856 = vmul.f32 %v1688, %v1688
    %v1857 = vmul.f32 %v1689, %v1689
    %v1858 = vmul.f32 %v1690, %v1690
    %v1859 = vmul.f32 %v1691, %v1691
    %v1860 = vmul.f32 %v1692, %v1692
    %v1861 = vmul.f32 %v1693, %v1693
    %v1862 = vmul.f32 %v1694, %v1694
    %v1863 = vmul.f32 %v1695, %v1695
    %v1864 = vmul.f32 %v1696, %v1696
    %v1865 = vmul.f32 %v1697, %v1697
    %v1866 = vmul.f32 %v1698, %v1698
    %v1867 = vmul.f32 %v1699, %v1699
    %v1868 = vmul.f32 %v1700, %v1700
    %v1869 = vmul.f32 %v1701, %v1701
    %v1870 = vmul.f32 %v1702, %v1702
    %v1871 = vmul.f32 %v1703, %v1703
    %v1872 = vmul.f32 %v1704, %v1704
    %v1873 = vmul.f32 %v1705, %v1705
    %v1874 = vmul.f32 %v1706, %v1706
    %v1875 = vmul.f32 %v1707, %v1707
    %v1876 = vmul.f32 %v1708, %v1708
    %v1877 = vmul.f32 %v1709, %v1709
    %v1878 = vmul.f32 %v1710, %v1710
    %v1879 = vmul.f32 %v1711, %v1711
    %v1880 = vmul.f32 %v1712, %v1712
    %v1881 = vmul.f32 %v1713, %v1713
    %v1882 = vmul.f32 %v1714, %v1714
    %v1883 = vmul.f32 %v1715, %v1715
    %v1884 = vmul.f32 %v1716, %v1716
    %v1885 = vmul.f32 %v1717, %v1717
    %v1886 = vmul.f32 %v1718, %v1718
    %v1887 = vmul.f32 %v1719, %v1719
    %v1888 = vmul.f32 %v1720, %v1720
    %v1889 = vmul.f32 %v1721, %v1721
    %v1890 = vmul.f32 %v1722, %v1722
    %v1891 = vmul.f32 %v1723, %v1723
    %v1892 = vmul.f32 %v1724, %v1724
    %v1893 = vmul.f32 %v1725, %v1725
    %v1894 = vmul.f32 %v1726, %v1726
    %v1895 = vmul.f32 %v1727, %v1727
    %v1896 = vmul.f32 %v1728, %v1728
    %v1897 = vmul.f32 %v1729, %v1729
    %v1898 = vmul.f32 %v1730, %v1730
    %v1899 = vmul.f32 %v1731, %v1731
    %v1900 = vmul.f32 %v1732, %v1732
    %v1901 = vmul.f32 %v1733, %v1733
    %v1902 = vmul.f32 %v1734, %v1734
    %v1903 = vmul.f32 %v1735, %v1735
    %v1904 = vsub.f32 %v1736, %v1820
    %v1905 = vsub.f32 %v1737, %v1821
    %v1906 = vsub.f32 %v1738, %v1822
    %v1907 = vsub.f32 %v1739, %v1823
    %v1908 = vsub.f32 %v1740, %v1824
    %v1909 = vsub.f32 %v1741, %v1825
    %v1910 = vsub.f32 %v1742, %v1826
    %v1911 = vsub.f32 %v1743, %v1827
    %v1912 = vsub.f32 %v1744, %v1828
    %v1913 = vsub.f32 %v1745, %v1829
    %v1914 = vsub.f32 %v1746, %v1830
    %v1915 = vsub.f32 %v1747, %v1831
    %v1916 = vsub.f32 %v1748, %v1832
    %v1917 = vsub.f32 %v1749, %v1833
    %v1918 = vsub.f32 %v1750, %v1834
    %v1919 = vsub.f32 %v1751, %v1835
    %v1920 = vsub.f32 %v1752, %v1836
    %v1921 = vsub.f32 %v1753, %v1837
    %v1922 = vsub.f32 %v1754, %v1838
    %v1923 = vsub.f32 %v1755, %v1839
    %v1924 = vsub.f32 %v1756, %v1840
    %v1925 = vsub.f32 %v1757, %v1841
    %v1926 = vsub.f32 %v1758, %v1842
    %v1927 = vsub.f32 %v1759, %v1843
    %v1928 = vsub.f32 %v1760, %v1844
    %v1929 = vsub.f32 %v1761, %v1845
    %v1930 = vsub.f32 %v1762, %v1846
    %v1931 = vsub.f32 %v1763, %v1847
    %v1932 = vsub.f32 %v1764, %v1848
    %v1933 = vsub.f32 %v1765, %v1849
    %v1934 = vsub.f32 %v1766, %v1850
    %v1935 = vsub.f32 %v1767, %v1851
    %v1936 = vsub.f32 %v1768, %v1852
    %v1937 = vsub.f32 %v1769, %v1853
    %v1938 = vsub.f32 %v1770, %v1854
    %v1939 = vsub.f32 %v1771, %v1855
    %v1940 = vsub.f32 %v1772, %v1856
    %v1941 = vsub.f32 %v1773, %v1857
    %v1942 = vsub.f32 %v1774, %v1858
    %v1943 = vsub.f32 %v1775, %v1859
    %v1944 = vsub.f32 %v1776, %v1860
    %v1945 = vsub.f32 %v1777, %v1861
    %v1946 = vsub.f32 %v1778, %v1862
    %v1947 = vsub.f32 %v1779, %v1863
    %v1948 = vsub.f32 %v1780, %v1864
    %v1949 = vsub.f32 %v1781, %v1865
    %v1950 = vsub.f32 %v1782, %v1866
    %v1951 = vsub.f32 %v1783, %v1867
    %v1952 = vsub.f32 %v1784, %v1868
    %v1953 = vsub.f32 %v1785, %v1869
    %v1954 = vsub.f32 %v1786, %v1870
    %v1955 = vsub.f32 %v1787, %v1871
    %v1956 = vsub.f32 %v1788, %v1872
    %v1957 = vsub.f32 %v1789, %v1873
    %v1958 = vsub.f32 %v1790, %v1874
    %v1959 = vsub.f32 %v1791, %v1875
    %v1960 = vsub.f32 %v1792, %v1876
    %v1961 = vsub.f32 %v1793, %v1877
    %v1962 = vsub.f32 %v1794, %v1878
    %v1963 = vsub.f32 %v1795, %v1879
    %v1964 = vsub.f32 %v1796, %v1880
    %v1965 = vsub.f32 %v1797, %v1881
    %v1966 = vsub.f32 %v1798, %v1882
    %v1967 = vsub.f32 %v1799, %v1883
    %v1968 = vsub.f32 %v1800, %v1884
    %v1969 = vsub.f32 %v1801, %v1885
    %v1970 = vsub.f32 %v1802, %v1886
    %v1971 = vsub.f32 %v1803, %v1887
    %v1972 = vsub.f32 %v1804, %v1888
    %v1973 = vsub.f32 %v1805, %v1889
    %v1974 = vsub.f32 %v1806, %v1890
    %v1975 = vsub.f32 %v1807, %v1891
    %v1976 = vsub.f32 %v1808, %v1892
    %v1977 = vsub.f32 %v1809, %v1893
    %v1978 = vsub.f32 %v1810, %v1894
    %v1979 = vsub.f32 %v1811, %v1895
    %v1980 = vsub.f32 %v1812, %v1896
    %v1981 = vsub.f32 %v1813, %v1897
    %v1982 = vsub.f32 %v1814, %v1898
    %v1983 = vsub.f32 %v1815, %v1899
    %v1984 = vsub.f32 %v1816, %v1900
    %v1985 = vsub.f32 %v1817, %v1901
    %v1986 = vsub.f32 %v1818, %v1902
    %v1987 = vsub.f32 %v1819, %v1903
    %v1988 = vadd.f32 %v1904, 1e-05
    %v1989 = vadd.f32 %v1905, 1e-05
    %v1990 = vadd.f32 %v1906, 1e-05
    %v1991 = vadd.f32 %v1907, 1e-05
    %v1992 = vadd.f32 %v1908, 1e-05
    %v1993 = vadd.f32 %v1909, 1e-05
    %v1994 = vadd.f32 %v1910, 1e-05
    %v1995 = vadd.f32 %v1911, 1e-05
    %v1996 = vadd.f32 %v1912, 1e-05
    %v1997 = vadd.f32 %v1913, 1e-05
    %v1998 = vadd.f32 %v1914, 1e-05
    %v1999 = vadd.f32 %v1915, 1e-05
    %v2000 = vadd.f32 %v1916, 1e-05
    %v2001 = vadd.f32 %v1917, 1e-05
    %v2002 = vadd.f32 %v1918, 1e-05
    %v2003 = vadd.f32 %v1919, 1e-05
    %v2004 = vadd.f32 %v1920, 1e-05
    %v2005 = vadd.f32 %v1921, 1e-05
    %v2006 = vadd.f32 %v1922, 1e-05
    %v2007 = vadd.f32 %v1923, 1e-05
    %v2008 = vadd.f32 %v1924, 1e-05
    %v2009 = vadd.f32 %v1925, 1e-05
    %v2010 = vadd.f32 %v1926, 1e-05
    %v2011 = vadd.f32 %v1927, 1e-05
    %v2012 = vadd.f32 %v1928, 1e-05
    %v2013 = vadd.f32 %v1929, 1e-05
    %v2014 = vadd.f32 %v1930, 1e-05
    %v2015 = vadd.f32 %v1931, 1e-05
    %v2016 = vadd.f32 %v1932, 1e-05
    %v2017 = vadd.f32 %v1933, 1e-05
    %v2018 = vadd.f32 %v1934, 1e-05
    %v2019 = vadd.f32 %v1935, 1e-05
    %v2020 = vadd.f32 %v1936, 1e-05
    %v2021 = vadd.f32 %v1937, 1e-05
    %v2022 = vadd.f32 %v1938, 1e-05
    %v2023 = vadd.f32 %v1939, 1e-05
    %v2024 = vadd.f32 %v1940, 1e-05
    %v2025 = vadd.f32 %v1941, 1e-05
    %v2026 = vadd.f32 %v1942, 1e-05
    %v2027 = vadd.f32 %v1943, 1e-05
    %v2028 = vadd.f32 %v1944, 1e-05
    %v2029 = vadd.f32 %v1945, 1e-05
    %v2030 = vadd.f32 %v1946, 1e-05
    %v2031 = vadd.f32 %v1947, 1e-05
    %v2032 = vadd.f32 %v1948, 1e-05
    %v2033 = vadd.f32 %v1949, 1e-05
    %v2034 = vadd.f32 %v1950, 1e-05
    %v2035 = vadd.f32 %v1951, 1e-05
    %v2036 = vadd.f32 %v1952, 1e-05
    %v2037 = vadd.f32 %v1953, 1e-05
    %v2038 = vadd.f32 %v1954, 1e-05
    %v2039 = vadd.f32 %v1955, 1e-05
    %v2040 = vadd.f32 %v1956, 1e-05
    %v2041 = vadd.f32 %v1957, 1e-05
    %v2042 = vadd.f32 %v1958, 1e-05
    %v2043 = vadd.f32 %v1959, 1e-05
    %v2044 = vadd.f32 %v1960, 1e-05
    %v2045 = vadd.f32 %v1961, 1e-05
    %v2046 = vadd.f32 %v1962, 1e-05
    %v2047 = vadd.f32 %v1963, 1e-05
    %v2048 = vadd.f32 %v1964, 1e-05
    %v2049 = vadd.f32 %v1965, 1e-05
    %v2050 = vadd.f32 %v1966, 1e-05
    %v2051 = vadd.f32 %v1967, 1e-05
    %v2052 = vadd.f32 %v1968, 1e-05
    %v2053 = vadd.f32 %v1969, 1e-05
    %v2054 = vadd.f32 %v1970, 1e-05
    %v2055 = vadd.f32 %v1971, 1e-05
    %v2056 = vadd.f32 %v1972, 1e-05
    %v2057 = vadd.f32 %v1973, 1e-05
    %v2058 = vadd.f32 %v1974, 1e-05
    %v2059 = vadd.f32 %v1975, 1e-05
    %v2060 = vadd.f32 %v1976, 1e-05
    %v2061 = vadd.f32 %v1977, 1e-05
    %v2062 = vadd.f32 %v1978, 1e-05
    %v2063 = vadd.f32 %v1979, 1e-05
    %v2064 = vadd.f32 %v1980, 1e-05
    %v2065 = vadd.f32 %v1981, 1e-05
    %v2066 = vadd.f32 %v1982, 1e-05
    %v2067 = vadd.f32 %v1983, 1e-05
    %v2068 = vadd.f32 %v1984, 1e-05
    %v2069 = vadd.f32 %v1985, 1e-05
    %v2070 = vadd.f32 %v1986, 1e-05
    %v2071 = vadd.f32 %v1987, 1e-05
    %v2072 = vrsqrt.pop %v1988
    %v2073 = vmul.f32 %v2072, %v1988
    %v2074 = vmul.f32 %v2073, %v2072
    %v2075 = vmul.f32 0.5, %v2074
    %v2076 = vsub.f32 1.5, %v2075
    %v2077 = vmul.f32 %v2072, %v2076
    %vm2078 = vweird.f32 %v1988
    %vm2079 = vweird.f32 %v2072
    %vm2080 = vmor %vm2078, %vm2079
    %v2081 = vsel %vm2080, %v2072, %v2077
    %v2082 = vrsqrt.pop %v1989
    %v2083 = vmul.f32 %v2082, %v1989
    %v2084 = vmul.f32 %v2083, %v2082
    %v2085 = vmul.f32 0.5, %v2084
    %v2086 = vsub.f32 1.5, %v2085
    %v2087 = vmul.f32 %v2082, %v2086
    %vm2088 = vweird.f32 %v1989
    %vm2089 = vweird.f32 %v2082
    %vm2090 = vmor %vm2088, %vm2089
    %v2091 = vsel %vm2090, %v2082, %v2087
    %v2092 = vrsqrt.pop %v1990
    %v2093 = vmul.f32 %v2092, %v1990
    %v2094 = vmul.f32 %v2093, %v2092
    %v2095 = vmul.f32 0.5, %v2094
    %v2096 = vsub.f32 1.5, %v2095
    %v2097 = vmul.f32 %v2092, %v2096
    %vm2098 = vweird.f32 %v1990
    %vm2099 = vweird.f32 %v2092
    %vm2100 = vmor %vm2098, %vm2099
    %v2101 = vsel %vm2100, %v2092, %v2097
    %v2102 = vrsqrt.pop %v1991
    %v2103 = vmul.f32 %v2102, %v1991
    %v2104 = vmul.f32 %v2103, %v2102
    %v2105 = vmul.f32 0.5, %v2104
    %v2106 = vsub.f32 1.5, %v2105
    %v2107 = vmul.f32 %v2102, %v2106
    %vm2108 = vweird.f32 %v1991
    %vm2109 = vweird.f32 %v2102
    %vm2110 = vmor %vm2108, %vm2109
    %v2111 = vsel %vm2110, %v2102, %v2107
    %v2112 = vrsqrt.pop %v1992
    %v2113 = vmul.f32 %v2112, %v1992
    %v2114 = vmul.f32 %v2113, %v2112
    %v2115 = vmul.f32 0.5, %v2114
    %v2116 = vsub.f32 1.5, %v2115
    %v2117 = vmul.f32 %v2112, %v2116
    %vm2118 = vweird.f32 %v1992
    %vm2119 = vweird.f32 %v2112
    %vm2120 = vmor %vm2118, %vm2119
    %v2121 = vsel %vm2120, %v2112, %v2117
    %v2122 = vrsqrt.pop %v1993
    %v2123 = vmul.f32 %v2122, %v1993
    %v2124 = vmul.f32 %v2123, %v2122
    %v2125 = vmul.f32 0.5, %v2124
    %v2126 = vsub.f32 1.5, %v2125
    %v2127 = vmul.f32 %v2122, %v2126
    %vm2128 = vweird.f32 %v1993
    %vm2129 = vweird.f32 %v2122
    %vm2130 = vmor %vm2128, %vm2129
    %v2131 = vsel %vm2130, %v2122, %v2127
    %v2132 = vrsqrt.pop %v1994
    %v2133 = vmul.f32 %v2132, %v1994
    %v2134 = vmul.f32 %v2133, %v2132
    %v2135 = vmul.f32 0.5, %v2134
    %v2136 = vsub.f32 1.5, %v2135
    %v2137 = vmul.f32 %v2132, %v2136
    %vm2138 = vweird.f32 %v1994
    %vm2139 = vweird.f32 %v2132
    %vm2140 = vmor %vm2138, %vm2139
    %v2141 = vsel %vm2140, %v2132, %v2137
    %v2142 = vrsqrt.pop %v1995
    %v2143 = vmul.f32 %v2142, %v1995
    %v2144 = vmul.f32 %v2143, %v2142
    %v2145 = vmul.f32 0.5, %v2144
    %v2146 = vsub.f32 1.5, %v2145
    %v2147 = vmul.f32 %v2142, %v2146
    %vm2148 = vweird.f32 %v1995
    %vm2149 = vweird.f32 %v2142
    %vm2150 = vmor %vm2148, %vm2149
    %v2151 = vsel %vm2150, %v2142, %v2147
    %v2152 = vrsqrt.pop %v1996
    %v2153 = vmul.f32 %v2152, %v1996
    %v2154 = vmul.f32 %v2153, %v2152
    %v2155 = vmul.f32 0.5, %v2154
    %v2156 = vsub.f32 1.5, %v2155
    %v2157 = vmul.f32 %v2152, %v2156
    %vm2158 = vweird.f32 %v1996
    %vm2159 = vweird.f32 %v2152
    %vm2160 = vmor %vm2158, %vm2159
    %v2161 = vsel %vm2160, %v2152, %v2157
    %v2162 = vrsqrt.pop %v1997
    %v2163 = vmul.f32 %v2162, %v1997
    %v2164 = vmul.f32 %v2163, %v2162
    %v2165 = vmul.f32 0.5, %v2164
    %v2166 = vsub.f32 1.5, %v2165
    %v2167 = vmul.f32 %v2162, %v2166
    %vm2168 = vweird.f32 %v1997
    %vm2169 = vweird.f32 %v2162
    %vm2170 = vmor %vm2168, %vm2169
    %v2171 = vsel %vm2170, %v2162, %v2167
    %v2172 = vrsqrt.pop %v1998
    %v2173 = vmul.f32 %v2172, %v1998
    %v2174 = vmul.f32 %v2173, %v2172
    %v2175 = vmul.f32 0.5, %v2174
    %v2176 = vsub.f32 1.5, %v2175
    %v2177 = vmul.f32 %v2172, %v2176
    %vm2178 = vweird.f32 %v1998
    %vm2179 = vweird.f32 %v2172
    %vm2180 = vmor %vm2178, %vm2179
    %v2181 = vsel %vm2180, %v2172, %v2177
    %v2182 = vrsqrt.pop %v1999
    %v2183 = vmul.f32 %v2182, %v1999
    %v2184 = vmul.f32 %v2183, %v2182
    %v2185 = vmul.f32 0.5, %v2184
    %v2186 = vsub.f32 1.5, %v2185
    %v2187 = vmul.f32 %v2182, %v2186
    %vm2188 = vweird.f32 %v1999
    %vm2189 = vweird.f32 %v2182
    %vm2190 = vmor %vm2188, %vm2189
    %v2191 = vsel %vm2190, %v2182, %v2187
    %v2192 = vrsqrt.pop %v2000
    %v2193 = vmul.f32 %v2192, %v2000
    %v2194 = vmul.f32 %v2193, %v2192
    %v2195 = vmul.f32 0.5, %v2194
    %v2196 = vsub.f32 1.5, %v2195
    %v2197 = vmul.f32 %v2192, %v2196
    %vm2198 = vweird.f32 %v2000
    %vm2199 = vweird.f32 %v2192
    %vm2200 = vmor %vm2198, %vm2199
    %v2201 = vsel %vm2200, %v2192, %v2197
    %v2202 = vrsqrt.pop %v2001
    %v2203 = vmul.f32 %v2202, %v2001
    %v2204 = vmul.f32 %v2203, %v2202
    %v2205 = vmul.f32 0.5, %v2204
    %v2206 = vsub.f32 1.5, %v2205
    %v2207 = vmul.f32 %v2202, %v2206
    %vm2208 = vweird.f32 %v2001
    %vm2209 = vweird.f32 %v2202
    %vm2210 = vmor %vm2208, %vm2209
    %v2211 = vsel %vm2210, %v2202, %v2207
    %v2212 = vrsqrt.pop %v2002
    %v2213 = vmul.f32 %v2212, %v2002
    %v2214 = vmul.f32 %v2213, %v2212
    %v2215 = vmul.f32 0.5, %v2214
    %v2216 = vsub.f32 1.5, %v2215
    %v2217 = vmul.f32 %v2212, %v2216
    %vm2218 = vweird.f32 %v2002
    %vm2219 = vweird.f32 %v2212
    %vm2220 = vmor %vm2218, %vm2219
    %v2221 = vsel %vm2220, %v2212, %v2217
    %v2222 = vrsqrt.pop %v2003
    %v2223 = vmul.f32 %v2222, %v2003
    %v2224 = vmul.f32 %v2223, %v2222
    %v2225 = vmul.f32 0.5, %v2224
    %v2226 = vsub.f32 1.5, %v2225
    %v2227 = vmul.f32 %v2222, %v2226
    %vm2228 = vweird.f32 %v2003
    %vm2229 = vweird.f32 %v2222
    %vm2230 = vmor %vm2228, %vm2229
    %v2231 = vsel %vm2230, %v2222, %v2227
    %v2232 = vrsqrt.pop %v2004
    %v2233 = vmul.f32 %v2232, %v2004
    %v2234 = vmul.f32 %v2233, %v2232
    %v2235 = vmul.f32 0.5, %v2234
    %v2236 = vsub.f32 1.5, %v2235
    %v2237 = vmul.f32 %v2232, %v2236
    %vm2238 = vweird.f32 %v2004
    %vm2239 = vweird.f32 %v2232
    %vm2240 = vmor %vm2238, %vm2239
    %v2241 = vsel %vm2240, %v2232, %v2237
    %v2242 = vrsqrt.pop %v2005
    %v2243 = vmul.f32 %v2242, %v2005
    %v2244 = vmul.f32 %v2243, %v2242
    %v2245 = vmul.f32 0.5, %v2244
    %v2246 = vsub.f32 1.5, %v2245
    %v2247 = vmul.f32 %v2242, %v2246
    %vm2248 = vweird.f32 %v2005
    %vm2249 = vweird.f32 %v2242
    %vm2250 = vmor %vm2248, %vm2249
    %v2251 = vsel %vm2250, %v2242, %v2247
    %v2252 = vrsqrt.pop %v2006
    %v2253 = vmul.f32 %v2252, %v2006
    %v2254 = vmul.f32 %v2253, %v2252
    %v2255 = vmul.f32 0.5, %v2254
    %v2256 = vsub.f32 1.5, %v2255
    %v2257 = vmul.f32 %v2252, %v2256
    %vm2258 = vweird.f32 %v2006
    %vm2259 = vweird.f32 %v2252
    %vm2260 = vmor %vm2258, %vm2259
    %v2261 = vsel %vm2260, %v2252, %v2257
    %v2262 = vrsqrt.pop %v2007
    %v2263 = vmul.f32 %v2262, %v2007
    %v2264 = vmul.f32 %v2263, %v2262
    %v2265 = vmul.f32 0.5, %v2264
    %v2266 = vsub.f32 1.5, %v2265
    %v2267 = vmul.f32 %v2262, %v2266
    %vm2268 = vweird.f32 %v2007
    %vm2269 = vweird.f32 %v2262
    %vm2270 = vmor %vm2268, %vm2269
    %v2271 = vsel %vm2270, %v2262, %v2267
    %v2272 = vrsqrt.pop %v2008
    %v2273 = vmul.f32 %v2272, %v2008
    %v2274 = vmul.f32 %v2273, %v2272
    %v2275 = vmul.f32 0.5, %v2274
    %v2276 = vsub.f32 1.5, %v2275
    %v2277 = vmul.f32 %v2272, %v2276
    %vm2278 = vweird.f32 %v2008
    %vm2279 = vweird.f32 %v2272
    %vm2280 = vmor %vm2278, %vm2279
    %v2281 = vsel %vm2280, %v2272, %v2277
    %v2282 = vrsqrt.pop %v2009
    %v2283 = vmul.f32 %v2282, %v2009
    %v2284 = vmul.f32 %v2283, %v2282
    %v2285 = vmul.f32 0.5, %v2284
    %v2286 = vsub.f32 1.5, %v2285
    %v2287 = vmul.f32 %v2282, %v2286
    %vm2288 = vweird.f32 %v2009
    %vm2289 = vweird.f32 %v2282
    %vm2290 = vmor %vm2288, %vm2289
    %v2291 = vsel %vm2290, %v2282, %v2287
    %v2292 = vrsqrt.pop %v2010
    %v2293 = vmul.f32 %v2292, %v2010
    %v2294 = vmul.f32 %v2293, %v2292
    %v2295 = vmul.f32 0.5, %v2294
    %v2296 = vsub.f32 1.5, %v2295
    %v2297 = vmul.f32 %v2292, %v2296
    %vm2298 = vweird.f32 %v2010
    %vm2299 = vweird.f32 %v2292
    %vm2300 = vmor %vm2298, %vm2299
    %v2301 = vsel %vm2300, %v2292, %v2297
    %v2302 = vrsqrt.pop %v2011
    %v2303 = vmul.f32 %v2302, %v2011
    %v2304 = vmul.f32 %v2303, %v2302
    %v2305 = vmul.f32 0.5, %v2304
    %v2306 = vsub.f32 1.5, %v2305
    %v2307 = vmul.f32 %v2302, %v2306
    %vm2308 = vweird.f32 %v2011
    %vm2309 = vweird.f32 %v2302
    %vm2310 = vmor %vm2308, %vm2309
    %v2311 = vsel %vm2310, %v2302, %v2307
    %v2312 = vrsqrt.pop %v2012
    %v2313 = vmul.f32 %v2312, %v2012
    %v2314 = vmul.f32 %v2313, %v2312
    %v2315 = vmul.f32 0.5, %v2314
    %v2316 = vsub.f32 1.5, %v2315
    %v2317 = vmul.f32 %v2312, %v2316
    %vm2318 = vweird.f32 %v2012
    %vm2319 = vweird.f32 %v2312
    %vm2320 = vmor %vm2318, %vm2319
    %v2321 = vsel %vm2320, %v2312, %v2317
    %v2322 = vrsqrt.pop %v2013
    %v2323 = vmul.f32 %v2322, %v2013
    %v2324 = vmul.f32 %v2323, %v2322
    %v2325 = vmul.f32 0.5, %v2324
    %v2326 = vsub.f32 1.5, %v2325
    %v2327 = vmul.f32 %v2322, %v2326
    %vm2328 = vweird.f32 %v2013
    %vm2329 = vweird.f32 %v2322
    %vm2330 = vmor %vm2328, %vm2329
    %v2331 = vsel %vm2330, %v2322, %v2327
    %v2332 = vrsqrt.pop %v2014
    %v2333 = vmul.f32 %v2332, %v2014
    %v2334 = vmul.f32 %v2333, %v2332
    %v2335 = vmul.f32 0.5, %v2334
    %v2336 = vsub.f32 1.5, %v2335
    %v2337 = vmul.f32 %v2332, %v2336
    %vm2338 = vweird.f32 %v2014
    %vm2339 = vweird.f32 %v2332
    %vm2340 = vmor %vm2338, %vm2339
    %v2341 = vsel %vm2340, %v2332, %v2337
    %v2342 = vrsqrt.pop %v2015
    %v2343 = vmul.f32 %v2342, %v2015
    %v2344 = vmul.f32 %v2343, %v2342
    %v2345 = vmul.f32 0.5, %v2344
    %v2346 = vsub.f32 1.5, %v2345
    %v2347 = vmul.f32 %v2342, %v2346
    %vm2348 = vweird.f32 %v2015
    %vm2349 = vweird.f32 %v2342
    %vm2350 = vmor %vm2348, %vm2349
    %v2351 = vsel %vm2350, %v2342, %v2347
    %v2352 = vrsqrt.pop %v2016
    %v2353 = vmul.f32 %v2352, %v2016
    %v2354 = vmul.f32 %v2353, %v2352
    %v2355 = vmul.f32 0.5, %v2354
    %v2356 = vsub.f32 1.5, %v2355
    %v2357 = vmul.f32 %v2352, %v2356
    %vm2358 = vweird.f32 %v2016
    %vm2359 = vweird.f32 %v2352
    %vm2360 = vmor %vm2358, %vm2359
    %v2361 = vsel %vm2360, %v2352, %v2357
    %v2362 = vrsqrt.pop %v2017
    %v2363 = vmul.f32 %v2362, %v2017
    %v2364 = vmul.f32 %v2363, %v2362
    %v2365 = vmul.f32 0.5, %v2364
    %v2366 = vsub.f32 1.5, %v2365
    %v2367 = vmul.f32 %v2362, %v2366
    %vm2368 = vweird.f32 %v2017
    %vm2369 = vweird.f32 %v2362
    %vm2370 = vmor %vm2368, %vm2369
    %v2371 = vsel %vm2370, %v2362, %v2367
    %v2372 = vrsqrt.pop %v2018
    %v2373 = vmul.f32 %v2372, %v2018
    %v2374 = vmul.f32 %v2373, %v2372
    %v2375 = vmul.f32 0.5, %v2374
    %v2376 = vsub.f32 1.5, %v2375
    %v2377 = vmul.f32 %v2372, %v2376
    %vm2378 = vweird.f32 %v2018
    %vm2379 = vweird.f32 %v2372
    %vm2380 = vmor %vm2378, %vm2379
    %v2381 = vsel %vm2380, %v2372, %v2377
    %v2382 = vrsqrt.pop %v2019
    %v2383 = vmul.f32 %v2382, %v2019
    %v2384 = vmul.f32 %v2383, %v2382
    %v2385 = vmul.f32 0.5, %v2384
    %v2386 = vsub.f32 1.5, %v2385
    %v2387 = vmul.f32 %v2382, %v2386
    %vm2388 = vweird.f32 %v2019
    %vm2389 = vweird.f32 %v2382
    %vm2390 = vmor %vm2388, %vm2389
    %v2391 = vsel %vm2390, %v2382, %v2387
    %v2392 = vrsqrt.pop %v2020
    %v2393 = vmul.f32 %v2392, %v2020
    %v2394 = vmul.f32 %v2393, %v2392
    %v2395 = vmul.f32 0.5, %v2394
    %v2396 = vsub.f32 1.5, %v2395
    %v2397 = vmul.f32 %v2392, %v2396
    %vm2398 = vweird.f32 %v2020
    %vm2399 = vweird.f32 %v2392
    %vm2400 = vmor %vm2398, %vm2399
    %v2401 = vsel %vm2400, %v2392, %v2397
    %v2402 = vrsqrt.pop %v2021
    %v2403 = vmul.f32 %v2402, %v2021
    %v2404 = vmul.f32 %v2403, %v2402
    %v2405 = vmul.f32 0.5, %v2404
    %v2406 = vsub.f32 1.5, %v2405
    %v2407 = vmul.f32 %v2402, %v2406
    %vm2408 = vweird.f32 %v2021
    %vm2409 = vweird.f32 %v2402
    %vm2410 = vmor %vm2408, %vm2409
    %v2411 = vsel %vm2410, %v2402, %v2407
    %v2412 = vrsqrt.pop %v2022
    %v2413 = vmul.f32 %v2412, %v2022
    %v2414 = vmul.f32 %v2413, %v2412
    %v2415 = vmul.f32 0.5, %v2414
    %v2416 = vsub.f32 1.5, %v2415
    %v2417 = vmul.f32 %v2412, %v2416
    %vm2418 = vweird.f32 %v2022
    %vm2419 = vweird.f32 %v2412
    %vm2420 = vmor %vm2418, %vm2419
    %v2421 = vsel %vm2420, %v2412, %v2417
    %v2422 = vrsqrt.pop %v2023
    %v2423 = vmul.f32 %v2422, %v2023
    %v2424 = vmul.f32 %v2423, %v2422
    %v2425 = vmul.f32 0.5, %v2424
    %v2426 = vsub.f32 1.5, %v2425
    %v2427 = vmul.f32 %v2422, %v2426
    %vm2428 = vweird.f32 %v2023
    %vm2429 = vweird.f32 %v2422
    %vm2430 = vmor %vm2428, %vm2429
    %v2431 = vsel %vm2430, %v2422, %v2427
    %v2432 = vrsqrt.pop %v2024
    %v2433 = vmul.f32 %v2432, %v2024
    %v2434 = vmul.f32 %v2433, %v2432
    %v2435 = vmul.f32 0.5, %v2434
    %v2436 = vsub.f32 1.5, %v2435
    %v2437 = vmul.f32 %v2432, %v2436
    %vm2438 = vweird.f32 %v2024
    %vm2439 = vweird.f32 %v2432
    %vm2440 = vmor %vm2438, %vm2439
    %v2441 = vsel %vm2440, %v2432, %v2437
    %v2442 = vrsqrt.pop %v2025
    %v2443 = vmul.f32 %v2442, %v2025
    %v2444 = vmul.f32 %v2443, %v2442
    %v2445 = vmul.f32 0.5, %v2444
    %v2446 = vsub.f32 1.5, %v2445
    %v2447 = vmul.f32 %v2442, %v2446
    %vm2448 = vweird.f32 %v2025
    %vm2449 = vweird.f32 %v2442
    %vm2450 = vmor %vm2448, %vm2449
    %v2451 = vsel %vm2450, %v2442, %v2447
    %v2452 = vrsqrt.pop %v2026
    %v2453 = vmul.f32 %v2452, %v2026
    %v2454 = vmul.f32 %v2453, %v2452
    %v2455 = vmul.f32 0.5, %v2454
    %v2456 = vsub.f32 1.5, %v2455
    %v2457 = vmul.f32 %v2452, %v2456
    %vm2458 = vweird.f32 %v2026
    %vm2459 = vweird.f32 %v2452
    %vm2460 = vmor %vm2458, %vm2459
    %v2461 = vsel %vm2460, %v2452, %v2457
    %v2462 = vrsqrt.pop %v2027
    %v2463 = vmul.f32 %v2462, %v2027
    %v2464 = vmul.f32 %v2463, %v2462
    %v2465 = vmul.f32 0.5, %v2464
    %v2466 = vsub.f32 1.5, %v2465
    %v2467 = vmul.f32 %v2462, %v2466
    %vm2468 = vweird.f32 %v2027
    %vm2469 = vweird.f32 %v2462
    %vm2470 = vmor %vm2468, %vm2469
    %v2471 = vsel %vm2470, %v2462, %v2467
    %v2472 = vrsqrt.pop %v2028
    %v2473 = vmul.f32 %v2472, %v2028
    %v2474 = vmul.f32 %v2473, %v2472
    %v2475 = vmul.f32 0.5, %v2474
    %v2476 = vsub.f32 1.5, %v2475
    %v2477 = vmul.f32 %v2472, %v2476
    %vm2478 = vweird.f32 %v2028
    %vm2479 = vweird.f32 %v2472
    %vm2480 = vmor %vm2478, %vm2479
    %v2481 = vsel %vm2480, %v2472, %v2477
    %v2482 = vrsqrt.pop %v2029
    %v2483 = vmul.f32 %v2482, %v2029
    %v2484 = vmul.f32 %v2483, %v2482
    %v2485 = vmul.f32 0.5, %v2484
    %v2486 = vsub.f32 1.5, %v2485
    %v2487 = vmul.f32 %v2482, %v2486
    %vm2488 = vweird.f32 %v2029
    %vm2489 = vweird.f32 %v2482
    %vm2490 = vmor %vm2488, %vm2489
    %v2491 = vsel %vm2490, %v2482, %v2487
    %v2492 = vrsqrt.pop %v2030
    %v2493 = vmul.f32 %v2492, %v2030
    %v2494 = vmul.f32 %v2493, %v2492
    %v2495 = vmul.f32 0.5, %v2494
    %v2496 = vsub.f32 1.5, %v2495
    %v2497 = vmul.f32 %v2492, %v2496
    %vm2498 = vweird.f32 %v2030
    %vm2499 = vweird.f32 %v2492
    %vm2500 = vmor %vm2498, %vm2499
    %v2501 = vsel %vm2500, %v2492, %v2497
    %v2502 = vrsqrt.pop %v2031
    %v2503 = vmul.f32 %v2502, %v2031
    %v2504 = vmul.f32 %v2503, %v2502
    %v2505 = vmul.f32 0.5, %v2504
    %v2506 = vsub.f32 1.5, %v2505
    %v2507 = vmul.f32 %v2502, %v2506
    %vm2508 = vweird.f32 %v2031
    %vm2509 = vweird.f32 %v2502
    %vm2510 = vmor %vm2508, %vm2509
    %v2511 = vsel %vm2510, %v2502, %v2507
    %v2512 = vrsqrt.pop %v2032
    %v2513 = vmul.f32 %v2512, %v2032
    %v2514 = vmul.f32 %v2513, %v2512
    %v2515 = vmul.f32 0.5, %v2514
    %v2516 = vsub.f32 1.5, %v2515
    %v2517 = vmul.f32 %v2512, %v2516
    %vm2518 = vweird.f32 %v2032
    %vm2519 = vweird.f32 %v2512
    %vm2520 = vmor %vm2518, %vm2519
    %v2521 = vsel %vm2520, %v2512, %v2517
    %v2522 = vrsqrt.pop %v2033
    %v2523 = vmul.f32 %v2522, %v2033
    %v2524 = vmul.f32 %v2523, %v2522
    %v2525 = vmul.f32 0.5, %v2524
    %v2526 = vsub.f32 1.5, %v2525
    %v2527 = vmul.f32 %v2522, %v2526
    %vm2528 = vweird.f32 %v2033
    %vm2529 = vweird.f32 %v2522
    %vm2530 = vmor %vm2528, %vm2529
    %v2531 = vsel %vm2530, %v2522, %v2527
    %v2532 = vrsqrt.pop %v2034
    %v2533 = vmul.f32 %v2532, %v2034
    %v2534 = vmul.f32 %v2533, %v2532
    %v2535 = vmul.f32 0.5, %v2534
    %v2536 = vsub.f32 1.5, %v2535
    %v2537 = vmul.f32 %v2532, %v2536
    %vm2538 = vweird.f32 %v2034
    %vm2539 = vweird.f32 %v2532
    %vm2540 = vmor %vm2538, %vm2539
    %v2541 = vsel %vm2540, %v2532, %v2537
    %v2542 = vrsqrt.pop %v2035
    %v2543 = vmul.f32 %v2542, %v2035
    %v2544 = vmul.f32 %v2543, %v2542
    %v2545 = vmul.f32 0.5, %v2544
    %v2546 = vsub.f32 1.5, %v2545
    %v2547 = vmul.f32 %v2542, %v2546
    %vm2548 = vweird.f32 %v2035
    %vm2549 = vweird.f32 %v2542
    %vm2550 = vmor %vm2548, %vm2549
    %v2551 = vsel %vm2550, %v2542, %v2547
    %v2552 = vrsqrt.pop %v2036
    %v2553 = vmul.f32 %v2552, %v2036
    %v2554 = vmul.f32 %v2553, %v2552
    %v2555 = vmul.f32 0.5, %v2554
    %v2556 = vsub.f32 1.5, %v2555
    %v2557 = vmul.f32 %v2552, %v2556
    %vm2558 = vweird.f32 %v2036
    %vm2559 = vweird.f32 %v2552
    %vm2560 = vmor %vm2558, %vm2559
    %v2561 = vsel %vm2560, %v2552, %v2557
    %v2562 = vrsqrt.pop %v2037
    %v2563 = vmul.f32 %v2562, %v2037
    %v2564 = vmul.f32 %v2563, %v2562
    %v2565 = vmul.f32 0.5, %v2564
    %v2566 = vsub.f32 1.5, %v2565
    %v2567 = vmul.f32 %v2562, %v2566
    %vm2568 = vweird.f32 %v2037
    %vm2569 = vweird.f32 %v2562
    %vm2570 = vmor %vm2568, %vm2569
    %v2571 = vsel %vm2570, %v2562, %v2567
    %v2572 = vrsqrt.pop %v2038
    %v2573 = vmul.f32 %v2572, %v2038
    %v2574 = vmul.f32 %v2573, %v2572
    %v2575 = vmul.f32 0.5, %v2574
    %v2576 = vsub.f32 1.5, %v2575
    %v2577 = vmul.f32 %v2572, %v2576
    %vm2578 = vweird.f32 %v2038
    %vm2579 = vweird.f32 %v2572
    %vm2580 = vmor %vm2578, %vm2579
    %v2581 = vsel %vm2580, %v2572, %v2577
    %v2582 = vrsqrt.pop %v2039
    %v2583 = vmul.f32 %v2582, %v2039
    %v2584 = vmul.f32 %v2583, %v2582
    %v2585 = vmul.f32 0.5, %v2584
    %v2586 = vsub.f32 1.5, %v2585
    %v2587 = vmul.f32 %v2582, %v2586
    %vm2588 = vweird.f32 %v2039
    %vm2589 = vweird.f32 %v2582
    %vm2590 = vmor %vm2588, %vm2589
    %v2591 = vsel %vm2590, %v2582, %v2587
    %v2592 = vrsqrt.pop %v2040
    %v2593 = vmul.f32 %v2592, %v2040
    %v2594 = vmul.f32 %v2593, %v2592
    %v2595 = vmul.f32 0.5, %v2594
    %v2596 = vsub.f32 1.5, %v2595
    %v2597 = vmul.f32 %v2592, %v2596
    %vm2598 = vweird.f32 %v2040
    %vm2599 = vweird.f32 %v2592
    %vm2600 = vmor %vm2598, %vm2599
    %v2601 = vsel %vm2600, %v2592, %v2597
    %v2602 = vrsqrt.pop %v2041
    %v2603 = vmul.f32 %v2602, %v2041
    %v2604 = vmul.f32 %v2603, %v2602
    %v2605 = vmul.f32 0.5, %v2604
    %v2606 = vsub.f32 1.5, %v2605
    %v2607 = vmul.f32 %v2602, %v2606
    %vm2608 = vweird.f32 %v2041
    %vm2609 = vweird.f32 %v2602
    %vm2610 = vmor %vm2608, %vm2609
    %v2611 = vsel %vm2610, %v2602, %v2607
    %v2612 = vrsqrt.pop %v2042
    %v2613 = vmul.f32 %v2612, %v2042
    %v2614 = vmul.f32 %v2613, %v2612
    %v2615 = vmul.f32 0.5, %v2614
    %v2616 = vsub.f32 1.5, %v2615
    %v2617 = vmul.f32 %v2612, %v2616
    %vm2618 = vweird.f32 %v2042
    %vm2619 = vweird.f32 %v2612
    %vm2620 = vmor %vm2618, %vm2619
    %v2621 = vsel %vm2620, %v2612, %v2617
    %v2622 = vrsqrt.pop %v2043
    %v2623 = vmul.f32 %v2622, %v2043
    %v2624 = vmul.f32 %v2623, %v2622
    %v2625 = vmul.f32 0.5, %v2624
    %v2626 = vsub.f32 1.5, %v2625
    %v2627 = vmul.f32 %v2622, %v2626
    %vm2628 = vweird.f32 %v2043
    %vm2629 = vweird.f32 %v2622
    %vm2630 = vmor %vm2628, %vm2629
    %v2631 = vsel %vm2630, %v2622, %v2627
    %v2632 = vrsqrt.pop %v2044
    %v2633 = vmul.f32 %v2632, %v2044
    %v2634 = vmul.f32 %v2633, %v2632
    %v2635 = vmul.f32 0.5, %v2634
    %v2636 = vsub.f32 1.5, %v2635
    %v2637 = vmul.f32 %v2632, %v2636
    %vm2638 = vweird.f32 %v2044
    %vm2639 = vweird.f32 %v2632
    %vm2640 = vmor %vm2638, %vm2639
    %v2641 = vsel %vm2640, %v2632, %v2637
    %v2642 = vrsqrt.pop %v2045
    %v2643 = vmul.f32 %v2642, %v2045
    %v2644 = vmul.f32 %v2643, %v2642
    %v2645 = vmul.f32 0.5, %v2644
    %v2646 = vsub.f32 1.5, %v2645
    %v2647 = vmul.f32 %v2642, %v2646
    %vm2648 = vweird.f32 %v2045
    %vm2649 = vweird.f32 %v2642
    %vm2650 = vmor %vm2648, %vm2649
    %v2651 = vsel %vm2650, %v2642, %v2647
    %v2652 = vrsqrt.pop %v2046
    %v2653 = vmul.f32 %v2652, %v2046
    %v2654 = vmul.f32 %v2653, %v2652
    %v2655 = vmul.f32 0.5, %v2654
    %v2656 = vsub.f32 1.5, %v2655
    %v2657 = vmul.f32 %v2652, %v2656
    %vm2658 = vweird.f32 %v2046
    %vm2659 = vweird.f32 %v2652
    %vm2660 = vmor %vm2658, %vm2659
    %v2661 = vsel %vm2660, %v2652, %v2657
    %v2662 = vrsqrt.pop %v2047
    %v2663 = vmul.f32 %v2662, %v2047
    %v2664 = vmul.f32 %v2663, %v2662
    %v2665 = vmul.f32 0.5, %v2664
    %v2666 = vsub.f32 1.5, %v2665
    %v2667 = vmul.f32 %v2662, %v2666
    %vm2668 = vweird.f32 %v2047
    %vm2669 = vweird.f32 %v2662
    %vm2670 = vmor %vm2668, %vm2669
    %v2671 = vsel %vm2670, %v2662, %v2667
    %v2672 = vrsqrt.pop %v2048
    %v2673 = vmul.f32 %v2672, %v2048
    %v2674 = vmul.f32 %v2673, %v2672
    %v2675 = vmul.f32 0.5, %v2674
    %v2676 = vsub.f32 1.5, %v2675
    %v2677 = vmul.f32 %v2672, %v2676
    %vm2678 = vweird.f32 %v2048
    %vm2679 = vweird.f32 %v2672
    %vm2680 = vmor %vm2678, %vm2679
    %v2681 = vsel %vm2680, %v2672, %v2677
    %v2682 = vrsqrt.pop %v2049
    %v2683 = vmul.f32 %v2682, %v2049
    %v2684 = vmul.f32 %v2683, %v2682
    %v2685 = vmul.f32 0.5, %v2684
    %v2686 = vsub.f32 1.5, %v2685
    %v2687 = vmul.f32 %v2682, %v2686
    %vm2688 = vweird.f32 %v2049
    %vm2689 = vweird.f32 %v2682
    %vm2690 = vmor %vm2688, %vm2689
    %v2691 = vsel %vm2690, %v2682, %v2687
    %v2692 = vrsqrt.pop %v2050
    %v2693 = vmul.f32 %v2692, %v2050
    %v2694 = vmul.f32 %v2693, %v2692
    %v2695 = vmul.f32 0.5, %v2694
    %v2696 = vsub.f32 1.5, %v2695
    %v2697 = vmul.f32 %v2692, %v2696
    %vm2698 = vweird.f32 %v2050
    %vm2699 = vweird.f32 %v2692
    %vm2700 = vmor %vm2698, %vm2699
    %v2701 = vsel %vm2700, %v2692, %v2697
    %v2702 = vrsqrt.pop %v2051
    %v2703 = vmul.f32 %v2702, %v2051
    %v2704 = vmul.f32 %v2703, %v2702
    %v2705 = vmul.f32 0.5, %v2704
    %v2706 = vsub.f32 1.5, %v2705
    %v2707 = vmul.f32 %v2702, %v2706
    %vm2708 = vweird.f32 %v2051
    %vm2709 = vweird.f32 %v2702
    %vm2710 = vmor %vm2708, %vm2709
    %v2711 = vsel %vm2710, %v2702, %v2707
    %v2712 = vrsqrt.pop %v2052
    %v2713 = vmul.f32 %v2712, %v2052
    %v2714 = vmul.f32 %v2713, %v2712
    %v2715 = vmul.f32 0.5, %v2714
    %v2716 = vsub.f32 1.5, %v2715
    %v2717 = vmul.f32 %v2712, %v2716
    %vm2718 = vweird.f32 %v2052
    %vm2719 = vweird.f32 %v2712
    %vm2720 = vmor %vm2718, %vm2719
    %v2721 = vsel %vm2720, %v2712, %v2717
    %v2722 = vrsqrt.pop %v2053
    %v2723 = vmul.f32 %v2722, %v2053
    %v2724 = vmul.f32 %v2723, %v2722
    %v2725 = vmul.f32 0.5, %v2724
    %v2726 = vsub.f32 1.5, %v2725
    %v2727 = vmul.f32 %v2722, %v2726
    %vm2728 = vweird.f32 %v2053
    %vm2729 = vweird.f32 %v2722
    %vm2730 = vmor %vm2728, %vm2729
    %v2731 = vsel %vm2730, %v2722, %v2727
    %v2732 = vrsqrt.pop %v2054
    %v2733 = vmul.f32 %v2732, %v2054
    %v2734 = vmul.f32 %v2733, %v2732
    %v2735 = vmul.f32 0.5, %v2734
    %v2736 = vsub.f32 1.5, %v2735
    %v2737 = vmul.f32 %v2732, %v2736
    %vm2738 = vweird.f32 %v2054
    %vm2739 = vweird.f32 %v2732
    %vm2740 = vmor %vm2738, %vm2739
    %v2741 = vsel %vm2740, %v2732, %v2737
    %v2742 = vrsqrt.pop %v2055
    %v2743 = vmul.f32 %v2742, %v2055
    %v2744 = vmul.f32 %v2743, %v2742
    %v2745 = vmul.f32 0.5, %v2744
    %v2746 = vsub.f32 1.5, %v2745
    %v2747 = vmul.f32 %v2742, %v2746
    %vm2748 = vweird.f32 %v2055
    %vm2749 = vweird.f32 %v2742
    %vm2750 = vmor %vm2748, %vm2749
    %v2751 = vsel %vm2750, %v2742, %v2747
    %v2752 = vrsqrt.pop %v2056
    %v2753 = vmul.f32 %v2752, %v2056
    %v2754 = vmul.f32 %v2753, %v2752
    %v2755 = vmul.f32 0.5, %v2754
    %v2756 = vsub.f32 1.5, %v2755
    %v2757 = vmul.f32 %v2752, %v2756
    %vm2758 = vweird.f32 %v2056
    %vm2759 = vweird.f32 %v2752
    %vm2760 = vmor %vm2758, %vm2759
    %v2761 = vsel %vm2760, %v2752, %v2757
    %v2762 = vrsqrt.pop %v2057
    %v2763 = vmul.f32 %v2762, %v2057
    %v2764 = vmul.f32 %v2763, %v2762
    %v2765 = vmul.f32 0.5, %v2764
    %v2766 = vsub.f32 1.5, %v2765
    %v2767 = vmul.f32 %v2762, %v2766
    %vm2768 = vweird.f32 %v2057
    %vm2769 = vweird.f32 %v2762
    %vm2770 = vmor %vm2768, %vm2769
    %v2771 = vsel %vm2770, %v2762, %v2767
    %v2772 = vrsqrt.pop %v2058
    %v2773 = vmul.f32 %v2772, %v2058
    %v2774 = vmul.f32 %v2773, %v2772
    %v2775 = vmul.f32 0.5, %v2774
    %v2776 = vsub.f32 1.5, %v2775
    %v2777 = vmul.f32 %v2772, %v2776
    %vm2778 = vweird.f32 %v2058
    %vm2779 = vweird.f32 %v2772
    %vm2780 = vmor %vm2778, %vm2779
    %v2781 = vsel %vm2780, %v2772, %v2777
    %v2782 = vrsqrt.pop %v2059
    %v2783 = vmul.f32 %v2782, %v2059
    %v2784 = vmul.f32 %v2783, %v2782
    %v2785 = vmul.f32 0.5, %v2784
    %v2786 = vsub.f32 1.5, %v2785
    %v2787 = vmul.f32 %v2782, %v2786
    %vm2788 = vweird.f32 %v2059
    %vm2789 = vweird.f32 %v2782
    %vm2790 = vmor %vm2788, %vm2789
    %v2791 = vsel %vm2790, %v2782, %v2787
    %v2792 = vrsqrt.pop %v2060
    %v2793 = vmul.f32 %v2792, %v2060
    %v2794 = vmul.f32 %v2793, %v2792
    %v2795 = vmul.f32 0.5, %v2794
    %v2796 = vsub.f32 1.5, %v2795
    %v2797 = vmul.f32 %v2792, %v2796
    %vm2798 = vweird.f32 %v2060
    %vm2799 = vweird.f32 %v2792
    %vm2800 = vmor %vm2798, %vm2799
    %v2801 = vsel %vm2800, %v2792, %v2797
    %v2802 = vrsqrt.pop %v2061
    %v2803 = vmul.f32 %v2802, %v2061
    %v2804 = vmul.f32 %v2803, %v2802
    %v2805 = vmul.f32 0.5, %v2804
    %v2806 = vsub.f32 1.5, %v2805
    %v2807 = vmul.f32 %v2802, %v2806
    %vm2808 = vweird.f32 %v2061
    %vm2809 = vweird.f32 %v2802
    %vm2810 = vmor %vm2808, %vm2809
    %v2811 = vsel %vm2810, %v2802, %v2807
    %v2812 = vrsqrt.pop %v2062
    %v2813 = vmul.f32 %v2812, %v2062
    %v2814 = vmul.f32 %v2813, %v2812
    %v2815 = vmul.f32 0.5, %v2814
    %v2816 = vsub.f32 1.5, %v2815
    %v2817 = vmul.f32 %v2812, %v2816
    %vm2818 = vweird.f32 %v2062
    %vm2819 = vweird.f32 %v2812
    %vm2820 = vmor %vm2818, %vm2819
    %v2821 = vsel %vm2820, %v2812, %v2817
    %v2822 = vrsqrt.pop %v2063
    %v2823 = vmul.f32 %v2822, %v2063
    %v2824 = vmul.f32 %v2823, %v2822
    %v2825 = vmul.f32 0.5, %v2824
    %v2826 = vsub.f32 1.5, %v2825
    %v2827 = vmul.f32 %v2822, %v2826
    %vm2828 = vweird.f32 %v2063
    %vm2829 = vweird.f32 %v2822
    %vm2830 = vmor %vm2828, %vm2829
    %v2831 = vsel %vm2830, %v2822, %v2827
    %v2832 = vrsqrt.pop %v2064
    %v2833 = vmul.f32 %v2832, %v2064
    %v2834 = vmul.f32 %v2833, %v2832
    %v2835 = vmul.f32 0.5, %v2834
    %v2836 = vsub.f32 1.5, %v2835
    %v2837 = vmul.f32 %v2832, %v2836
    %vm2838 = vweird.f32 %v2064
    %vm2839 = vweird.f32 %v2832
    %vm2840 = vmor %vm2838, %vm2839
    %v2841 = vsel %vm2840, %v2832, %v2837
    %v2842 = vrsqrt.pop %v2065
    %v2843 = vmul.f32 %v2842, %v2065
    %v2844 = vmul.f32 %v2843, %v2842
    %v2845 = vmul.f32 0.5, %v2844
    %v2846 = vsub.f32 1.5, %v2845
    %v2847 = vmul.f32 %v2842, %v2846
    %vm2848 = vweird.f32 %v2065
    %vm2849 = vweird.f32 %v2842
    %vm2850 = vmor %vm2848, %vm2849
    %v2851 = vsel %vm2850, %v2842, %v2847
    %v2852 = vrsqrt.pop %v2066
    %v2853 = vmul.f32 %v2852, %v2066
    %v2854 = vmul.f32 %v2853, %v2852
    %v2855 = vmul.f32 0.5, %v2854
    %v2856 = vsub.f32 1.5, %v2855
    %v2857 = vmul.f32 %v2852, %v2856
    %vm2858 = vweird.f32 %v2066
    %vm2859 = vweird.f32 %v2852
    %vm2860 = vmor %vm2858, %vm2859
    %v2861 = vsel %vm2860, %v2852, %v2857
    %v2862 = vrsqrt.pop %v2067
    %v2863 = vmul.f32 %v2862, %v2067
    %v2864 = vmul.f32 %v2863, %v2862
    %v2865 = vmul.f32 0.5, %v2864
    %v2866 = vsub.f32 1.5, %v2865
    %v2867 = vmul.f32 %v2862, %v2866
    %vm2868 = vweird.f32 %v2067
    %vm2869 = vweird.f32 %v2862
    %vm2870 = vmor %vm2868, %vm2869
    %v2871 = vsel %vm2870, %v2862, %v2867
    %v2872 = vrsqrt.pop %v2068
    %v2873 = vmul.f32 %v2872, %v2068
    %v2874 = vmul.f32 %v2873, %v2872
    %v2875 = vmul.f32 0.5, %v2874
    %v2876 = vsub.f32 1.5, %v2875
    %v2877 = vmul.f32 %v2872, %v2876
    %vm2878 = vweird.f32 %v2068
    %vm2879 = vweird.f32 %v2872
    %vm2880 = vmor %vm2878, %vm2879
    %v2881 = vsel %vm2880, %v2872, %v2877
    %v2882 = vrsqrt.pop %v2069
    %v2883 = vmul.f32 %v2882, %v2069
    %v2884 = vmul.f32 %v2883, %v2882
    %v2885 = vmul.f32 0.5, %v2884
    %v2886 = vsub.f32 1.5, %v2885
    %v2887 = vmul.f32 %v2882, %v2886
    %vm2888 = vweird.f32 %v2069
    %vm2889 = vweird.f32 %v2882
    %vm2890 = vmor %vm2888, %vm2889
    %v2891 = vsel %vm2890, %v2882, %v2887
    %v2892 = vrsqrt.pop %v2070
    %v2893 = vmul.f32 %v2892, %v2070
    %v2894 = vmul.f32 %v2893, %v2892
    %v2895 = vmul.f32 0.5, %v2894
    %v2896 = vsub.f32 1.5, %v2895
    %v2897 = vmul.f32 %v2892, %v2896
    %vm2898 = vweird.f32 %v2070
    %vm2899 = vweird.f32 %v2892
    %vm2900 = vmor %vm2898, %vm2899
    %v2901 = vsel %vm2900, %v2892, %v2897
    %v2902 = vrsqrt.pop %v2071
    %v2903 = vmul.f32 %v2902, %v2071
    %v2904 = vmul.f32 %v2903, %v2902
    %v2905 = vmul.f32 0.5, %v2904
    %v2906 = vsub.f32 1.5, %v2905
    %v2907 = vmul.f32 %v2902, %v2906
    %vm2908 = vweird.f32 %v2071
    %vm2909 = vweird.f32 %v2902
    %vm2910 = vmor %vm2908, %vm2909
    %v2911 = vsel %vm2910, %v2902, %v2907
    %v2912 = vld [vmem:[%s3] sm:$0xff]
    %v2913 = vld [vmem:[%s3 + $0x8] sm:$0xff]
    %v2914 = vld [vmem:[%s3 + $0x10] sm:$0xff]
    %v2915 = vld [vmem:[%s3 + $0x18] sm:$0xff]
    %v2916 = vld [vmem:[%s3 + $0x20] sm:$0xff]
    %v2917 = vld [vmem:[%s3 + $0x28] sm:$0xff]
    %v2918 = vld [vmem:[%s3 + $0x30] sm:$0xff]
    %v2919 = vld [vmem:[%s3 + $0x38] sm:$0xff]
    %v2920 = vld [vmem:[%s3 + $0x40] sm:$0xff]
    %v2921 = vld [vmem:[%s3 + $0x48] sm:$0xff]
    %v2922 = vld [vmem:[%s3 + $0x50] sm:$0xff]
    %v2923 = vld [vmem:[%s3 + $0x58] sm:$0xff]
    %v2924 = vld [vmem:[%s3 + $0x60] sm:$0xff]
    %v2925 = vld [vmem:[%s3 + $0x68] sm:$0xff]
    %v2926 = vld [vmem:[%s3 + $0x70] sm:$0xff]
    %v2927 = vld [vmem:[%s3 + $0x78] sm:$0xff]
    %v2928 = vld [vmem:[%s3 + $0x80] sm:$0xff]
    %v2929 = vld [vmem:[%s3 + $0x88] sm:$0xff]
    %v2930 = vld [vmem:[%s3 + $0x90] sm:$0xff]
    %v2931 = vld [vmem:[%s3 + $0x98] sm:$0xff]
    %v2932 = vld [vmem:[%s3 + $0xa0] sm:$0xff]
    %v2933 = vld [vmem:[%s3 + $0xa8] sm:$0xff]
    %v2934 = vld [vmem:[%s3 + $0xb0] sm:$0xff]
    %v2935 = vld [vmem:[%s3 + $0xb8] sm:$0xff]
    %v2936 = vld [vmem:[%s3 + $0xc0] sm:$0xff]
    %v2937 = vld [vmem:[%s3 + $0xc8] sm:$0xff]
    %v2938 = vld [vmem:[%s3 + $0xd0] sm:$0xff]
    %v2939 = vld [vmem:[%s3 + $0xd8] sm:$0xff]
    %v2940 = vld [vmem:[%s3 + $0xe0] sm:$0xff]
    %v2941 = vld [vmem:[%s3 + $0xe8] sm:$0xff]
    %v2942 = vld [vmem:[%s3 + $0xf0] sm:$0xff]
    %v2943 = vld [vmem:[%s3 + $0xf8] sm:$0xff]
    %v2944 = vld [vmem:[%s3 + $0x100] sm:$0xff]
    %v2945 = vld [vmem:[%s3 + $0x108] sm:$0xff]
    %v2946 = vld [vmem:[%s3 + $0x110] sm:$0xff]
    %v2947 = vld [vmem:[%s3 + $0x118] sm:$0xff]
    %v2948 = vld [vmem:[%s3 + $0x120] sm:$0xff]
    %v2949 = vld [vmem:[%s3 + $0x128] sm:$0xff]
    %v2950 = vld [vmem:[%s3 + $0x130] sm:$0xff]
    %v2951 = vld [vmem:[%s3 + $0x138] sm:$0xff]
    %v2952 = vld [vmem:[%s3 + $0x140] sm:$0xff]
    %v2953 = vld [vmem:[%s3 + $0x148] sm:$0xff]
    %v2954 = vld [vmem:[%s3 + $0x150] sm:$0xff]
    %v2955 = vld [vmem:[%s3 + $0x158] sm:$0xff]
    %v2956 = vld [vmem:[%s3 + $0x160] sm:$0xff]
    %v2957 = vld [vmem:[%s3 + $0x168] sm:$0xff]
    %v2958 = vld [vmem:[%s3 + $0x170] sm:$0xff]
    %v2959 = vld [vmem:[%s3 + $0x178] sm:$0xff]
    %v2960 = vld [vmem:[%s3 + $0x180] sm:$0xff]
    %v2961 = vld [vmem:[%s3 + $0x188] sm:$0xff]
    %v2962 = vld [vmem:[%s3 + $0x190] sm:$0xff]
    %v2963 = vld [vmem:[%s3 + $0x198] sm:$0xff]
    %v2964 = vld [vmem:[%s3 + $0x1a0] sm:$0xff]
    %v2965 = vld [vmem:[%s3 + $0x1a8] sm:$0xff]
    %v2966 = vld [vmem:[%s3 + $0x1b0] sm:$0xff]
    %v2967 = vld [vmem:[%s3 + $0x1b8] sm:$0xff]
    %v2968 = vld [vmem:[%s3 + $0x1c0] sm:$0xff]
    %v2969 = vld [vmem:[%s3 + $0x1c8] sm:$0xff]
    %v2970 = vld [vmem:[%s3 + $0x1d0] sm:$0xff]
    %v2971 = vld [vmem:[%s3 + $0x1d8] sm:$0xff]
    %v2972 = vld [vmem:[%s3 + $0x1e0] sm:$0xff]
    %v2973 = vld [vmem:[%s3 + $0x1e8] sm:$0xff]
    %v2974 = vld [vmem:[%s3 + $0x1f0] sm:$0xff]
    %v2975 = vld [vmem:[%s3 + $0x1f8] sm:$0xff]
    %v2976 = vld [vmem:[%s3 + $0x200] sm:$0xff]
    %v2977 = vld [vmem:[%s3 + $0x208] sm:$0xff]
    %v2978 = vld [vmem:[%s3 + $0x210] sm:$0xff]
    %v2979 = vld [vmem:[%s3 + $0x218] sm:$0xff]
    %v2980 = vld [vmem:[%s3 + $0x220] sm:$0xff]
    %v2981 = vld [vmem:[%s3 + $0x228] sm:$0xff]
    %v2982 = vld [vmem:[%s3 + $0x230] sm:$0xff]
    %v2983 = vld [vmem:[%s3 + $0x238] sm:$0xff]
    %v2984 = vld [vmem:[%s3 + $0x240] sm:$0xff]
    %v2985 = vld [vmem:[%s3 + $0x248] sm:$0xff]
    %v2986 = vld [vmem:[%s3 + $0x250] sm:$0xff]
    %v2987 = vld [vmem:[%s3 + $0x258] sm:$0xff]
    %v2988 = vld [vmem:[%s3 + $0x260] sm:$0xff]
    %v2989 = vld [vmem:[%s3 + $0x268] sm:$0xff]
    %v2990 = vld [vmem:[%s3 + $0x270] sm:$0xff]
    %v2991 = vld [vmem:[%s3 + $0x278] sm:$0xff]
    %v2992 = vld [vmem:[%s3 + $0x280] sm:$0xff]
    %v2993 = vld [vmem:[%s3 + $0x288] sm:$0xff]
    %v2994 = vld [vmem:[%s3 + $0x290] sm:$0xff]
    %v2995 = vld [vmem:[%s3 + $0x298] sm:$0xff]
    %v2996 = vmul.f32 %v2912, %v2081
    %v2997 = vmul.f32 %v2913, %v2091
    %v2998 = vmul.f32 %v2914, %v2101
    %v2999 = vmul.f32 %v2915, %v2111
    %v3000 = vmul.f32 %v2916, %v2121
    %v3001 = vmul.f32 %v2917, %v2131
    %v3002 = vmul.f32 %v2918, %v2141
    %v3003 = vmul.f32 %v2919, %v2151
    %v3004 = vmul.f32 %v2920, %v2161
    %v3005 = vmul.f32 %v2921, %v2171
    %v3006 = vmul.f32 %v2922, %v2181
    %v3007 = vmul.f32 %v2923, %v2191
    %v3008 = vmul.f32 %v2924, %v2201
    %v3009 = vmul.f32 %v2925, %v2211
    %v3010 = vmul.f32 %v2926, %v2221
    %v3011 = vmul.f32 %v2927, %v2231
    %v3012 = vmul.f32 %v2928, %v2241
    %v3013 = vmul.f32 %v2929, %v2251
    %v3014 = vmul.f32 %v2930, %v2261
    %v3015 = vmul.f32 %v2931, %v2271
    %v3016 = vmul.f32 %v2932, %v2281
    %v3017 = vmul.f32 %v2933, %v2291
    %v3018 = vmul.f32 %v2934, %v2301
    %v3019 = vmul.f32 %v2935, %v2311
    %v3020 = vmul.f32 %v2936, %v2321
    %v3021 = vmul.f32 %v2937, %v2331
    %v3022 = vmul.f32 %v2938, %v2341
    %v3023 = vmul.f32 %v2939, %v2351
    %v3024 = vmul.f32 %v2940, %v2361
    %v3025 = vmul.f32 %v2941, %v2371
    %v3026 = vmul.f32 %v2942, %v2381
    %v3027 = vmul.f32 %v2943, %v2391
    %v3028 = vmul.f32 %v2944, %v2401
    %v3029 = vmul.f32 %v2945, %v2411
    %v3030 = vmul.f32 %v2946, %v2421
    %v3031 = vmul.f32 %v2947, %v2431
    %v3032 = vmul.f32 %v2948, %v2441
    %v3033 = vmul.f32 %v2949, %v2451
    %v3034 = vmul.f32 %v2950, %v2461
    %v3035 = vmul.f32 %v2951, %v2471
    %v3036 = vmul.f32 %v2952, %v2481
    %v3037 = vmul.f32 %v2953, %v2491
    %v3038 = vmul.f32 %v2954, %v2501
    %v3039 = vmul.f32 %v2955, %v2511
    %v3040 = vmul.f32 %v2956, %v2521
    %v3041 = vmul.f32 %v2957, %v2531
    %v3042 = vmul.f32 %v2958, %v2541
    %v3043 = vmul.f32 %v2959, %v2551
    %v3044 = vmul.f32 %v2960, %v2561
    %v3045 = vmul.f32 %v2961, %v2571
    %v3046 = vmul.f32 %v2962, %v2581
    %v3047 = vmul.f32 %v2963, %v2591
    %v3048 = vmul.f32 %v2964, %v2601
    %v3049 = vmul.f32 %v2965, %v2611
    %v3050 = vmul.f32 %v2966, %v2621
    %v3051 = vmul.f32 %v2967, %v2631
    %v3052 = vmul.f32 %v2968, %v2641
    %v3053 = vmul.f32 %v2969, %v2651
    %v3054 = vmul.f32 %v2970, %v2661
    %v3055 = vmul.f32 %v2971, %v2671
    %v3056 = vmul.f32 %v2972, %v2681
    %v3057 = vmul.f32 %v2973, %v2691
    %v3058 = vmul.f32 %v2974, %v2701
    %v3059 = vmul.f32 %v2975, %v2711
    %v3060 = vmul.f32 %v2976, %v2721
    %v3061 = vmul.f32 %v2977, %v2731
    %v3062 = vmul.f32 %v2978, %v2741
    %v3063 = vmul.f32 %v2979, %v2751
    %v3064 = vmul.f32 %v2980, %v2761
    %v3065 = vmul.f32 %v2981, %v2771
    %v3066 = vmul.f32 %v2982, %v2781
    %v3067 = vmul.f32 %v2983, %v2791
    %v3068 = vmul.f32 %v2984, %v2801
    %v3069 = vmul.f32 %v2985, %v2811
    %v3070 = vmul.f32 %v2986, %v2821
    %v3071 = vmul.f32 %v2987, %v2831
    %v3072 = vmul.f32 %v2988, %v2841
    %v3073 = vmul.f32 %v2989, %v2851
    %v3074 = vmul.f32 %v2990, %v2861
    %v3075 = vmul.f32 %v2991, %v2871
    %v3076 = vmul.f32 %v2992, %v2881
    %v3077 = vmul.f32 %v2993, %v2891
    %v3078 = vmul.f32 %v2994, %v2901
    %v3079 = vmul.f32 %v2995, %v2911
    %v3080 = vld [vmem:[%s4] sm:$0xff]
    %v3081 = vld [vmem:[%s4 + $0x8] sm:$0xff]
    %v3082 = vld [vmem:[%s4 + $0x10] sm:$0xff]
    %v3083 = vld [vmem:[%s4 + $0x18] sm:$0xff]
    %v3084 = vld [vmem:[%s4 + $0x20] sm:$0xff]
    %v3085 = vld [vmem:[%s4 + $0x28] sm:$0xff]
    %v3086 = vld [vmem:[%s4 + $0x30] sm:$0xff]
    %v3087 = vld [vmem:[%s4 + $0x38] sm:$0xff]
    %v3088 = vld [vmem:[%s4 + $0x40] sm:$0xff]
    %v3089 = vld [vmem:[%s4 + $0x48] sm:$0xff]
    %v3090 = vld [vmem:[%s4 + $0x50] sm:$0xff]
    %v3091 = vld [vmem:[%s4 + $0x58] sm:$0xff]
    %v3092 = vld [vmem:[%s4 + $0x60] sm:$0xff]
    %v3093 = vld [vmem:[%s4 + $0x68] sm:$0xff]
    %v3094 = vld [vmem:[%s4 + $0x70] sm:$0xff]
    %v3095 = vld [vmem:[%s4 + $0x78] sm:$0xff]
    %v3096 = vld [vmem:[%s4 + $0x80] sm:$0xff]
    %v3097 = vld [vmem:[%s4 + $0x88] sm:$0xff]
    %v3098 = vld [vmem:[%s4 + $0x90] sm:$0xff]
    %v3099 = vld [vmem:[%s4 + $0x98] sm:$0xff]
    %v3100 = vld [vmem:[%s4 + $0xa0] sm:$0xff]
    %v3101 = vld [vmem:[%s4 + $0xa8] sm:$0xff]
    %v3102 = vld [vmem:[%s4 + $0xb0] sm:$0xff]
    %v3103 = vld [vmem:[%s4 + $0xb8] sm:$0xff]
    %v3104 = vld [vmem:[%s4 + $0xc0] sm:$0xff]
    %v3105 = vld [vmem:[%s4 + $0xc8] sm:$0xff]
    %v3106 = vld [vmem:[%s4 + $0xd0] sm:$0xff]
    %v3107 = vld [vmem:[%s4 + $0xd8] sm:$0xff]
    %v3108 = vld [vmem:[%s4 + $0xe0] sm:$0xff]
    %v3109 = vld [vmem:[%s4 + $0xe8] sm:$0xff]
    %v3110 = vld [vmem:[%s4 + $0xf0] sm:$0xff]
    %v3111 = vld [vmem:[%s4 + $0xf8] sm:$0xff]
    %v3112 = vld [vmem:[%s4 + $0x100] sm:$0xff]
    %v3113 = vld [vmem:[%s4 + $0x108] sm:$0xff]
    %v3114 = vld [vmem:[%s4 + $0x110] sm:$0xff]
    %v3115 = vld [vmem:[%s4 + $0x118] sm:$0xff]
    %v3116 = vld [vmem:[%s4 + $0x120] sm:$0xff]
    %v3117 = vld [vmem:[%s4 + $0x128] sm:$0xff]
    %v3118 = vld [vmem:[%s4 + $0x130] sm:$0xff]
    %v3119 = vld [vmem:[%s4 + $0x138] sm:$0xff]
    %v3120 = vld [vmem:[%s4 + $0x140] sm:$0xff]
    %v3121 = vld [vmem:[%s4 + $0x148] sm:$0xff]
    %v3122 = vld [vmem:[%s4 + $0x150] sm:$0xff]
    %v3123 = vld [vmem:[%s4 + $0x158] sm:$0xff]
    %v3124 = vld [vmem:[%s4 + $0x160] sm:$0xff]
    %v3125 = vld [vmem:[%s4 + $0x168] sm:$0xff]
    %v3126 = vld [vmem:[%s4 + $0x170] sm:$0xff]
    %v3127 = vld [vmem:[%s4 + $0x178] sm:$0xff]
    %v3128 = vld [vmem:[%s4 + $0x180] sm:$0xff]
    %v3129 = vld [vmem:[%s4 + $0x188] sm:$0xff]
    %v3130 = vld [vmem:[%s4 + $0x190] sm:$0xff]
    %v3131 = vld [vmem:[%s4 + $0x198] sm:$0xff]
    %v3132 = vld [vmem:[%s4 + $0x1a0] sm:$0xff]
    %v3133 = vld [vmem:[%s4 + $0x1a8] sm:$0xff]
    %v3134 = vld [vmem:[%s4 + $0x1b0] sm:$0xff]
    %v3135 = vld [vmem:[%s4 + $0x1b8] sm:$0xff]
    %v3136 = vld [vmem:[%s4 + $0x1c0] sm:$0xff]
    %v3137 = vld [vmem:[%s4 + $0x1c8] sm:$0xff]
    %v3138 = vld [vmem:[%s4 + $0x1d0] sm:$0xff]
    %v3139 = vld [vmem:[%s4 + $0x1d8] sm:$0xff]
    %v3140 = vld [vmem:[%s4 + $0x1e0] sm:$0xff]
    %v3141 = vld [vmem:[%s4 + $0x1e8] sm:$0xff]
    %v3142 = vld [vmem:[%s4 + $0x1f0] sm:$0xff]
    %v3143 = vld [vmem:[%s4 + $0x1f8] sm:$0xff]
    %v3144 = vld [vmem:[%s4 + $0x200] sm:$0xff]
    %v3145 = vld [vmem:[%s4 + $0x208] sm:$0xff]
    %v3146 = vld [vmem:[%s4 + $0x210] sm:$0xff]
    %v3147 = vld [vmem:[%s4 + $0x218] sm:$0xff]
    %v3148 = vld [vmem:[%s4 + $0x220] sm:$0xff]
    %v3149 = vld [vmem:[%s4 + $0x228] sm:$0xff]
    %v3150 = vld [vmem:[%s4 + $0x230] sm:$0xff]
    %v3151 = vld [vmem:[%s4 + $0x238] sm:$0xff]
    %v3152 = vld [vmem:[%s4 + $0x240] sm:$0xff]
    %v3153 = vld [vmem:[%s4 + $0x248] sm:$0xff]
    %v3154 = vld [vmem:[%s4 + $0x250] sm:$0xff]
    %v3155 = vld [vmem:[%s4 + $0x258] sm:$0xff]
    %v3156 = vld [vmem:[%s4 + $0x260] sm:$0xff]
    %v3157 = vld [vmem:[%s4 + $0x268] sm:$0xff]
    %v3158 = vld [vmem:[%s4 + $0x270] sm:$0xff]
    %v3159 = vld [vmem:[%s4 + $0x278] sm:$0xff]
    %v3160 = vld [vmem:[%s4 + $0x280] sm:$0xff]
    %v3161 = vld [vmem:[%s4 + $0x288] sm:$0xff]
    %v3162 = vld [vmem:[%s4 + $0x290] sm:$0xff]
    %v3163 = vld [vmem:[%s4 + $0x298] sm:$0xff]
    %v3164 = vmul.f32 %v1652, %v2996
    %v3165 = vmul.f32 %v1653, %v2997
    %v3166 = vmul.f32 %v1654, %v2998
    %v3167 = vmul.f32 %v1655, %v2999
    %v3168 = vmul.f32 %v1656, %v3000
    %v3169 = vmul.f32 %v1657, %v3001
    %v3170 = vmul.f32 %v1658, %v3002
    %v3171 = vmul.f32 %v1659, %v3003
    %v3172 = vmul.f32 %v1660, %v3004
    %v3173 = vmul.f32 %v1661, %v3005
    %v3174 = vmul.f32 %v1662, %v3006
    %v3175 = vmul.f32 %v1663, %v3007
    %v3176 = vmul.f32 %v1664, %v3008
    %v3177 = vmul.f32 %v1665, %v3009
    %v3178 = vmul.f32 %v1666, %v3010
    %v3179 = vmul.f32 %v1667, %v3011
    %v3180 = vmul.f32 %v1668, %v3012
    %v3181 = vmul.f32 %v1669, %v3013
    %v3182 = vmul.f32 %v1670, %v3014
    %v3183 = vmul.f32 %v1671, %v3015
    %v3184 = vmul.f32 %v1672, %v3016
    %v3185 = vmul.f32 %v1673, %v3017
    %v3186 = vmul.f32 %v1674, %v3018
    %v3187 = vmul.f32 %v1675, %v3019
    %v3188 = vmul.f32 %v1676, %v3020
    %v3189 = vmul.f32 %v1677, %v3021
    %v3190 = vmul.f32 %v1678, %v3022
    %v3191 = vmul.f32 %v1679, %v3023
    %v3192 = vmul.f32 %v1680, %v3024
    %v3193 = vmul.f32 %v1681, %v3025
    %v3194 = vmul.f32 %v1682, %v3026
    %v3195 = vmul.f32 %v1683, %v3027
    %v3196 = vmul.f32 %v1684, %v3028
    %v3197 = vmul.f32 %v1685, %v3029
    %v3198 = vmul.f32 %v1686, %v3030
    %v3199 = vmul.f32 %v1687, %v3031
    %v3200 = vmul.f32 %v1688, %v3032
    %v3201 = vmul.f32 %v1689, %v3033
    %v3202 = vmul.f32 %v1690, %v3034
    %v3203 = vmul.f32 %v1691, %v3035
    %v3204 = vmul.f32 %v1692, %v3036
    %v3205 = vmul.f32 %v1693, %v3037
    %v3206 = vmul.f32 %v1694, %v3038
    %v3207 = vmul.f32 %v1695, %v3039
    %v3208 = vmul.f32 %v1696, %v3040
    %v3209 = vmul.f32 %v1697, %v3041
    %v3210 = vmul.f32 %v1698, %v3042
    %v3211 = vmul.f32 %v1699, %v3043
    %v3212 = vmul.f32 %v1700, %v3044
    %v3213 = vmul.f32 %v1701, %v3045
    %v3214 = vmul.f32 %v1702, %v3046
    %v3215 = vmul.f32 %v1703, %v3047
    %v3216 = vmul.f32 %v1704, %v3048
    %v3217 = vmul.f32 %v1705, %v3049
    %v3218 = vmul.f32 %v1706, %v3050
    %v3219 = vmul.f32 %v1707, %v3051
    %v3220 = vmul.f32 %v1708, %v3052
    %v3221 = vmul.f32 %v1709, %v3053
    %v3222 = vmul.f32 %v1710, %v3054
    %v3223 = vmul.f32 %v1711, %v3055
    %v3224 = vmul.f32 %v1712, %v3056
    %v3225 = vmul.f32 %v1713, %v3057
    %v3226 = vmul.f32 %v1714, %v3058
    %v3227 = vmul.f32 %v1715, %v3059
    %v3228 = vmul.f32 %v1716, %v3060
    %v3229 = vmul.f32 %v1717, %v3061
    %v3230 = vmul.f32 %v1718, %v3062
    %v3231 = vmul.f32 %v1719, %v3063
    %v3232 = vmul.f32 %v1720, %v3064
    %v3233 = vmul.f32 %v1721, %v3065
    %v3234 = vmul.f32 %v1722, %v3066
    %v3235 = vmul.f32 %v1723, %v3067
    %v3236 = vmul.f32 %v1724, %v3068
    %v3237 = vmul.f32 %v1725, %v3069
    %v3238 = vmul.f32 %v1726, %v3070
    %v3239 = vmul.f32 %v1727, %v3071
    %v3240 = vmul.f32 %v1728, %v3072
    %v3241 = vmul.f32 %v1729, %v3073
    %v3242 = vmul.f32 %v1730, %v3074
    %v3243 = vmul.f32 %v1731, %v3075
    %v3244 = vmul.f32 %v1732, %v3076
    %v3245 = vmul.f32 %v1733, %v3077
    %v3246 = vmul.f32 %v1734, %v3078
    %v3247 = vmul.f32 %v1735, %v3079
    %v3248 = vsub.f32 %v3080, %v3164
    %v3249 = vsub.f32 %v3081, %v3165
    %v3250 = vsub.f32 %v3082, %v3166
    %v3251 = vsub.f32 %v3083, %v3167
    %v3252 = vsub.f32 %v3084, %v3168
    %v3253 = vsub.f32 %v3085, %v3169
    %v3254 = vsub.f32 %v3086, %v3170
    %v3255 = vsub.f32 %v3087, %v3171
    %v3256 = vsub.f32 %v3088, %v3172
    %v3257 = vsub.f32 %v3089, %v3173
    %v3258 = vsub.f32 %v3090, %v3174
    %v3259 = vsub.f32 %v3091, %v3175
    %v3260 = vsub.f32 %v3092, %v3176
    %v3261 = vsub.f32 %v3093, %v3177
    %v3262 = vsub.f32 %v3094, %v3178
    %v3263 = vsub.f32 %v3095, %v3179
    %v3264 = vsub.f32 %v3096, %v3180
    %v3265 = vsub.f32 %v3097, %v3181
    %v3266 = vsub.f32 %v3098, %v3182
    %v3267 = vsub.f32 %v3099, %v3183
    %v3268 = vsub.f32 %v3100, %v3184
    %v3269 = vsub.f32 %v3101, %v3185
    %v3270 = vsub.f32 %v3102, %v3186
    %v3271 = vsub.f32 %v3103, %v3187
    %v3272 = vsub.f32 %v3104, %v3188
    %v3273 = vsub.f32 %v3105, %v3189
    %v3274 = vsub.f32 %v3106, %v3190
    %v3275 = vsub.f32 %v3107, %v3191
    %v3276 = vsub.f32 %v3108, %v3192
    %v3277 = vsub.f32 %v3109, %v3193
    %v3278 = vsub.f32 %v3110, %v3194
    %v3279 = vsub.f32 %v3111, %v3195
    %v3280 = vsub.f32 %v3112, %v3196
    %v3281 = vsub.f32 %v3113, %v3197
    %v3282 = vsub.f32 %v3114, %v3198
    %v3283 = vsub.f32 %v3115, %v3199
    %v3284 = vsub.f32 %v3116, %v3200
    %v3285 = vsub.f32 %v3117, %v3201
    %v3286 = vsub.f32 %v3118, %v3202
    %v3287 = vsub.f32 %v3119, %v3203
    %v3288 = vsub.f32 %v3120, %v3204
    %v3289 = vsub.f32 %v3121, %v3205
    %v3290 = vsub.f32 %v3122, %v3206
    %v3291 = vsub.f32 %v3123, %v3207
    %v3292 = vsub.f32 %v3124, %v3208
    %v3293 = vsub.f32 %v3125, %v3209
    %v3294 = vsub.f32 %v3126, %v3210
    %v3295 = vsub.f32 %v3127, %v3211
    %v3296 = vsub.f32 %v3128, %v3212
    %v3297 = vsub.f32 %v3129, %v3213
    %v3298 = vsub.f32 %v3130, %v3214
    %v3299 = vsub.f32 %v3131, %v3215
    %v3300 = vsub.f32 %v3132, %v3216
    %v3301 = vsub.f32 %v3133, %v3217
    %v3302 = vsub.f32 %v3134, %v3218
    %v3303 = vsub.f32 %v3135, %v3219
    %v3304 = vsub.f32 %v3136, %v3220
    %v3305 = vsub.f32 %v3137, %v3221
    %v3306 = vsub.f32 %v3138, %v3222
    %v3307 = vsub.f32 %v3139, %v3223
    %v3308 = vsub.f32 %v3140, %v3224
    %v3309 = vsub.f32 %v3141, %v3225
    %v3310 = vsub.f32 %v3142, %v3226
    %v3311 = vsub.f32 %v3143, %v3227
    %v3312 = vsub.f32 %v3144, %v3228
    %v3313 = vsub.f32 %v3145, %v3229
    %v3314 = vsub.f32 %v3146, %v3230
    %v3315 = vsub.f32 %v3147, %v3231
    %v3316 = vsub.f32 %v3148, %v3232
    %v3317 = vsub.f32 %v3149, %v3233
    %v3318 = vsub.f32 %v3150, %v3234
    %v3319 = vsub.f32 %v3151, %v3235
    %v3320 = vsub.f32 %v3152, %v3236
    %v3321 = vsub.f32 %v3153, %v3237
    %v3322 = vsub.f32 %v3154, %v3238
    %v3323 = vsub.f32 %v3155, %v3239
    %v3324 = vsub.f32 %v3156, %v3240
    %v3325 = vsub.f32 %v3157, %v3241
    %v3326 = vsub.f32 %v3158, %v3242
    %v3327 = vsub.f32 %v3159, %v3243
    %v3328 = vsub.f32 %v3160, %v3244
    %v3329 = vsub.f32 %v3161, %v3245
    %v3330 = vsub.f32 %v3162, %v3246
    %v3331 = vsub.f32 %v3163, %v3247
    %3333 = vset.pattern.permute.xlu0 0
    %3334 = vperm.xlu0 %3333, %v2996
    %v3335 = vpop.permute.xlu0 %3334
    %3338 = vset.pattern.permute.xlu0 0
    %3339 = vperm.xlu0 %3338, %v2997
    %v3340 = vpop.permute.xlu0 %3339
    %3343 = vset.pattern.permute.xlu0 0
    %3344 = vperm.xlu0 %3343, %v2998
    %v3345 = vpop.permute.xlu0 %3344
    %3348 = vset.pattern.permute.xlu0 0
    %3349 = vperm.xlu0 %3348, %v2999
    %v3350 = vpop.permute.xlu0 %3349
    %3353 = vset.pattern.permute.xlu0 0
    %3354 = vperm.xlu0 %3353, %v3000
    %v3355 = vpop.permute.xlu0 %3354
    %3358 = vset.pattern.permute.xlu0 0
    %3359 = vperm.xlu0 %3358, %v3001
    %v3360 = vpop.permute.xlu0 %3359
    %3363 = vset.pattern.permute.xlu0 0
    %3364 = vperm.xlu0 %3363, %v3002
    %v3365 = vpop.permute.xlu0 %3364
    %3368 = vset.pattern.permute.xlu0 0
    %3369 = vperm.xlu0 %3368, %v3003
    %v3370 = vpop.permute.xlu0 %3369
    %3373 = vset.pattern.permute.xlu0 0
    %3374 = vperm.xlu0 %3373, %v3004
    %v3375 = vpop.permute.xlu0 %3374
    %3378 = vset.pattern.permute.xlu0 0
    %3379 = vperm.xlu0 %3378, %v3005
    %v3380 = vpop.permute.xlu0 %3379
    %3383 = vset.pattern.permute.xlu0 0
    %3384 = vperm.xlu0 %3383, %v3006
    %v3385 = vpop.permute.xlu0 %3384
    %3388 = vset.pattern.permute.xlu0 0
    %3389 = vperm.xlu0 %3388, %v3007
    %v3390 = vpop.permute.xlu0 %3389
    %3393 = vset.pattern.permute.xlu0 0
    %3394 = vperm.xlu0 %3393, %v3008
    %v3395 = vpop.permute.xlu0 %3394
    %3398 = vset.pattern.permute.xlu0 0
    %3399 = vperm.xlu0 %3398, %v3009
    %v3400 = vpop.permute.xlu0 %3399
    %3403 = vset.pattern.permute.xlu0 0
    %3404 = vperm.xlu0 %3403, %v3010
    %v3405 = vpop.permute.xlu0 %3404
    %3408 = vset.pattern.permute.xlu0 0
    %3409 = vperm.xlu0 %3408, %v3011
    %v3410 = vpop.permute.xlu0 %3409
    %3413 = vset.pattern.permute.xlu0 0
    %3414 = vperm.xlu0 %3413, %v3012
    %v3415 = vpop.permute.xlu0 %3414
    %3418 = vset.pattern.permute.xlu0 0
    %3419 = vperm.xlu0 %3418, %v3013
    %v3420 = vpop.permute.xlu0 %3419
    %3423 = vset.pattern.permute.xlu0 0
    %3424 = vperm.xlu0 %3423, %v3014
    %v3425 = vpop.permute.xlu0 %3424
    %3428 = vset.pattern.permute.xlu0 0
    %3429 = vperm.xlu0 %3428, %v3015
    %v3430 = vpop.permute.xlu0 %3429
    %3433 = vset.pattern.permute.xlu0 0
    %3434 = vperm.xlu0 %3433, %v3016
    %v3435 = vpop.permute.xlu0 %3434
    %3438 = vset.pattern.permute.xlu0 0
    %3439 = vperm.xlu0 %3438, %v3017
    %v3440 = vpop.permute.xlu0 %3439
    %3443 = vset.pattern.permute.xlu0 0
    %3444 = vperm.xlu0 %3443, %v3018
    %v3445 = vpop.permute.xlu0 %3444
    %3448 = vset.pattern.permute.xlu0 0
    %3449 = vperm.xlu0 %3448, %v3019
    %v3450 = vpop.permute.xlu0 %3449
    %3453 = vset.pattern.permute.xlu0 0
    %3454 = vperm.xlu0 %3453, %v3020
    %v3455 = vpop.permute.xlu0 %3454
    %3458 = vset.pattern.permute.xlu0 0
    %3459 = vperm.xlu0 %3458, %v3021
    %v3460 = vpop.permute.xlu0 %3459
    %3463 = vset.pattern.permute.xlu0 0
    %3464 = vperm.xlu0 %3463, %v3022
    %v3465 = vpop.permute.xlu0 %3464
    %3468 = vset.pattern.permute.xlu0 0
    %3469 = vperm.xlu0 %3468, %v3023
    %v3470 = vpop.permute.xlu0 %3469
    %3473 = vset.pattern.permute.xlu0 0
    %3474 = vperm.xlu0 %3473, %v3024
    %v3475 = vpop.permute.xlu0 %3474
    %3478 = vset.pattern.permute.xlu0 0
    %3479 = vperm.xlu0 %3478, %v3025
    %v3480 = vpop.permute.xlu0 %3479
    %3483 = vset.pattern.permute.xlu0 0
    %3484 = vperm.xlu0 %3483, %v3026
    %v3485 = vpop.permute.xlu0 %3484
    %3488 = vset.pattern.permute.xlu0 0
    %3489 = vperm.xlu0 %3488, %v3027
    %v3490 = vpop.permute.xlu0 %3489
    %3493 = vset.pattern.permute.xlu0 0
    %3494 = vperm.xlu0 %3493, %v3028
    %v3495 = vpop.permute.xlu0 %3494
    %3498 = vset.pattern.permute.xlu0 0
    %3499 = vperm.xlu0 %3498, %v3029
    %v3500 = vpop.permute.xlu0 %3499
    %3503 = vset.pattern.permute.xlu0 0
    %3504 = vperm.xlu0 %3503, %v3030
    %v3505 = vpop.permute.xlu0 %3504
    %3508 = vset.pattern.permute.xlu0 0
    %3509 = vperm.xlu0 %3508, %v3031
    %v3510 = vpop.permute.xlu0 %3509
    %3513 = vset.pattern.permute.xlu0 0
    %3514 = vperm.xlu0 %3513, %v3032
    %v3515 = vpop.permute.xlu0 %3514
    %3518 = vset.pattern.permute.xlu0 0
    %3519 = vperm.xlu0 %3518, %v3033
    %v3520 = vpop.permute.xlu0 %3519
    %3523 = vset.pattern.permute.xlu0 0
    %3524 = vperm.xlu0 %3523, %v3034
    %v3525 = vpop.permute.xlu0 %3524
    %3528 = vset.pattern.permute.xlu0 0
    %3529 = vperm.xlu0 %3528, %v3035
    %v3530 = vpop.permute.xlu0 %3529
    %3533 = vset.pattern.permute.xlu0 0
    %3534 = vperm.xlu0 %3533, %v3036
    %v3535 = vpop.permute.xlu0 %3534
    %3538 = vset.pattern.permute.xlu0 0
    %3539 = vperm.xlu0 %3538, %v3037
    %v3540 = vpop.permute.xlu0 %3539
    %3543 = vset.pattern.permute.xlu0 0
    %3544 = vperm.xlu0 %3543, %v3038
    %v3545 = vpop.permute.xlu0 %3544
    %3548 = vset.pattern.permute.xlu0 0
    %3549 = vperm.xlu0 %3548, %v3039
    %v3550 = vpop.permute.xlu0 %3549
    %3553 = vset.pattern.permute.xlu0 0
    %3554 = vperm.xlu0 %3553, %v3040
    %v3555 = vpop.permute.xlu0 %3554
    %3558 = vset.pattern.permute.xlu0 0
    %3559 = vperm.xlu0 %3558, %v3041
    %v3560 = vpop.permute.xlu0 %3559
    %3563 = vset.pattern.permute.xlu0 0
    %3564 = vperm.xlu0 %3563, %v3042
    %v3565 = vpop.permute.xlu0 %3564
    %3568 = vset.pattern.permute.xlu0 0
    %3569 = vperm.xlu0 %3568, %v3043
    %v3570 = vpop.permute.xlu0 %3569
    %3573 = vset.pattern.permute.xlu0 0
    %3574 = vperm.xlu0 %3573, %v3044
    %v3575 = vpop.permute.xlu0 %3574
    %3578 = vset.pattern.permute.xlu0 0
    %3579 = vperm.xlu0 %3578, %v3045
    %v3580 = vpop.permute.xlu0 %3579
    %3583 = vset.pattern.permute.xlu0 0
    %3584 = vperm.xlu0 %3583, %v3046
    %v3585 = vpop.permute.xlu0 %3584
    %3588 = vset.pattern.permute.xlu0 0
    %3589 = vperm.xlu0 %3588, %v3047
    %v3590 = vpop.permute.xlu0 %3589
    %3593 = vset.pattern.permute.xlu0 0
    %3594 = vperm.xlu0 %3593, %v3048
    %v3595 = vpop.permute.xlu0 %3594
    %3598 = vset.pattern.permute.xlu0 0
    %3599 = vperm.xlu0 %3598, %v3049
    %v3600 = vpop.permute.xlu0 %3599
    %3603 = vset.pattern.permute.xlu0 0
    %3604 = vperm.xlu0 %3603, %v3050
    %v3605 = vpop.permute.xlu0 %3604
    %3608 = vset.pattern.permute.xlu0 0
    %3609 = vperm.xlu0 %3608, %v3051
    %v3610 = vpop.permute.xlu0 %3609
    %3613 = vset.pattern.permute.xlu0 0
    %3614 = vperm.xlu0 %3613, %v3052
    %v3615 = vpop.permute.xlu0 %3614
    %3618 = vset.pattern.permute.xlu0 0
    %3619 = vperm.xlu0 %3618, %v3053
    %v3620 = vpop.permute.xlu0 %3619
    %3623 = vset.pattern.permute.xlu0 0
    %3624 = vperm.xlu0 %3623, %v3054
    %v3625 = vpop.permute.xlu0 %3624
    %3628 = vset.pattern.permute.xlu0 0
    %3629 = vperm.xlu0 %3628, %v3055
    %v3630 = vpop.permute.xlu0 %3629
    %3633 = vset.pattern.permute.xlu0 0
    %3634 = vperm.xlu0 %3633, %v3056
    %v3635 = vpop.permute.xlu0 %3634
    %3638 = vset.pattern.permute.xlu0 0
    %3639 = vperm.xlu0 %3638, %v3057
    %v3640 = vpop.permute.xlu0 %3639
    %3643 = vset.pattern.permute.xlu0 0
    %3644 = vperm.xlu0 %3643, %v3058
    %v3645 = vpop.permute.xlu0 %3644
    %3648 = vset.pattern.permute.xlu0 0
    %3649 = vperm.xlu0 %3648, %v3059
    %v3650 = vpop.permute.xlu0 %3649
    %3653 = vset.pattern.permute.xlu0 0
    %3654 = vperm.xlu0 %3653, %v3060
    %v3655 = vpop.permute.xlu0 %3654
    %3658 = vset.pattern.permute.xlu0 0
    %3659 = vperm.xlu0 %3658, %v3061
    %v3660 = vpop.permute.xlu0 %3659
    %3663 = vset.pattern.permute.xlu0 0
    %3664 = vperm.xlu0 %3663, %v3062
    %v3665 = vpop.permute.xlu0 %3664
    %3668 = vset.pattern.permute.xlu0 0
    %3669 = vperm.xlu0 %3668, %v3063
    %v3670 = vpop.permute.xlu0 %3669
    %3673 = vset.pattern.permute.xlu0 0
    %3674 = vperm.xlu0 %3673, %v3064
    %v3675 = vpop.permute.xlu0 %3674
    %3678 = vset.pattern.permute.xlu0 0
    %3679 = vperm.xlu0 %3678, %v3065
    %v3680 = vpop.permute.xlu0 %3679
    %3683 = vset.pattern.permute.xlu0 0
    %3684 = vperm.xlu0 %3683, %v3066
    %v3685 = vpop.permute.xlu0 %3684
    %3688 = vset.pattern.permute.xlu0 0
    %3689 = vperm.xlu0 %3688, %v3067
    %v3690 = vpop.permute.xlu0 %3689
    %3693 = vset.pattern.permute.xlu0 0
    %3694 = vperm.xlu0 %3693, %v3068
    %v3695 = vpop.permute.xlu0 %3694
    %3698 = vset.pattern.permute.xlu0 0
    %3699 = vperm.xlu0 %3698, %v3069
    %v3700 = vpop.permute.xlu0 %3699
    %3703 = vset.pattern.permute.xlu0 0
    %3704 = vperm.xlu0 %3703, %v3070
    %v3705 = vpop.permute.xlu0 %3704
    %3708 = vset.pattern.permute.xlu0 0
    %3709 = vperm.xlu0 %3708, %v3071
    %v3710 = vpop.permute.xlu0 %3709
    %3713 = vset.pattern.permute.xlu0 0
    %3714 = vperm.xlu0 %3713, %v3072
    %v3715 = vpop.permute.xlu0 %3714
    %3718 = vset.pattern.permute.xlu0 0
    %3719 = vperm.xlu0 %3718, %v3073
    %v3720 = vpop.permute.xlu0 %3719
    %3723 = vset.pattern.permute.xlu0 0
    %3724 = vperm.xlu0 %3723, %v3074
    %v3725 = vpop.permute.xlu0 %3724
    %3728 = vset.pattern.permute.xlu0 0
    %3729 = vperm.xlu0 %3728, %v3075
    %v3730 = vpop.permute.xlu0 %3729
    %3733 = vset.pattern.permute.xlu0 0
    %3734 = vperm.xlu0 %3733, %v3076
    %v3735 = vpop.permute.xlu0 %3734
    %3738 = vset.pattern.permute.xlu0 0
    %3739 = vperm.xlu0 %3738, %v3077
    %v3740 = vpop.permute.xlu0 %3739
    %3743 = vset.pattern.permute.xlu0 0
    %3744 = vperm.xlu0 %3743, %v3078
    %v3745 = vpop.permute.xlu0 %3744
    %3748 = vset.pattern.permute.xlu0 0
    %3749 = vperm.xlu0 %3748, %v3079
    %v3750 = vpop.permute.xlu0 %3749
    %v3752 = vmul.f32 %v460, %v3335
    %v3753 = vmul.f32 %v729, %v3335
    %v3754 = vmul.f32 %v463, %v3340
    %v3755 = vmul.f32 %v732, %v3340
    %v3756 = vmul.f32 %v466, %v3345
    %v3757 = vmul.f32 %v735, %v3345
    %v3758 = vmul.f32 %v469, %v3350
    %v3759 = vmul.f32 %v738, %v3350
    %v3760 = vmul.f32 %v472, %v3355
    %v3761 = vmul.f32 %v741, %v3355
    %v3762 = vmul.f32 %v475, %v3360
    %v3763 = vmul.f32 %v744, %v3360
    %v3764 = vmul.f32 %v478, %v3365
    %v3765 = vmul.f32 %v747, %v3365
    %v3766 = vmul.f32 %v481, %v3370
    %v3767 = vmul.f32 %v750, %v3370
    %v3768 = vmul.f32 %v484, %v3375
    %v3769 = vmul.f32 %v753, %v3375
    %v3770 = vmul.f32 %v487, %v3380
    %v3771 = vmul.f32 %v756, %v3380
    %v3772 = vmul.f32 %v490, %v3385
    %v3773 = vmul.f32 %v759, %v3385
    %v3774 = vmul.f32 %v493, %v3390
    %v3775 = vmul.f32 %v762, %v3390
    %v3776 = vmul.f32 %v496, %v3395
    %v3777 = vmul.f32 %v765, %v3395
    %v3778 = vmul.f32 %v499, %v3400
    %v3779 = vmul.f32 %v768, %v3400
    %v3780 = vmul.f32 %v502, %v3405
    %v3781 = vmul.f32 %v771, %v3405
    %v3782 = vmul.f32 %v505, %v3410
    %v3783 = vmul.f32 %v774, %v3410
    %v3784 = vmul.f32 %v508, %v3415
    %v3785 = vmul.f32 %v777, %v3415
    %v3786 = vmul.f32 %v511, %v3420
    %v3787 = vmul.f32 %v780, %v3420
    %v3788 = vmul.f32 %v514, %v3425
    %v3789 = vmul.f32 %v783, %v3425
    %v3790 = vmul.f32 %v517, %v3430
    %v3791 = vmul.f32 %v786, %v3430
    %v3792 = vmul.f32 %v520, %v3435
    %v3793 = vmul.f32 %v789, %v3435
    %v3794 = vmul.f32 %v523, %v3440
    %v3795 = vmul.f32 %v792, %v3440
    %v3796 = vmul.f32 %v526, %v3445
    %v3797 = vmul.f32 %v795, %v3445
    %v3798 = vmul.f32 %v529, %v3450
    %v3799 = vmul.f32 %v798, %v3450
    %v3800 = vmul.f32 %v532, %v3455
    %v3801 = vmul.f32 %v801, %v3455
    %v3802 = vmul.f32 %v535, %v3460
    %v3803 = vmul.f32 %v804, %v3460
    %v3804 = vmul.f32 %v538, %v3465
    %v3805 = vmul.f32 %v807, %v3465
    %v3806 = vmul.f32 %v541, %v3470
    %v3807 = vmul.f32 %v810, %v3470
    %v3808 = vmul.f32 %v544, %v3475
    %v3809 = vmul.f32 %v813, %v3475
    %v3810 = vmul.f32 %v547, %v3480
    %v3811 = vmul.f32 %v816, %v3480
    %v3812 = vmul.f32 %v550, %v3485
    %v3813 = vmul.f32 %v819, %v3485
    %v3814 = vmul.f32 %v553, %v3490
    %v3815 = vmul.f32 %v822, %v3490
    %v3816 = vmul.f32 %v556, %v3495
    %v3817 = vmul.f32 %v825, %v3495
    %v3818 = vmul.f32 %v559, %v3500
    %v3819 = vmul.f32 %v828, %v3500
    %v3820 = vmul.f32 %v562, %v3505
    %v3821 = vmul.f32 %v831, %v3505
    %v3822 = vmul.f32 %v565, %v3510
    %v3823 = vmul.f32 %v834, %v3510
    %v3824 = vmul.f32 %v568, %v3515
    %v3825 = vmul.f32 %v837, %v3515
    %v3826 = vmul.f32 %v571, %v3520
    %v3827 = vmul.f32 %v840, %v3520
    %v3828 = vmul.f32 %v574, %v3525
    %v3829 = vmul.f32 %v843, %v3525
    %v3830 = vmul.f32 %v577, %v3530
    %v3831 = vmul.f32 %v846, %v3530
    %v3832 = vmul.f32 %v580, %v3535
    %v3833 = vmul.f32 %v849, %v3535
    %v3834 = vmul.f32 %v583, %v3540
    %v3835 = vmul.f32 %v852, %v3540
    %v3836 = vmul.f32 %v586, %v3545
    %v3837 = vmul.f32 %v855, %v3545
    %v3838 = vmul.f32 %v589, %v3550
    %v3839 = vmul.f32 %v858, %v3550
    %v3840 = vmul.f32 %v592, %v3555
    %v3841 = vmul.f32 %v861, %v3555
    %v3842 = vmul.f32 %v595, %v3560
    %v3843 = vmul.f32 %v864, %v3560
    %v3844 = vmul.f32 %v598, %v3565
    %v3845 = vmul.f32 %v867, %v3565
    %v3846 = vmul.f32 %v601, %v3570
    %v3847 = vmul.f32 %v870, %v3570
    %v3848 = vmul.f32 %v604, %v3575
    %v3849 = vmul.f32 %v873, %v3575
    %v3850 = vmul.f32 %v607, %v3580
    %v3851 = vmul.f32 %v876, %v3580
    %v3852 = vmul.f32 %v610, %v3585
    %v3853 = vmul.f32 %v879, %v3585
    %v3854 = vmul.f32 %v613, %v3590
    %v3855 = vmul.f32 %v882, %v3590
    %v3856 = vmul.f32 %v616, %v3595
    %v3857 = vmul.f32 %v885, %v3595
    %v3858 = vmul.f32 %v619, %v3600
    %v3859 = vmul.f32 %v888, %v3600
    %v3860 = vmul.f32 %v622, %v3605
    %v3861 = vmul.f32 %v891, %v3605
    %v3862 = vmul.f32 %v625, %v3610
    %v3863 = vmul.f32 %v894, %v3610
    %v3864 = vmul.f32 %v628, %v3615
    %v3865 = vmul.f32 %v897, %v3615
    %v3866 = vmul.f32 %v631, %v3620
    %v3867 = vmul.f32 %v900, %v3620
    %v3868 = vmul.f32 %v634, %v3625
    %v3869 = vmul.f32 %v903, %v3625
    %v3870 = vmul.f32 %v637, %v3630
    %v3871 = vmul.f32 %v906, %v3630
    %v3872 = vmul.f32 %v640, %v3635
    %v3873 = vmul.f32 %v909, %v3635
    %v3874 = vmul.f32 %v643, %v3640
    %v3875 = vmul.f32 %v912, %v3640
    %v3876 = vmul.f32 %v646, %v3645
    %v3877 = vmul.f32 %v915, %v3645
    %v3878 = vmul.f32 %v649, %v3650
    %v3879 = vmul.f32 %v918, %v3650
    %v3880 = vmul.f32 %v652, %v3655
    %v3881 = vmul.f32 %v921, %v3655
    %v3882 = vmul.f32 %v655, %v3660
    %v3883 = vmul.f32 %v924, %v3660
    %v3884 = vmul.f32 %v658, %v3665
    %v3885 = vmul.f32 %v927, %v3665
    %v3886 = vmul.f32 %v661, %v3670
    %v3887 = vmul.f32 %v930, %v3670
    %v3888 = vmul.f32 %v664, %v3675
    %v3889 = vmul.f32 %v933, %v3675
    %v3890 = vmul.f32 %v667, %v3680
    %v3891 = vmul.f32 %v936, %v3680
    %v3892 = vmul.f32 %v670, %v3685
    %v3893 = vmul.f32 %v939, %v3685
    %v3894 = vmul.f32 %v673, %v3690
    %v3895 = vmul.f32 %v942, %v3690
    %v3896 = vmul.f32 %v676, %v3695
    %v3897 = vmul.f32 %v945, %v3695
    %v3898 = vmul.f32 %v679, %v3700
    %v3899 = vmul.f32 %v948, %v3700
    %v3900 = vmul.f32 %v682, %v3705
    %v3901 = vmul.f32 %v951, %v3705
    %v3902 = vmul.f32 %v685, %v3710
    %v3903 = vmul.f32 %v954, %v3710
    %v3904 = vmul.f32 %v688, %v3715
    %v3905 = vmul.f32 %v957, %v3715
    %v3906 = vmul.f32 %v691, %v3720
    %v3907 = vmul.f32 %v960, %v3720
    %v3908 = vmul.f32 %v694, %v3725
    %v3909 = vmul.f32 %v963, %v3725
    %v3910 = vmul.f32 %v697, %v3730
    %v3911 = vmul.f32 %v966, %v3730
    %v3912 = vmul.f32 %v700, %v3735
    %v3913 = vmul.f32 %v969, %v3735
    %v3914 = vmul.f32 %v703, %v3740
    %v3915 = vmul.f32 %v972, %v3740
    %v3916 = vmul.f32 %v706, %v3745
    %v3917 = vmul.f32 %v975, %v3745
    %v3918 = vmul.f32 %v709, %v3750
    %v3919 = vmul.f32 %v978, %v3750
    %3921 = vset.pattern.permute.xlu0 0
    %3922 = vperm.xlu0 %3921, %v3248
    %v3923 = vpop.permute.xlu0 %3922
    %3926 = vset.pattern.permute.xlu0 0
    %3927 = vperm.xlu0 %3926, %v3249
    %v3928 = vpop.permute.xlu0 %3927
    %3931 = vset.pattern.permute.xlu0 0
    %3932 = vperm.xlu0 %3931, %v3250
    %v3933 = vpop.permute.xlu0 %3932
    %3936 = vset.pattern.permute.xlu0 0
    %3937 = vperm.xlu0 %3936, %v3251
    %v3938 = vpop.permute.xlu0 %3937
    %3941 = vset.pattern.permute.xlu0 0
    %3942 = vperm.xlu0 %3941, %v3252
    %v3943 = vpop.permute.xlu0 %3942
    %3946 = vset.pattern.permute.xlu0 0
    %3947 = vperm.xlu0 %3946, %v3253
    %v3948 = vpop.permute.xlu0 %3947
    %3951 = vset.pattern.permute.xlu0 0
    %3952 = vperm.xlu0 %3951, %v3254
    %v3953 = vpop.permute.xlu0 %3952
    %3956 = vset.pattern.permute.xlu0 0
    %3957 = vperm.xlu0 %3956, %v3255
    %v3958 = vpop.permute.xlu0 %3957
    %3961 = vset.pattern.permute.xlu0 0
    %3962 = vperm.xlu0 %3961, %v3256
    %v3963 = vpop.permute.xlu0 %3962
    %3966 = vset.pattern.permute.xlu0 0
    %3967 = vperm.xlu0 %3966, %v3257
    %v3968 = vpop.permute.xlu0 %3967
    %3971 = vset.pattern.permute.xlu0 0
    %3972 = vperm.xlu0 %3971, %v3258
    %v3973 = vpop.permute.xlu0 %3972
    %3976 = vset.pattern.permute.xlu0 0
    %3977 = vperm.xlu0 %3976, %v3259
    %v3978 = vpop.permute.xlu0 %3977
    %3981 = vset.pattern.permute.xlu0 0
    %3982 = vperm.xlu0 %3981, %v3260
    %v3983 = vpop.permute.xlu0 %3982
    %3986 = vset.pattern.permute.xlu0 0
    %3987 = vperm.xlu0 %3986, %v3261
    %v3988 = vpop.permute.xlu0 %3987
    %3991 = vset.pattern.permute.xlu0 0
    %3992 = vperm.xlu0 %3991, %v3262
    %v3993 = vpop.permute.xlu0 %3992
    %3996 = vset.pattern.permute.xlu0 0
    %3997 = vperm.xlu0 %3996, %v3263
    %v3998 = vpop.permute.xlu0 %3997
    %4001 = vset.pattern.permute.xlu0 0
    %4002 = vperm.xlu0 %4001, %v3264
    %v4003 = vpop.permute.xlu0 %4002
    %4006 = vset.pattern.permute.xlu0 0
    %4007 = vperm.xlu0 %4006, %v3265
    %v4008 = vpop.permute.xlu0 %4007
    %4011 = vset.pattern.permute.xlu0 0
    %4012 = vperm.xlu0 %4011, %v3266
    %v4013 = vpop.permute.xlu0 %4012
    %4016 = vset.pattern.permute.xlu0 0
    %4017 = vperm.xlu0 %4016, %v3267
    %v4018 = vpop.permute.xlu0 %4017
    %4021 = vset.pattern.permute.xlu0 0
    %4022 = vperm.xlu0 %4021, %v3268
    %v4023 = vpop.permute.xlu0 %4022
    %4026 = vset.pattern.permute.xlu0 0
    %4027 = vperm.xlu0 %4026, %v3269
    %v4028 = vpop.permute.xlu0 %4027
    %4031 = vset.pattern.permute.xlu0 0
    %4032 = vperm.xlu0 %4031, %v3270
    %v4033 = vpop.permute.xlu0 %4032
    %4036 = vset.pattern.permute.xlu0 0
    %4037 = vperm.xlu0 %4036, %v3271
    %v4038 = vpop.permute.xlu0 %4037
    %4041 = vset.pattern.permute.xlu0 0
    %4042 = vperm.xlu0 %4041, %v3272
    %v4043 = vpop.permute.xlu0 %4042
    %4046 = vset.pattern.permute.xlu0 0
    %4047 = vperm.xlu0 %4046, %v3273
    %v4048 = vpop.permute.xlu0 %4047
    %4051 = vset.pattern.permute.xlu0 0
    %4052 = vperm.xlu0 %4051, %v3274
    %v4053 = vpop.permute.xlu0 %4052
    %4056 = vset.pattern.permute.xlu0 0
    %4057 = vperm.xlu0 %4056, %v3275
    %v4058 = vpop.permute.xlu0 %4057
    %4061 = vset.pattern.permute.xlu0 0
    %4062 = vperm.xlu0 %4061, %v3276
    %v4063 = vpop.permute.xlu0 %4062
    %4066 = vset.pattern.permute.xlu0 0
    %4067 = vperm.xlu0 %4066, %v3277
    %v4068 = vpop.permute.xlu0 %4067
    %4071 = vset.pattern.permute.xlu0 0
    %4072 = vperm.xlu0 %4071, %v3278
    %v4073 = vpop.permute.xlu0 %4072
    %4076 = vset.pattern.permute.xlu0 0
    %4077 = vperm.xlu0 %4076, %v3279
    %v4078 = vpop.permute.xlu0 %4077
    %4081 = vset.pattern.permute.xlu0 0
    %4082 = vperm.xlu0 %4081, %v3280
    %v4083 = vpop.permute.xlu0 %4082
    %4086 = vset.pattern.permute.xlu0 0
    %4087 = vperm.xlu0 %4086, %v3281
    %v4088 = vpop.permute.xlu0 %4087
    %4091 = vset.pattern.permute.xlu0 0
    %4092 = vperm.xlu0 %4091, %v3282
    %v4093 = vpop.permute.xlu0 %4092
    %4096 = vset.pattern.permute.xlu0 0
    %4097 = vperm.xlu0 %4096, %v3283
    %v4098 = vpop.permute.xlu0 %4097
    %4101 = vset.pattern.permute.xlu0 0
    %4102 = vperm.xlu0 %4101, %v3284
    %v4103 = vpop.permute.xlu0 %4102
    %4106 = vset.pattern.permute.xlu0 0
    %4107 = vperm.xlu0 %4106, %v3285
    %v4108 = vpop.permute.xlu0 %4107
    %4111 = vset.pattern.permute.xlu0 0
    %4112 = vperm.xlu0 %4111, %v3286
    %v4113 = vpop.permute.xlu0 %4112
    %4116 = vset.pattern.permute.xlu0 0
    %4117 = vperm.xlu0 %4116, %v3287
    %v4118 = vpop.permute.xlu0 %4117
    %4121 = vset.pattern.permute.xlu0 0
    %4122 = vperm.xlu0 %4121, %v3288
    %v4123 = vpop.permute.xlu0 %4122
    %4126 = vset.pattern.permute.xlu0 0
    %4127 = vperm.xlu0 %4126, %v3289
    %v4128 = vpop.permute.xlu0 %4127
    %4131 = vset.pattern.permute.xlu0 0
    %4132 = vperm.xlu0 %4131, %v3290
    %v4133 = vpop.permute.xlu0 %4132
    %4136 = vset.pattern.permute.xlu0 0
    %4137 = vperm.xlu0 %4136, %v3291
    %v4138 = vpop.permute.xlu0 %4137
    %4141 = vset.pattern.permute.xlu0 0
    %4142 = vperm.xlu0 %4141, %v3292
    %v4143 = vpop.permute.xlu0 %4142
    %4146 = vset.pattern.permute.xlu0 0
    %4147 = vperm.xlu0 %4146, %v3293
    %v4148 = vpop.permute.xlu0 %4147
    %4151 = vset.pattern.permute.xlu0 0
    %4152 = vperm.xlu0 %4151, %v3294
    %v4153 = vpop.permute.xlu0 %4152
    %4156 = vset.pattern.permute.xlu0 0
    %4157 = vperm.xlu0 %4156, %v3295
    %v4158 = vpop.permute.xlu0 %4157
    %4161 = vset.pattern.permute.xlu0 0
    %4162 = vperm.xlu0 %4161, %v3296
    %v4163 = vpop.permute.xlu0 %4162
    %4166 = vset.pattern.permute.xlu0 0
    %4167 = vperm.xlu0 %4166, %v3297
    %v4168 = vpop.permute.xlu0 %4167
    %4171 = vset.pattern.permute.xlu0 0
    %4172 = vperm.xlu0 %4171, %v3298
    %v4173 = vpop.permute.xlu0 %4172
    %4176 = vset.pattern.permute.xlu0 0
    %4177 = vperm.xlu0 %4176, %v3299
    %v4178 = vpop.permute.xlu0 %4177
    %4181 = vset.pattern.permute.xlu0 0
    %4182 = vperm.xlu0 %4181, %v3300
    %v4183 = vpop.permute.xlu0 %4182
    %4186 = vset.pattern.permute.xlu0 0
    %4187 = vperm.xlu0 %4186, %v3301
    %v4188 = vpop.permute.xlu0 %4187
    %4191 = vset.pattern.permute.xlu0 0
    %4192 = vperm.xlu0 %4191, %v3302
    %v4193 = vpop.permute.xlu0 %4192
    %4196 = vset.pattern.permute.xlu0 0
    %4197 = vperm.xlu0 %4196, %v3303
    %v4198 = vpop.permute.xlu0 %4197
    %4201 = vset.pattern.permute.xlu0 0
    %4202 = vperm.xlu0 %4201, %v3304
    %v4203 = vpop.permute.xlu0 %4202
    %4206 = vset.pattern.permute.xlu0 0
    %4207 = vperm.xlu0 %4206, %v3305
    %v4208 = vpop.permute.xlu0 %4207
    %4211 = vset.pattern.permute.xlu0 0
    %4212 = vperm.xlu0 %4211, %v3306
    %v4213 = vpop.permute.xlu0 %4212
    %4216 = vset.pattern.permute.xlu0 0
    %4217 = vperm.xlu0 %4216, %v3307
    %v4218 = vpop.permute.xlu0 %4217
    %4221 = vset.pattern.permute.xlu0 0
    %4222 = vperm.xlu0 %4221, %v3308
    %v4223 = vpop.permute.xlu0 %4222
    %4226 = vset.pattern.permute.xlu0 0
    %4227 = vperm.xlu0 %4226, %v3309
    %v4228 = vpop.permute.xlu0 %4227
    %4231 = vset.pattern.permute.xlu0 0
    %4232 = vperm.xlu0 %4231, %v3310
    %v4233 = vpop.permute.xlu0 %4232
    %4236 = vset.pattern.permute.xlu0 0
    %4237 = vperm.xlu0 %4236, %v3311
    %v4238 = vpop.permute.xlu0 %4237
    %4241 = vset.pattern.permute.xlu0 0
    %4242 = vperm.xlu0 %4241, %v3312
    %v4243 = vpop.permute.xlu0 %4242
    %4246 = vset.pattern.permute.xlu0 0
    %4247 = vperm.xlu0 %4246, %v3313
    %v4248 = vpop.permute.xlu0 %4247
    %4251 = vset.pattern.permute.xlu0 0
    %4252 = vperm.xlu0 %4251, %v3314
    %v4253 = vpop.permute.xlu0 %4252
    %4256 = vset.pattern.permute.xlu0 0
    %4257 = vperm.xlu0 %4256, %v3315
    %v4258 = vpop.permute.xlu0 %4257
    %4261 = vset.pattern.permute.xlu0 0
    %4262 = vperm.xlu0 %4261, %v3316
    %v4263 = vpop.permute.xlu0 %4262
    %4266 = vset.pattern.permute.xlu0 0
    %4267 = vperm.xlu0 %4266, %v3317
    %v4268 = vpop.permute.xlu0 %4267
    %4271 = vset.pattern.permute.xlu0 0
    %4272 = vperm.xlu0 %4271, %v3318
    %v4273 = vpop.permute.xlu0 %4272
    %4276 = vset.pattern.permute.xlu0 0
    %4277 = vperm.xlu0 %4276, %v3319
    %v4278 = vpop.permute.xlu0 %4277
    %4281 = vset.pattern.permute.xlu0 0
    %4282 = vperm.xlu0 %4281, %v3320
    %v4283 = vpop.permute.xlu0 %4282
    %4286 = vset.pattern.permute.xlu0 0
    %4287 = vperm.xlu0 %4286, %v3321
    %v4288 = vpop.permute.xlu0 %4287
    %4291 = vset.pattern.permute.xlu0 0
    %4292 = vperm.xlu0 %4291, %v3322
    %v4293 = vpop.permute.xlu0 %4292
    %4296 = vset.pattern.permute.xlu0 0
    %4297 = vperm.xlu0 %4296, %v3323
    %v4298 = vpop.permute.xlu0 %4297
    %4301 = vset.pattern.permute.xlu0 0
    %4302 = vperm.xlu0 %4301, %v3324
    %v4303 = vpop.permute.xlu0 %4302
    %4306 = vset.pattern.permute.xlu0 0
    %4307 = vperm.xlu0 %4306, %v3325
    %v4308 = vpop.permute.xlu0 %4307
    %4311 = vset.pattern.permute.xlu0 0
    %4312 = vperm.xlu0 %4311, %v3326
    %v4313 = vpop.permute.xlu0 %4312
    %4316 = vset.pattern.permute.xlu0 0
    %4317 = vperm.xlu0 %4316, %v3327
    %v4318 = vpop.permute.xlu0 %4317
    %4321 = vset.pattern.permute.xlu0 0
    %4322 = vperm.xlu0 %4321, %v3328
    %v4323 = vpop.permute.xlu0 %4322
    %4326 = vset.pattern.permute.xlu0 0
    %4327 = vperm.xlu0 %4326, %v3329
    %v4328 = vpop.permute.xlu0 %4327
    %4331 = vset.pattern.permute.xlu0 0
    %4332 = vperm.xlu0 %4331, %v3330
    %v4333 = vpop.permute.xlu0 %4332
    %4336 = vset.pattern.permute.xlu0 0
    %4337 = vperm.xlu0 %4336, %v3331
    %v4338 = vpop.permute.xlu0 %4337
    %v4340 = vadd.f32 %v3752, %v3923
    %v4341 = vadd.f32 %v3753, %v3923
    %v4342 = vadd.f32 %v3754, %v3928
    %v4343 = vadd.f32 %v3755, %v3928
    %v4344 = vadd.f32 %v3756, %v3933
    %v4345 = vadd.f32 %v3757, %v3933
    %v4346 = vadd.f32 %v3758, %v3938
    %v4347 = vadd.f32 %v3759, %v3938
    %v4348 = vadd.f32 %v3760, %v3943
    %v4349 = vadd.f32 %v3761, %v3943
    %v4350 = vadd.f32 %v3762, %v3948
    %v4351 = vadd.f32 %v3763, %v3948
    %v4352 = vadd.f32 %v3764, %v3953
    %v4353 = vadd.f32 %v3765, %v3953
    %v4354 = vadd.f32 %v3766, %v3958
    %v4355 = vadd.f32 %v3767, %v3958
    %v4356 = vadd.f32 %v3768, %v3963
    %v4357 = vadd.f32 %v3769, %v3963
    %v4358 = vadd.f32 %v3770, %v3968
    %v4359 = vadd.f32 %v3771, %v3968
    %v4360 = vadd.f32 %v3772, %v3973
    %v4361 = vadd.f32 %v3773, %v3973
    %v4362 = vadd.f32 %v3774, %v3978
    %v4363 = vadd.f32 %v3775, %v3978
    %v4364 = vadd.f32 %v3776, %v3983
    %v4365 = vadd.f32 %v3777, %v3983
    %v4366 = vadd.f32 %v3778, %v3988
    %v4367 = vadd.f32 %v3779, %v3988
    %v4368 = vadd.f32 %v3780, %v3993
    %v4369 = vadd.f32 %v3781, %v3993
    %v4370 = vadd.f32 %v3782, %v3998
    %v4371 = vadd.f32 %v3783, %v3998
    %v4372 = vadd.f32 %v3784, %v4003
    %v4373 = vadd.f32 %v3785, %v4003
    %v4374 = vadd.f32 %v3786, %v4008
    %v4375 = vadd.f32 %v3787, %v4008
    %v4376 = vadd.f32 %v3788, %v4013
    %v4377 = vadd.f32 %v3789, %v4013
    %v4378 = vadd.f32 %v3790, %v4018
    %v4379 = vadd.f32 %v3791, %v4018
    %v4380 = vadd.f32 %v3792, %v4023
    %v4381 = vadd.f32 %v3793, %v4023
    %v4382 = vadd.f32 %v3794, %v4028
    %v4383 = vadd.f32 %v3795, %v4028
    %v4384 = vadd.f32 %v3796, %v4033
    %v4385 = vadd.f32 %v3797, %v4033
    %v4386 = vadd.f32 %v3798, %v4038
    %v4387 = vadd.f32 %v3799, %v4038
    %v4388 = vadd.f32 %v3800, %v4043
    %v4389 = vadd.f32 %v3801, %v4043
    %v4390 = vadd.f32 %v3802, %v4048
    %v4391 = vadd.f32 %v3803, %v4048
    %v4392 = vadd.f32 %v3804, %v4053
    %v4393 = vadd.f32 %v3805, %v4053
    %v4394 = vadd.f32 %v3806, %v4058
    %v4395 = vadd.f32 %v3807, %v4058
    %v4396 = vadd.f32 %v3808, %v4063
    %v4397 = vadd.f32 %v3809, %v4063
    %v4398 = vadd.f32 %v3810, %v4068
    %v4399 = vadd.f32 %v3811, %v4068
    %v4400 = vadd.f32 %v3812, %v4073
    %v4401 = vadd.f32 %v3813, %v4073
    %v4402 = vadd.f32 %v3814, %v4078
    %v4403 = vadd.f32 %v3815, %v4078
    %v4404 = vadd.f32 %v3816, %v4083
    %v4405 = vadd.f32 %v3817, %v4083
    %v4406 = vadd.f32 %v3818, %v4088
    %v4407 = vadd.f32 %v3819, %v4088
    %v4408 = vadd.f32 %v3820, %v4093
    %v4409 = vadd.f32 %v3821, %v4093
    %v4410 = vadd.f32 %v3822, %v4098
    %v4411 = vadd.f32 %v3823, %v4098
    %v4412 = vadd.f32 %v3824, %v4103
    %v4413 = vadd.f32 %v3825, %v4103
    %v4414 = vadd.f32 %v3826, %v4108
    %v4415 = vadd.f32 %v3827, %v4108
    %v4416 = vadd.f32 %v3828, %v4113
    %v4417 = vadd.f32 %v3829, %v4113
    %v4418 = vadd.f32 %v3830, %v4118
    %v4419 = vadd.f32 %v3831, %v4118
    %v4420 = vadd.f32 %v3832, %v4123
    %v4421 = vadd.f32 %v3833, %v4123
    %v4422 = vadd.f32 %v3834, %v4128
    %v4423 = vadd.f32 %v3835, %v4128
    %v4424 = vadd.f32 %v3836, %v4133
    %v4425 = vadd.f32 %v3837, %v4133
    %v4426 = vadd.f32 %v3838, %v4138
    %v4427 = vadd.f32 %v3839, %v4138
    %v4428 = vadd.f32 %v3840, %v4143
    %v4429 = vadd.f32 %v3841, %v4143
    %v4430 = vadd.f32 %v3842, %v4148
    %v4431 = vadd.f32 %v3843, %v4148
    %v4432 = vadd.f32 %v3844, %v4153
    %v4433 = vadd.f32 %v3845, %v4153
    %v4434 = vadd.f32 %v3846, %v4158
    %v4435 = vadd.f32 %v3847, %v4158
    %v4436 = vadd.f32 %v3848, %v4163
    %v4437 = vadd.f32 %v3849, %v4163
    %v4438 = vadd.f32 %v3850, %v4168
    %v4439 = vadd.f32 %v3851, %v4168
    %v4440 = vadd.f32 %v3852, %v4173
    %v4441 = vadd.f32 %v3853, %v4173
    %v4442 = vadd.f32 %v3854, %v4178
    %v4443 = vadd.f32 %v3855, %v4178
    %v4444 = vadd.f32 %v3856, %v4183
    %v4445 = vadd.f32 %v3857, %v4183
    %v4446 = vadd.f32 %v3858, %v4188
    %v4447 = vadd.f32 %v3859, %v4188
    %v4448 = vadd.f32 %v3860, %v4193
    %v4449 = vadd.f32 %v3861, %v4193
    %v4450 = vadd.f32 %v3862, %v4198
    %v4451 = vadd.f32 %v3863, %v4198
    %v4452 = vadd.f32 %v3864, %v4203
    %v4453 = vadd.f32 %v3865, %v4203
    %v4454 = vadd.f32 %v3866, %v4208
    %v4455 = vadd.f32 %v3867, %v4208
    %v4456 = vadd.f32 %v3868, %v4213
    %v4457 = vadd.f32 %v3869, %v4213
    %v4458 = vadd.f32 %v3870, %v4218
    %v4459 = vadd.f32 %v3871, %v4218
    %v4460 = vadd.f32 %v3872, %v4223
    %v4461 = vadd.f32 %v3873, %v4223
    %v4462 = vadd.f32 %v3874, %v4228
    %v4463 = vadd.f32 %v3875, %v4228
    %v4464 = vadd.f32 %v3876, %v4233
    %v4465 = vadd.f32 %v3877, %v4233
    %v4466 = vadd.f32 %v3878, %v4238
    %v4467 = vadd.f32 %v3879, %v4238
    %v4468 = vadd.f32 %v3880, %v4243
    %v4469 = vadd.f32 %v3881, %v4243
    %v4470 = vadd.f32 %v3882, %v4248
    %v4471 = vadd.f32 %v3883, %v4248
    %v4472 = vadd.f32 %v3884, %v4253
    %v4473 = vadd.f32 %v3885, %v4253
    %v4474 = vadd.f32 %v3886, %v4258
    %v4475 = vadd.f32 %v3887, %v4258
    %v4476 = vadd.f32 %v3888, %v4263
    %v4477 = vadd.f32 %v3889, %v4263
    %v4478 = vadd.f32 %v3890, %v4268
    %v4479 = vadd.f32 %v3891, %v4268
    %v4480 = vadd.f32 %v3892, %v4273
    %v4481 = vadd.f32 %v3893, %v4273
    %v4482 = vadd.f32 %v3894, %v4278
    %v4483 = vadd.f32 %v3895, %v4278
    %v4484 = vadd.f32 %v3896, %v4283
    %v4485 = vadd.f32 %v3897, %v4283
    %v4486 = vadd.f32 %v3898, %v4288
    %v4487 = vadd.f32 %v3899, %v4288
    %v4488 = vadd.f32 %v3900, %v4293
    %v4489 = vadd.f32 %v3901, %v4293
    %v4490 = vadd.f32 %v3902, %v4298
    %v4491 = vadd.f32 %v3903, %v4298
    %v4492 = vadd.f32 %v3904, %v4303
    %v4493 = vadd.f32 %v3905, %v4303
    %v4494 = vadd.f32 %v3906, %v4308
    %v4495 = vadd.f32 %v3907, %v4308
    %v4496 = vadd.f32 %v3908, %v4313
    %v4497 = vadd.f32 %v3909, %v4313
    %v4498 = vadd.f32 %v3910, %v4318
    %v4499 = vadd.f32 %v3911, %v4318
    %v4500 = vadd.f32 %v3912, %v4323
    %v4501 = vadd.f32 %v3913, %v4323
    %v4502 = vadd.f32 %v3914, %v4328
    %v4503 = vadd.f32 %v3915, %v4328
    %v4504 = vadd.f32 %v3916, %v4333
    %v4505 = vadd.f32 %v3917, %v4333
    %v4506 = vadd.f32 %v3918, %v4338
    %v4507 = vadd.f32 %v3919, %v4338
    %4508 = vst [vmem:[#allocation2] sm:$0xff] %v4340
    %4509 = vst [vmem:[#allocation2 + $0x8] sm:$0xff] %v4341
    %4510 = vst [vmem:[#allocation2 + $0x10] sm:$0xff] %v4342
    %4511 = vst [vmem:[#allocation2 + $0x18] sm:$0xff] %v4343
    %4512 = vst [vmem:[#allocation2 + $0x20] sm:$0xff] %v4344
    %4513 = vst [vmem:[#allocation2 + $0x28] sm:$0xff] %v4345
    %4514 = vst [vmem:[#allocation2 + $0x30] sm:$0xff] %v4346
    %4515 = vst [vmem:[#allocation2 + $0x38] sm:$0xff] %v4347
    %4516 = vst [vmem:[#allocation2 + $0x40] sm:$0xff] %v4348
    %4517 = vst [vmem:[#allocation2 + $0x48] sm:$0xff] %v4349
    %4518 = vst [vmem:[#allocation2 + $0x50] sm:$0xff] %v4350
    %4519 = vst [vmem:[#allocation2 + $0x58] sm:$0xff] %v4351
    %4520 = vst [vmem:[#allocation2 + $0x60] sm:$0xff] %v4352
    %4521 = vst [vmem:[#allocation2 + $0x68] sm:$0xff] %v4353
    %4522 = vst [vmem:[#allocation2 + $0x70] sm:$0xff] %v4354
    %4523 = vst [vmem:[#allocation2 + $0x78] sm:$0xff] %v4355
    %4524 = vst [vmem:[#allocation2 + $0x80] sm:$0xff] %v4356
    %4525 = vst [vmem:[#allocation2 + $0x88] sm:$0xff] %v4357
    %4526 = vst [vmem:[#allocation2 + $0x90] sm:$0xff] %v4358
    %4527 = vst [vmem:[#allocation2 + $0x98] sm:$0xff] %v4359
    %4528 = vst [vmem:[#allocation2 + $0xa0] sm:$0xff] %v4360
    %4529 = vst [vmem:[#allocation2 + $0xa8] sm:$0xff] %v4361
    %4530 = vst [vmem:[#allocation2 + $0xb0] sm:$0xff] %v4362
    %4531 = vst [vmem:[#allocation2 + $0xb8] sm:$0xff] %v4363
    %4532 = vst [vmem:[#allocation2 + $0xc0] sm:$0xff] %v4364
    %4533 = vst [vmem:[#allocation2 + $0xc8] sm:$0xff] %v4365
    %4534 = vst [vmem:[#allocation2 + $0xd0] sm:$0xff] %v4366
    %4535 = vst [vmem:[#allocation2 + $0xd8] sm:$0xff] %v4367
    %4536 = vst [vmem:[#allocation2 + $0xe0] sm:$0xff] %v4368
    %4537 = vst [vmem:[#allocation2 + $0xe8] sm:$0xff] %v4369
    %4538 = vst [vmem:[#allocation2 + $0xf0] sm:$0xff] %v4370
    %4539 = vst [vmem:[#allocation2 + $0xf8] sm:$0xff] %v4371
    %4540 = vst [vmem:[#allocation2 + $0x100] sm:$0xff] %v4372
    %4541 = vst [vmem:[#allocation2 + $0x108] sm:$0xff] %v4373
    %4542 = vst [vmem:[#allocation2 + $0x110] sm:$0xff] %v4374
    %4543 = vst [vmem:[#allocation2 + $0x118] sm:$0xff] %v4375
    %4544 = vst [vmem:[#allocation2 + $0x120] sm:$0xff] %v4376
    %4545 = vst [vmem:[#allocation2 + $0x128] sm:$0xff] %v4377
    %4546 = vst [vmem:[#allocation2 + $0x130] sm:$0xff] %v4378
    %4547 = vst [vmem:[#allocation2 + $0x138] sm:$0xff] %v4379
    %4548 = vst [vmem:[#allocation2 + $0x140] sm:$0xff] %v4380
    %4549 = vst [vmem:[#allocation2 + $0x148] sm:$0xff] %v4381
    %4550 = vst [vmem:[#allocation2 + $0x150] sm:$0xff] %v4382
    %4551 = vst [vmem:[#allocation2 + $0x158] sm:$0xff] %v4383
    %4552 = vst [vmem:[#allocation2 + $0x160] sm:$0xff] %v4384
    %4553 = vst [vmem:[#allocation2 + $0x168] sm:$0xff] %v4385
    %4554 = vst [vmem:[#allocation2 + $0x170] sm:$0xff] %v4386
    %4555 = vst [vmem:[#allocation2 + $0x178] sm:$0xff] %v4387
    %4556 = vst [vmem:[#allocation2 + $0x180] sm:$0xff] %v4388
    %4557 = vst [vmem:[#allocation2 + $0x188] sm:$0xff] %v4389
    %4558 = vst [vmem:[#allocation2 + $0x190] sm:$0xff] %v4390
    %4559 = vst [vmem:[#allocation2 + $0x198] sm:$0xff] %v4391
    %4560 = vst [vmem:[#allocation2 + $0x1a0] sm:$0xff] %v4392
    %4561 = vst [vmem:[#allocation2 + $0x1a8] sm:$0xff] %v4393
    %4562 = vst [vmem:[#allocation2 + $0x1b0] sm:$0xff] %v4394
    %4563 = vst [vmem:[#allocation2 + $0x1b8] sm:$0xff] %v4395
    %4564 = vst [vmem:[#allocation2 + $0x1c0] sm:$0xff] %v4396
    %4565 = vst [vmem:[#allocation2 + $0x1c8] sm:$0xff] %v4397
    %4566 = vst [vmem:[#allocation2 + $0x1d0] sm:$0xff] %v4398
    %4567 = vst [vmem:[#allocation2 + $0x1d8] sm:$0xff] %v4399
    %4568 = vst [vmem:[#allocation2 + $0x1e0] sm:$0xff] %v4400
    %4569 = vst [vmem:[#allocation2 + $0x1e8] sm:$0xff] %v4401
    %4570 = vst [vmem:[#allocation2 + $0x1f0] sm:$0xff] %v4402
    %4571 = vst [vmem:[#allocation2 + $0x1f8] sm:$0xff] %v4403
    %4572 = vst [vmem:[#allocation2 + $0x200] sm:$0xff] %v4404
    %4573 = vst [vmem:[#allocation2 + $0x208] sm:$0xff] %v4405
    %4574 = vst [vmem:[#allocation2 + $0x210] sm:$0xff] %v4406
    %4575 = vst [vmem:[#allocation2 + $0x218] sm:$0xff] %v4407
    %4576 = vst [vmem:[#allocation2 + $0x220] sm:$0xff] %v4408
    %4577 = vst [vmem:[#allocation2 + $0x228] sm:$0xff] %v4409
    %4578 = vst [vmem:[#allocation2 + $0x230] sm:$0xff] %v4410
    %4579 = vst [vmem:[#allocation2 + $0x238] sm:$0xff] %v4411
    %4580 = vst [vmem:[#allocation2 + $0x240] sm:$0xff] %v4412
    %4581 = vst [vmem:[#allocation2 + $0x248] sm:$0xff] %v4413
    %4582 = vst [vmem:[#allocation2 + $0x250] sm:$0xff] %v4414
    %4583 = vst [vmem:[#allocation2 + $0x258] sm:$0xff] %v4415
    %4584 = vst [vmem:[#allocation2 + $0x260] sm:$0xff] %v4416
    %4585 = vst [vmem:[#allocation2 + $0x268] sm:$0xff] %v4417
    %4586 = vst [vmem:[#allocation2 + $0x270] sm:$0xff] %v4418
    %4587 = vst [vmem:[#allocation2 + $0x278] sm:$0xff] %v4419
    %4588 = vst [vmem:[#allocation2 + $0x280] sm:$0xff] %v4420
    %4589 = vst [vmem:[#allocation2 + $0x288] sm:$0xff] %v4421
    %4590 = vst [vmem:[#allocation2 + $0x290] sm:$0xff] %v4422
    %4591 = vst [vmem:[#allocation2 + $0x298] sm:$0xff] %v4423
    %4592 = vst [vmem:[#allocation2 + $0x2a0] sm:$0xff] %v4424
    %4593 = vst [vmem:[#allocation2 + $0x2a8] sm:$0xff] %v4425
    %4594 = vst [vmem:[#allocation2 + $0x2b0] sm:$0xff] %v4426
    %4595 = vst [vmem:[#allocation2 + $0x2b8] sm:$0xff] %v4427
    %4596 = vst [vmem:[#allocation2 + $0x2c0] sm:$0xff] %v4428
    %4597 = vst [vmem:[#allocation2 + $0x2c8] sm:$0xff] %v4429
    %4598 = vst [vmem:[#allocation2 + $0x2d0] sm:$0xff] %v4430
    %4599 = vst [vmem:[#allocation2 + $0x2d8] sm:$0xff] %v4431
    %4600 = vst [vmem:[#allocation2 + $0x2e0] sm:$0xff] %v4432
    %4601 = vst [vmem:[#allocation2 + $0x2e8] sm:$0xff] %v4433
    %4602 = vst [vmem:[#allocation2 + $0x2f0] sm:$0xff] %v4434
    %4603 = vst [vmem:[#allocation2 + $0x2f8] sm:$0xff] %v4435
    %4604 = vst [vmem:[#allocation2 + $0x300] sm:$0xff] %v4436
    %4605 = vst [vmem:[#allocation2 + $0x308] sm:$0xff] %v4437
    %4606 = vst [vmem:[#allocation2 + $0x310] sm:$0xff] %v4438
    %4607 = vst [vmem:[#allocation2 + $0x318] sm:$0xff] %v4439
    %4608 = vst [vmem:[#allocation2 + $0x320] sm:$0xff] %v4440
    %4609 = vst [vmem:[#allocation2 + $0x328] sm:$0xff] %v4441
    %4610 = vst [vmem:[#allocation2 + $0x330] sm:$0xff] %v4442
    %4611 = vst [vmem:[#allocation2 + $0x338] sm:$0xff] %v4443
    %4612 = vst [vmem:[#allocation2 + $0x340] sm:$0xff] %v4444
    %4613 = vst [vmem:[#allocation2 + $0x348] sm:$0xff] %v4445
    %4614 = vst [vmem:[#allocation2 + $0x350] sm:$0xff] %v4446
    %4615 = vst [vmem:[#allocation2 + $0x358] sm:$0xff] %v4447
    %4616 = vst [vmem:[#allocation2 + $0x360] sm:$0xff] %v4448
    %4617 = vst [vmem:[#allocation2 + $0x368] sm:$0xff] %v4449
    %4618 = vst [vmem:[#allocation2 + $0x370] sm:$0xff] %v4450
    %4619 = vst [vmem:[#allocation2 + $0x378] sm:$0xff] %v4451
    %4620 = vst [vmem:[#allocation2 + $0x380] sm:$0xff] %v4452
    %4621 = vst [vmem:[#allocation2 + $0x388] sm:$0xff] %v4453
    %4622 = vst [vmem:[#allocation2 + $0x390] sm:$0xff] %v4454
    %4623 = vst [vmem:[#allocation2 + $0x398] sm:$0xff] %v4455
    %4624 = vst [vmem:[#allocation2 + $0x3a0] sm:$0xff] %v4456
    %4625 = vst [vmem:[#allocation2 + $0x3a8] sm:$0xff] %v4457
    %4626 = vst [vmem:[#allocation2 + $0x3b0] sm:$0xff] %v4458
    %4627 = vst [vmem:[#allocation2 + $0x3b8] sm:$0xff] %v4459
    %4628 = vst [vmem:[#allocation2 + $0x3c0] sm:$0xff] %v4460
    %4629 = vst [vmem:[#allocation2 + $0x3c8] sm:$0xff] %v4461
    %4630 = vst [vmem:[#allocation2 + $0x3d0] sm:$0xff] %v4462
    %4631 = vst [vmem:[#allocation2 + $0x3d8] sm:$0xff] %v4463
    %4632 = vst [vmem:[#allocation2 + $0x3e0] sm:$0xff] %v4464
    %4633 = vst [vmem:[#allocation2 + $0x3e8] sm:$0xff] %v4465
    %4634 = vst [vmem:[#allocation2 + $0x3f0] sm:$0xff] %v4466
    %4635 = vst [vmem:[#allocation2 + $0x3f8] sm:$0xff] %v4467
    %4636 = vst [vmem:[#allocation2 + $0x400] sm:$0xff] %v4468
    %4637 = vst [vmem:[#allocation2 + $0x408] sm:$0xff] %v4469
    %4638 = vst [vmem:[#allocation2 + $0x410] sm:$0xff] %v4470
    %4639 = vst [vmem:[#allocation2 + $0x418] sm:$0xff] %v4471
    %4640 = vst [vmem:[#allocation2 + $0x420] sm:$0xff] %v4472
    %4641 = vst [vmem:[#allocation2 + $0x428] sm:$0xff] %v4473
    %4642 = vst [vmem:[#allocation2 + $0x430] sm:$0xff] %v4474
    %4643 = vst [vmem:[#allocation2 + $0x438] sm:$0xff] %v4475
    %4644 = vst [vmem:[#allocation2 + $0x440] sm:$0xff] %v4476
    %4645 = vst [vmem:[#allocation2 + $0x448] sm:$0xff] %v4477
    %4646 = vst [vmem:[#allocation2 + $0x450] sm:$0xff] %v4478
    %4647 = vst [vmem:[#allocation2 + $0x458] sm:$0xff] %v4479
    %4648 = vst [vmem:[#allocation2 + $0x460] sm:$0xff] %v4480
    %4649 = vst [vmem:[#allocation2 + $0x468] sm:$0xff] %v4481
    %4650 = vst [vmem:[#allocation2 + $0x470] sm:$0xff] %v4482
    %4651 = vst [vmem:[#allocation2 + $0x478] sm:$0xff] %v4483
    %4652 = vst [vmem:[#allocation2 + $0x480] sm:$0xff] %v4484
    %4653 = vst [vmem:[#allocation2 + $0x488] sm:$0xff] %v4485
    %4654 = vst [vmem:[#allocation2 + $0x490] sm:$0xff] %v4486
    %4655 = vst [vmem:[#allocation2 + $0x498] sm:$0xff] %v4487
    %4656 = vst [vmem:[#allocation2 + $0x4a0] sm:$0xff] %v4488
    %4657 = vst [vmem:[#allocation2 + $0x4a8] sm:$0xff] %v4489
    %4658 = vst [vmem:[#allocation2 + $0x4b0] sm:$0xff] %v4490
    %4659 = vst [vmem:[#allocation2 + $0x4b8] sm:$0xff] %v4491
    %4660 = vst [vmem:[#allocation2 + $0x4c0] sm:$0xff] %v4492
    %4661 = vst [vmem:[#allocation2 + $0x4c8] sm:$0xff] %v4493
    %4662 = vst [vmem:[#allocation2 + $0x4d0] sm:$0xff] %v4494
    %4663 = vst [vmem:[#allocation2 + $0x4d8] sm:$0xff] %v4495
    %4664 = vst [vmem:[#allocation2 + $0x4e0] sm:$0xff] %v4496
    %4665 = vst [vmem:[#allocation2 + $0x4e8] sm:$0xff] %v4497
    %4666 = vst [vmem:[#allocation2 + $0x4f0] sm:$0xff] %v4498
    %4667 = vst [vmem:[#allocation2 + $0x4f8] sm:$0xff] %v4499
    %4668 = vst [vmem:[#allocation2 + $0x500] sm:$0xff] %v4500
    %4669 = vst [vmem:[#allocation2 + $0x508] sm:$0xff] %v4501
    %4670 = vst [vmem:[#allocation2 + $0x510] sm:$0xff] %v4502
    %4671 = vst [vmem:[#allocation2 + $0x518] sm:$0xff] %v4503
    %4672 = vst [vmem:[#allocation2 + $0x520] sm:$0xff] %v4504
    %4673 = vst [vmem:[#allocation2 + $0x528] sm:$0xff] %v4505
    %4674 = vst [vmem:[#allocation2 + $0x530] sm:$0xff] %v4506
    %4675 = vst [vmem:[#allocation2 + $0x538] sm:$0xff] %v4507
    // Predicated region
    $region22: #{tpu_custom_call.1} parent=1 // pred_check
      _
    $region23: #{tpu_custom_call.1} parent=1 // pred_check_branch
      %4677 = sbr.rel (0) target = $region25
    $region24: #{tpu_custom_call.1} parent=1 // pred_region
      %4679 = vsyncadd [#allocation3], 0
      %s4680 = sshll.u32 [#allocation2], 4
      %s4681 = int_to_ptr.vmem [resolvable:$true] %s4680
      %s4682 = sshll.u32 %s5, 4
      %s4683 = int_to_ptr.hbm [resolvable:$true] %s4682
      %4688 = dma.vmem_to_hbm [thread:$0]  %s4681, 21504, %s4683, [#allocation3], 256, 256, 16
    $region25: #{tpu_custom_call.1} parent=1 // pred_fallthru
      _
    // Predicated region
    $region26: #{tpu_custom_call.1} parent=1 // pred_check
      _
    $region27: #{tpu_custom_call.1} parent=1 // pred_check_branch
      %4690 = sbr.rel (0) target = $region29
    $region28: #{tpu_custom_call.1} parent=1 // pred_region
      %4692 = dma.done [#allocation3], 21504
    $region29: #{tpu_custom_call.1} parent=1 // pred_fallthru
      _
    %4693 = vsyncpa [#allocation3], 1

</llo_original>
